<compile_context>
chip_gen: v7x
topology: tpu7x:2x2x1
jax: 0.10.0
libtpu: 0.0.40
codegen_flags: <defaults>
</compile_context>

<pallas_src>
import functools

import jax
import jax.numpy as jnp
from jax.experimental import pallas as pl
from jax.experimental.pallas import tpu as pltpu

C_IN = 128      # Conv2D_BN input channels (backbone output channels)
C_MID = 1280    # Conv2D_BN output channels
CLASS_NUM = 10


def _head_kernel(x_ref, w1_ref, b1_ref, w2_ref, b2_ref, o_ref, xt_ref):
    """One grid step == BT images, fully fused classification head.

    x_ref : (BT, C_IN, HW)   f32 NCHW backbone features (HW = H*W)
    w1_ref: (C_IN, C_MID)    bf16 1x1-conv weight, BN scale folded in
    b1_ref: (1, C_MID)       f32 folded conv-bias / BN shift
    w2_ref: (C_MID, NP)      f32 final 1x1-conv weight, 1/HW pool scale folded
                             in, zero-padded to NP (multiple of 128) lanes
    b2_ref: (1, NP)          f32 final conv bias (zero-padded)
    o_ref : (1, BT, NP)      f32 logits (lane-dense, unmasked stores)
    xt_ref: (BT*HW, C_IN)    bf16 VMEM scratch: transposed + cast activations
    """
    bt, c, hw = x_ref.shape
    c_mid = w1_ref.shape[1]
    n_out = o_ref.shape[-1]
    tn = 256 if c_mid % 256 == 0 else c_mid      # output-channel tile
    n_chunks = c_mid // tn

    # Fused NCHW -> (HW, C) transpose + bf16 cast.  Per-image 2D f32 transpose
    # on the XLU (slack unit), written with static slices into the scratch.
    for i in range(bt):                          # bt is small and static
        xt_ref[i * hw:(i + 1) * hw, :] = (
            jnp.transpose(x_ref[i], (1, 0)).astype(jnp.bfloat16))
    xt = xt_ref[...]                             # (bt*hw, C_IN) bf16

    # N-tiled epilogue: per 256-channel chunk do matmul -> bias -> ReLU ->
    # spatial sum -> tiny projection, so the full (bt*hw, 1280) f32 slab is
    # never materialized / re-loaded.
    acc = jnp.zeros((bt, n_out), jnp.float32)
    for nc in range(n_chunks):                   # static unroll (5 chunks)
        lo = nc * tn
        w1c = w1_ref[:, lo:lo + tn]              # (C_IN, tn) bf16
        b1c = b1_ref[:, lo:lo + tn]              # (1, tn) f32
        h = jnp.dot(xt, w1c, preferred_element_type=jnp.float32)  # (bt*hw, tn)
        h = jnp.maximum(h + b1c, 0.0)                             # bias + ReLU
        pooled = jnp.sum(h.reshape(bt, hw, tn), axis=1)           # (bt, tn)
        # Fused final projection chunk (tiny f32 matmul, 1/HW already folded).
        acc = acc + jnp.dot(pooled, w2_ref[lo:lo + tn, :],
                            preferred_element_type=jnp.float32)   # (bt, NP)
    o_ref[0] = acc + b2_ref[...]


def _min_grid_steps():
    """Keep >= 2 grid steps only on 2-TensorCore chips (v7x); 1 elsewhere."""
    try:
        kind = jax.devices()[0].device_kind.lower()
    except Exception:
        return 1
    return 2 if "v7" in kind else 1


def _pick_bt(B, HW, *, min_steps=1, target_rows=512, max_rows=2048):
    """Images per grid step: aim for >= target_rows matmul rows (MXU fill),
    cap the x block at max_rows rows for VMEM headroom (v7x 32 MiB scoped
    default), and keep >= min_steps grid steps (v7x megacore only)."""
    best = 1
    for bt in range(1, B + 1):
        if B % bt:
            continue
        if bt > 1 and bt * HW > max_rows:
            break
        if bt > 1 and B // bt < min_steps:
            continue
        best = bt
        if bt * HW >= target_rows:
            break
    return best


@functools.partial(jax.jit, static_argnames=("bt",))
def classification_head(feat_nchw, w1_eff, b1_eff, w2, b2, *, bt=None):
    """feat_nchw: (B, 128, H, W) f32 backbone features -> (B, class_num)."""
    B, C, H, W = feat_nchw.shape
    assert C == C_IN
    HW = H * W
    # TODO(synk): if the real backbone yields HW not divisible by 8 (e.g. 7x7),
    # pad HW and mask padded pixels after the ReLU (zero pixels are NOT free
    # because of the conv bias); demo spatial sizes are multiples of 8.
    assert HW % 8 == 0

    x = feat_nchw.reshape(B, C, HW)              # free reshape: stays NCHW f32
    w1_bf16 = w1_eff.astype(jnp.bfloat16)

    class_num = w2.shape[1]
    n_pad = ((class_num + 127) // 128) * 128     # lane-dense output width
    # Fold the AdaptiveAvgPool2d 1/HW scale into the final projection weight
    # and zero-pad to n_pad lanes so the kernel's output stores are unmasked.
    w2_eff = jnp.zeros((C_MID, n_pad), jnp.float32).at[:, :class_num].set(
        w2 * (1.0 / HW))
    b2_eff = jnp.zeros((1, n_pad), jnp.float32).at[:, :class_num].set(
        b2.reshape(1, -1))

    if bt is None:
        bt = _pick_bt(B, HW, min_steps=_min_grid_steps())
    assert B % bt == 0
    n_steps = B // bt

    cost = pl.CostEstimate(
        flops=2 * B * HW * C_IN * C_MID + 2 * B * C_MID * n_pad,
        transcendentals=0,
        bytes_accessed=(x.size * 4 + w1_bf16.size * 2 + b1_eff.size * 4
                        + w2_eff.size * 4 + b2_eff.size * 4 + B * n_pad * 4),
    )

    out = pl.pallas_call(
        _head_kernel,
        out_shape=jax.ShapeDtypeStruct((n_steps, bt, n_pad), jnp.float32),
        grid_spec=pltpu.PrefetchScalarGridSpec(
            num_scalar_prefetch=0,
            grid=(n_steps,),
            in_specs=[
                pl.BlockSpec((bt, C_IN, HW), lambda i: (i, 0, 0)),
                pl.BlockSpec((C_IN, C_MID), lambda i: (0, 0)),
                pl.BlockSpec((1, C_MID), lambda i: (0, 0)),
                pl.BlockSpec((C_MID, n_pad), lambda i: (0, 0)),
                pl.BlockSpec((1, n_pad), lambda i: (0, 0)),
            ],
            out_specs=pl.BlockSpec((1, bt, n_pad), lambda i: (i, 0, 0)),
            scratch_shapes=[pltpu.VMEM((bt * HW, C_IN), jnp.bfloat16)],
        ),
        compiler_params=pltpu.CompilerParams(
            dimension_semantics=("parallel",)),
        cost_estimate=cost,
    )(x, w1_bf16, b1_eff, w2_eff, b2_eff)

    return out.reshape(B, n_pad)[:, :class_num]


def init_params(key):
    """Deterministic parameter init; BN stats folded into conv1 weight/bias."""
    k1, k2, k3, k4 = jax.random.split(key, 4)
    # Conv2D_BN: Conv2d(128, 1280, 1) weights (stored here as (C_in, C_out)).
    w1 = jax.random.normal(k1, (C_IN, C_MID), jnp.float32) * 0.05
    conv1_b = jax.random.normal(k2, (C_MID,), jnp.float32) * 0.01
    # BatchNorm2d(1280) inference params (deterministic init).
    gamma = jnp.ones((C_MID,), jnp.float32)
    beta = jnp.zeros((C_MID,), jnp.float32)
    running_mean = jnp.zeros((C_MID,), jnp.float32)
    running_var = jnp.ones((C_MID,), jnp.float32)
    eps = 1e-5
    scale = gamma / jnp.sqrt(running_var + eps)                   # (C_MID,)
    w1_eff = w1 * scale[None, :]                                  # fold BN scale
    b1_eff = ((conv1_b - running_mean) * scale + beta)[None, :]   # (1, C_MID)
    # Final Conv2d(1280, class_num, 1).
    w2 = jax.random.normal(k3, (C_MID, CLASS_NUM), jnp.float32) * 0.02
    b2 = (jax.random.normal(k4, (CLASS_NUM,), jnp.float32) * 0.01)[None, :]
    return w1_eff, b1_eff, w2, b2


def reference(feat_nchw, w1_eff, b1_eff, w2, b2):
    """Pure-JAX f32 reference of the same head (for correctness check)."""
    B, C, H, W = feat_nchw.shape
    x = jnp.transpose(feat_nchw, (0, 2, 3, 1)).reshape(B, H * W, C)
    h = jnp.maximum(jnp.einsum("bpc,cd->bpd", x, w1_eff) + b1_eff[None], 0.0)
    pooled = jnp.mean(h, axis=1)                                  # (B, C_MID)
    return pooled @ w2 + b2                                       # (B, CLASS_NUM)


if __name__ == "__main__":
    key = jax.random.PRNGKey(0)
    kx, kp = jax.random.split(key)
    # Backbone feature map: batch=8, channels=128 (head input), spatial=8x8.
    # On v5e/v6e the wrapper picks bt=8 (one grid step, M=512 rows); on v7x it
    # picks bt=4 (two grid steps for the two TensorCores).
    B, H, W = 8, 8, 8
    feat = jax.random.normal(kx, (B, C_IN, H, W), jnp.float32)
    params = init_params(kp)

    out = classification_head(feat, *params)
    out = jax.block_until_ready(out)

    ref = reference(feat, *params)
    assert out.shape == (B, CLASS_NUM)
    # bf16 activations/weights (f32 accumulation) -> slightly looser tolerance.
    assert jnp.allclose(out, ref, atol=3e-2, rtol=3e-2), float(
        jnp.max(jnp.abs(out - ref)))
    print("KERNEL_OK")
</pallas_src>

<mosaic_0001>
module attributes {stable_mosaic.version = 11 : i64} {
  func.func @_head_kernel(%arg0: i32, %arg1: memref<8x128x64xf32, #tpu.memory_space<vmem>>, %arg2: memref<128x1280xbf16, #tpu.memory_space<vmem>>, %arg3: memref<1x1280xf32, #tpu.memory_space<vmem>>, %arg4: memref<1280x128xf32, #tpu.memory_space<vmem>>, %arg5: memref<1x128xf32, #tpu.memory_space<vmem>>, %arg6: memref<1x8x128xf32, #tpu.memory_space<vmem>>, %arg7: memref<512x128xbf16, #tpu.memory_space<vmem>>) attributes {dimension_semantics = [#tpu.dimension_semantics<parallel>], iteration_bounds = array<i64: 1>, scalar_prefetch = 0 : i64, scratch_operands = 1 : i64, tpu.core_type = #tpu.core_type<tc>, window_params = [{transform_indices = @transform_0, window_bounds = array<i64: 8, 128, 64>}, {pipeline_mode = #tpu.pipeline_mode<synchronous>, transform_indices = @transform_1, window_bounds = array<i64: 128, 1280>}, {pipeline_mode = #tpu.pipeline_mode<synchronous>, transform_indices = @transform_2, window_bounds = array<i64: 1, 1280>}, {pipeline_mode = #tpu.pipeline_mode<synchronous>, transform_indices = @transform_3, window_bounds = array<i64: 1280, 128>}, {pipeline_mode = #tpu.pipeline_mode<synchronous>, transform_indices = @transform_4, window_bounds = array<i64: 1, 128>}, {transform_indices = @transform_5, window_bounds = array<i64: 1, 8, 128>}]} {
    %c0 = arith.constant 0 : index
    %c0_0 = arith.constant 0 : index
    %c0_1 = arith.constant 0 : index
    %0 = vector.load %arg1[%c0, %c0_0, %c0_1] : memref<8x128x64xf32, #tpu.memory_space<vmem>>, vector<1x128x64xf32>
    %1 = vector.shape_cast %0 : vector<1x128x64xf32> to vector<128x64xf32>
    %2 = tpu.transpose %1, [1, 0] : vector<128x64xf32> -> vector<64x128xf32>
    %3 = arith.truncf %2 : vector<64x128xf32> to vector<64x128xbf16>
    %c0_2 = arith.constant 0 : index
    %c0_3 = arith.constant 0 : index
    %4 = vector.load %arg7[%c0_2, %c0_3] : memref<512x128xbf16, #tpu.memory_space<vmem>>, vector<64x128xbf16>
    tpu.vector_store %arg7[%c0_2, %c0_3], %3 {strides = array<i32>} : memref<512x128xbf16, #tpu.memory_space<vmem>>, vector<64x128xbf16>,
    %c1 = arith.constant 1 : index
    %c0_4 = arith.constant 0 : index
    %c0_5 = arith.constant 0 : index
    %5 = vector.load %arg1[%c1, %c0_4, %c0_5] : memref<8x128x64xf32, #tpu.memory_space<vmem>>, vector<1x128x64xf32>
    %6 = vector.shape_cast %5 : vector<1x128x64xf32> to vector<128x64xf32>
    %7 = tpu.transpose %6, [1, 0] : vector<128x64xf32> -> vector<64x128xf32>
    %8 = arith.truncf %7 : vector<64x128xf32> to vector<64x128xbf16>
    %c64 = arith.constant 64 : index
    %c0_6 = arith.constant 0 : index
    %9 = vector.load %arg7[%c64, %c0_6] : memref<512x128xbf16, #tpu.memory_space<vmem>>, vector<64x128xbf16>
    tpu.vector_store %arg7[%c64, %c0_6], %8 {strides = array<i32>} : memref<512x128xbf16, #tpu.memory_space<vmem>>, vector<64x128xbf16>,
    %c2 = arith.constant 2 : index
    %c0_7 = arith.constant 0 : index
    %c0_8 = arith.constant 0 : index
    %10 = vector.load %arg1[%c2, %c0_7, %c0_8] : memref<8x128x64xf32, #tpu.memory_space<vmem>>, vector<1x128x64xf32>
    %11 = vector.shape_cast %10 : vector<1x128x64xf32> to vector<128x64xf32>
    %12 = tpu.transpose %11, [1, 0] : vector<128x64xf32> -> vector<64x128xf32>
    %13 = arith.truncf %12 : vector<64x128xf32> to vector<64x128xbf16>
    %c128 = arith.constant 128 : index
    %c0_9 = arith.constant 0 : index
    %14 = vector.load %arg7[%c128, %c0_9] : memref<512x128xbf16, #tpu.memory_space<vmem>>, vector<64x128xbf16>
    tpu.vector_store %arg7[%c128, %c0_9], %13 {strides = array<i32>} : memref<512x128xbf16, #tpu.memory_space<vmem>>, vector<64x128xbf16>,
    %c3 = arith.constant 3 : index
    %c0_10 = arith.constant 0 : index
    %c0_11 = arith.constant 0 : index
    %15 = vector.load %arg1[%c3, %c0_10, %c0_11] : memref<8x128x64xf32, #tpu.memory_space<vmem>>, vector<1x128x64xf32>
    %16 = vector.shape_cast %15 : vector<1x128x64xf32> to vector<128x64xf32>
    %17 = tpu.transpose %16, [1, 0] : vector<128x64xf32> -> vector<64x128xf32>
    %18 = arith.truncf %17 : vector<64x128xf32> to vector<64x128xbf16>
    %c192 = arith.constant 192 : index
    %c0_12 = arith.constant 0 : index
    %19 = vector.load %arg7[%c192, %c0_12] : memref<512x128xbf16, #tpu.memory_space<vmem>>, vector<64x128xbf16>
    tpu.vector_store %arg7[%c192, %c0_12], %18 {strides = array<i32>} : memref<512x128xbf16, #tpu.memory_space<vmem>>, vector<64x128xbf16>,
    %c4 = arith.constant 4 : index
    %c0_13 = arith.constant 0 : index
    %c0_14 = arith.constant 0 : index
    %20 = vector.load %arg1[%c4, %c0_13, %c0_14] : memref<8x128x64xf32, #tpu.memory_space<vmem>>, vector<1x128x64xf32>
    %21 = vector.shape_cast %20 : vector<1x128x64xf32> to vector<128x64xf32>
    %22 = tpu.transpose %21, [1, 0] : vector<128x64xf32> -> vector<64x128xf32>
    %23 = arith.truncf %22 : vector<64x128xf32> to vector<64x128xbf16>
    %c256 = arith.constant 256 : index
    %c0_15 = arith.constant 0 : index
    %24 = vector.load %arg7[%c256, %c0_15] : memref<512x128xbf16, #tpu.memory_space<vmem>>, vector<64x128xbf16>
    tpu.vector_store %arg7[%c256, %c0_15], %23 {strides = array<i32>} : memref<512x128xbf16, #tpu.memory_space<vmem>>, vector<64x128xbf16>,
    %c5 = arith.constant 5 : index
    %c0_16 = arith.constant 0 : index
    %c0_17 = arith.constant 0 : index
    %25 = vector.load %arg1[%c5, %c0_16, %c0_17] : memref<8x128x64xf32, #tpu.memory_space<vmem>>, vector<1x128x64xf32>
    %26 = vector.shape_cast %25 : vector<1x128x64xf32> to vector<128x64xf32>
    %27 = tpu.transpose %26, [1, 0] : vector<128x64xf32> -> vector<64x128xf32>
    %28 = arith.truncf %27 : vector<64x128xf32> to vector<64x128xbf16>
    %c320 = arith.constant 320 : index
    %c0_18 = arith.constant 0 : index
    %29 = vector.load %arg7[%c320, %c0_18] : memref<512x128xbf16, #tpu.memory_space<vmem>>, vector<64x128xbf16>
    tpu.vector_store %arg7[%c320, %c0_18], %28 {strides = array<i32>} : memref<512x128xbf16, #tpu.memory_space<vmem>>, vector<64x128xbf16>,
    %c6 = arith.constant 6 : index
    %c0_19 = arith.constant 0 : index
    %c0_20 = arith.constant 0 : index
    %30 = vector.load %arg1[%c6, %c0_19, %c0_20] : memref<8x128x64xf32, #tpu.memory_space<vmem>>, vector<1x128x64xf32>
    %31 = vector.shape_cast %30 : vector<1x128x64xf32> to vector<128x64xf32>
    %32 = tpu.transpose %31, [1, 0] : vector<128x64xf32> -> vector<64x128xf32>
    %33 = arith.truncf %32 : vector<64x128xf32> to vector<64x128xbf16>
    %c384 = arith.constant 384 : index
    %c0_21 = arith.constant 0 : index
    %34 = vector.load %arg7[%c384, %c0_21] : memref<512x128xbf16, #tpu.memory_space<vmem>>, vector<64x128xbf16>
    tpu.vector_store %arg7[%c384, %c0_21], %33 {strides = array<i32>} : memref<512x128xbf16, #tpu.memory_space<vmem>>, vector<64x128xbf16>,
    %c7 = arith.constant 7 : index
    %c0_22 = arith.constant 0 : index
    %c0_23 = arith.constant 0 : index
    %35 = vector.load %arg1[%c7, %c0_22, %c0_23] : memref<8x128x64xf32, #tpu.memory_space<vmem>>, vector<1x128x64xf32>
    %36 = vector.shape_cast %35 : vector<1x128x64xf32> to vector<128x64xf32>
    %37 = tpu.transpose %36, [1, 0] : vector<128x64xf32> -> vector<64x128xf32>
    %38 = arith.truncf %37 : vector<64x128xf32> to vector<64x128xbf16>
    %c448 = arith.constant 448 : index
    %c0_24 = arith.constant 0 : index
    %39 = vector.load %arg7[%c448, %c0_24] : memref<512x128xbf16, #tpu.memory_space<vmem>>, vector<64x128xbf16>
    tpu.vector_store %arg7[%c448, %c0_24], %38 {strides = array<i32>} : memref<512x128xbf16, #tpu.memory_space<vmem>>, vector<64x128xbf16>,
    %c0_25 = arith.constant 0 : index
    %c0_26 = arith.constant 0 : index
    %40 = vector.load %arg7[%c0_25, %c0_26] : memref<512x128xbf16, #tpu.memory_space<vmem>>, vector<512x128xbf16>
    %cst = arith.constant 0.000000e+00 : f32
    %41 = vector.broadcast %cst : f32 to vector<8x128xf32>
    %c0_27 = arith.constant 0 : index
    %c0_28 = arith.constant 0 : index
    %42 = vector.load %arg2[%c0_27, %c0_28] : memref<128x1280xbf16, #tpu.memory_space<vmem>>, vector<128x256xbf16>
    %c0_29 = arith.constant 0 : index
    %c0_30 = arith.constant 0 : index
    %43 = vector.load %arg3[%c0_29, %c0_30] : memref<1x1280xf32, #tpu.memory_space<vmem>>, vector<1x256xf32>
    %cst_31 = arith.constant dense<0.000000e+00> : vector<512x256xf32>
    %44 = tpu.matmul %40, %42, %cst_31 {dimension_numbers = #tpu.dot_dimension_numbers<[1], [0], [0], [1], [0, 0, 1, 1], [], []>} : vector<512x128xbf16>, vector<128x256xbf16>, vector<512x256xf32> -> vector<512x256xf32>
    %45 = vector.broadcast %43 : vector<1x256xf32> to vector<512x256xf32>
    %46 = arith.addf %44, %45 : vector<512x256xf32>
    %cst_32 = arith.constant 0.000000e+00 : f32
    %47 = vector.broadcast %cst_32 : f32 to vector<512x256xf32>
    %48 = arith.maximumf %46, %47 : vector<512x256xf32>
    %49 = vector.shape_cast %48 : vector<512x256xf32> to vector<8x64x256xf32>
    %cst_33 = arith.constant dense<0.000000e+00> : vector<8x256xf32>
    %50 = vector.multi_reduction <add>, %49, %cst_33 [1] : vector<8x64x256xf32> to vector<8x256xf32>
    %c0_34 = arith.constant 0 : index
    %c0_35 = arith.constant 0 : index
    %51 = vector.load %arg4[%c0_34, %c0_35] : memref<1280x128xf32, #tpu.memory_space<vmem>>, vector<256x128xf32>
    %cst_36 = arith.constant dense<0.000000e+00> : vector<8x128xf32>
    %52 = tpu.matmul %50, %51, %cst_36 {dimension_numbers = #tpu.dot_dimension_numbers<[1], [0], [0], [1], [0, 0, 1, 1], [], []>} : vector<8x256xf32>, vector<256x128xf32>, vector<8x128xf32> -> vector<8x128xf32>
    %53 = arith.addf %41, %52 : vector<8x128xf32>
    %c0_37 = arith.constant 0 : index
    %c256_38 = arith.constant 256 : index
    %54 = vector.load %arg2[%c0_37, %c256_38] : memref<128x1280xbf16, #tpu.memory_space<vmem>>, vector<128x256xbf16>
    %c0_39 = arith.constant 0 : index
    %c256_40 = arith.constant 256 : index
    %55 = vector.load %arg3[%c0_39, %c256_40] : memref<1x1280xf32, #tpu.memory_space<vmem>>, vector<1x256xf32>
    %cst_41 = arith.constant dense<0.000000e+00> : vector<512x256xf32>
    %56 = tpu.matmul %40, %54, %cst_41 {dimension_numbers = #tpu.dot_dimension_numbers<[1], [0], [0], [1], [0, 0, 1, 1], [], []>} : vector<512x128xbf16>, vector<128x256xbf16>, vector<512x256xf32> -> vector<512x256xf32>
    %57 = vector.broadcast %55 : vector<1x256xf32> to vector<512x256xf32>
    %58 = arith.addf %56, %57 : vector<512x256xf32>
    %cst_42 = arith.constant 0.000000e+00 : f32
    %59 = vector.broadcast %cst_42 : f32 to vector<512x256xf32>
    %60 = arith.maximumf %58, %59 : vector<512x256xf32>
    %61 = vector.shape_cast %60 : vector<512x256xf32> to vector<8x64x256xf32>
    %cst_43 = arith.constant dense<0.000000e+00> : vector<8x256xf32>
    %62 = vector.multi_reduction <add>, %61, %cst_43 [1] : vector<8x64x256xf32> to vector<8x256xf32>
    %c256_44 = arith.constant 256 : index
    %c0_45 = arith.constant 0 : index
    %63 = vector.load %arg4[%c256_44, %c0_45] : memref<1280x128xf32, #tpu.memory_space<vmem>>, vector<256x128xf32>
    %cst_46 = arith.constant dense<0.000000e+00> : vector<8x128xf32>
    %64 = tpu.matmul %62, %63, %cst_46 {dimension_numbers = #tpu.dot_dimension_numbers<[1], [0], [0], [1], [0, 0, 1, 1], [], []>} : vector<8x256xf32>, vector<256x128xf32>, vector<8x128xf32> -> vector<8x128xf32>
    %65 = arith.addf %53, %64 : vector<8x128xf32>
    %c0_47 = arith.constant 0 : index
    %c512 = arith.constant 512 : index
    %66 = vector.load %arg2[%c0_47, %c512] : memref<128x1280xbf16, #tpu.memory_space<vmem>>, vector<128x256xbf16>
    %c0_48 = arith.constant 0 : index
    %c512_49 = arith.constant 512 : index
    %67 = vector.load %arg3[%c0_48, %c512_49] : memref<1x1280xf32, #tpu.memory_space<vmem>>, vector<1x256xf32>
    %cst_50 = arith.constant dense<0.000000e+00> : vector<512x256xf32>
    %68 = tpu.matmul %40, %66, %cst_50 {dimension_numbers = #tpu.dot_dimension_numbers<[1], [0], [0], [1], [0, 0, 1, 1], [], []>} : vector<512x128xbf16>, vector<128x256xbf16>, vector<512x256xf32> -> vector<512x256xf32>
    %69 = vector.broadcast %67 : vector<1x256xf32> to vector<512x256xf32>
    %70 = arith.addf %68, %69 : vector<512x256xf32>
    %cst_51 = arith.constant 0.000000e+00 : f32
    %71 = vector.broadcast %cst_51 : f32 to vector<512x256xf32>
    %72 = arith.maximumf %70, %71 : vector<512x256xf32>
    %73 = vector.shape_cast %72 : vector<512x256xf32> to vector<8x64x256xf32>
    %cst_52 = arith.constant dense<0.000000e+00> : vector<8x256xf32>
    %74 = vector.multi_reduction <add>, %73, %cst_52 [1] : vector<8x64x256xf32> to vector<8x256xf32>
    %c512_53 = arith.constant 512 : index
    %c0_54 = arith.constant 0 : index
    %75 = vector.load %arg4[%c512_53, %c0_54] : memref<1280x128xf32, #tpu.memory_space<vmem>>, vector<256x128xf32>
    %cst_55 = arith.constant dense<0.000000e+00> : vector<8x128xf32>
    %76 = tpu.matmul %74, %75, %cst_55 {dimension_numbers = #tpu.dot_dimension_numbers<[1], [0], [0], [1], [0, 0, 1, 1], [], []>} : vector<8x256xf32>, vector<256x128xf32>, vector<8x128xf32> -> vector<8x128xf32>
    %77 = arith.addf %65, %76 : vector<8x128xf32>
    %c0_56 = arith.constant 0 : index
    %c768 = arith.constant 768 : index
    %78 = vector.load %arg2[%c0_56, %c768] : memref<128x1280xbf16, #tpu.memory_space<vmem>>, vector<128x256xbf16>
    %c0_57 = arith.constant 0 : index
    %c768_58 = arith.constant 768 : index
    %79 = vector.load %arg3[%c0_57, %c768_58] : memref<1x1280xf32, #tpu.memory_space<vmem>>, vector<1x256xf32>
    %cst_59 = arith.constant dense<0.000000e+00> : vector<512x256xf32>
    %80 = tpu.matmul %40, %78, %cst_59 {dimension_numbers = #tpu.dot_dimension_numbers<[1], [0], [0], [1], [0, 0, 1, 1], [], []>} : vector<512x128xbf16>, vector<128x256xbf16>, vector<512x256xf32> -> vector<512x256xf32>
    %81 = vector.broadcast %79 : vector<1x256xf32> to vector<512x256xf32>
    %82 = arith.addf %80, %81 : vector<512x256xf32>
    %cst_60 = arith.constant 0.000000e+00 : f32
    %83 = vector.broadcast %cst_60 : f32 to vector<512x256xf32>
    %84 = arith.maximumf %82, %83 : vector<512x256xf32>
    %85 = vector.shape_cast %84 : vector<512x256xf32> to vector<8x64x256xf32>
    %cst_61 = arith.constant dense<0.000000e+00> : vector<8x256xf32>
    %86 = vector.multi_reduction <add>, %85, %cst_61 [1] : vector<8x64x256xf32> to vector<8x256xf32>
    %c768_62 = arith.constant 768 : index
    %c0_63 = arith.constant 0 : index
    %87 = vector.load %arg4[%c768_62, %c0_63] : memref<1280x128xf32, #tpu.memory_space<vmem>>, vector<256x128xf32>
    %cst_64 = arith.constant dense<0.000000e+00> : vector<8x128xf32>
    %88 = tpu.matmul %86, %87, %cst_64 {dimension_numbers = #tpu.dot_dimension_numbers<[1], [0], [0], [1], [0, 0, 1, 1], [], []>} : vector<8x256xf32>, vector<256x128xf32>, vector<8x128xf32> -> vector<8x128xf32>
    %89 = arith.addf %77, %88 : vector<8x128xf32>
    %c0_65 = arith.constant 0 : index
    %c1024 = arith.constant 1024 : index
    %90 = vector.load %arg2[%c0_65, %c1024] : memref<128x1280xbf16, #tpu.memory_space<vmem>>, vector<128x256xbf16>
    %c0_66 = arith.constant 0 : index
    %c1024_67 = arith.constant 1024 : index
    %91 = vector.load %arg3[%c0_66, %c1024_67] : memref<1x1280xf32, #tpu.memory_space<vmem>>, vector<1x256xf32>
    %cst_68 = arith.constant dense<0.000000e+00> : vector<512x256xf32>
    %92 = tpu.matmul %40, %90, %cst_68 {dimension_numbers = #tpu.dot_dimension_numbers<[1], [0], [0], [1], [0, 0, 1, 1], [], []>} : vector<512x128xbf16>, vector<128x256xbf16>, vector<512x256xf32> -> vector<512x256xf32>
    %93 = vector.broadcast %91 : vector<1x256xf32> to vector<512x256xf32>
    %94 = arith.addf %92, %93 : vector<512x256xf32>
    %cst_69 = arith.constant 0.000000e+00 : f32
    %95 = vector.broadcast %cst_69 : f32 to vector<512x256xf32>
    %96 = arith.maximumf %94, %95 : vector<512x256xf32>
    %97 = vector.shape_cast %96 : vector<512x256xf32> to vector<8x64x256xf32>
    %cst_70 = arith.constant dense<0.000000e+00> : vector<8x256xf32>
    %98 = vector.multi_reduction <add>, %97, %cst_70 [1] : vector<8x64x256xf32> to vector<8x256xf32>
    %c1024_71 = arith.constant 1024 : index
    %c0_72 = arith.constant 0 : index
    %99 = vector.load %arg4[%c1024_71, %c0_72] : memref<1280x128xf32, #tpu.memory_space<vmem>>, vector<256x128xf32>
    %cst_73 = arith.constant dense<0.000000e+00> : vector<8x128xf32>
    %100 = tpu.matmul %98, %99, %cst_73 {dimension_numbers = #tpu.dot_dimension_numbers<[1], [0], [0], [1], [0, 0, 1, 1], [], []>} : vector<8x256xf32>, vector<256x128xf32>, vector<8x128xf32> -> vector<8x128xf32>
    %101 = arith.addf %89, %100 : vector<8x128xf32>
    %c0_74 = arith.constant 0 : index
    %c0_75 = arith.constant 0 : index
    %102 = vector.load %arg5[%c0_74, %c0_75] : memref<1x128xf32, #tpu.memory_space<vmem>>, vector<1x128xf32>
    %103 = vector.broadcast %102 : vector<1x128xf32> to vector<8x128xf32>
    %104 = arith.addf %101, %103 : vector<8x128xf32>
    %c0_76 = arith.constant 0 : index
    %c0_77 = arith.constant 0 : index
    %c0_78 = arith.constant 0 : index
    %105 = vector.load %arg6[%c0_76, %c0_77, %c0_78] : memref<1x8x128xf32, #tpu.memory_space<vmem>>, vector<1x8x128xf32>
    %106 = vector.shape_cast %105 : vector<1x8x128xf32> to vector<8x128xf32>
    %107 = vector.shape_cast %104 : vector<8x128xf32> to vector<1x8x128xf32>
    tpu.vector_store %arg6[%c0_76, %c0_77, %c0_78], %107 {strides = array<i32>} : memref<1x8x128xf32, #tpu.memory_space<vmem>>, vector<1x8x128xf32>,
    return
  }
  func.func @transform_0(%arg0: i32) -> (i32, i32, i32) {
    %c0_i32 = arith.constant 0 : i32
    %c0_i32_0 = arith.constant 0 : i32
    %c0_i32_1 = arith.constant 0 : i32
    return %arg0, %c0_i32, %c0_i32_0 : i32, i32, i32
  }
  func.func @transform_1(%arg0: i32) -> (i32, i32) {
    %c0_i32 = arith.constant 0 : i32
    %c0_i32_0 = arith.constant 0 : i32
    %c0_i32_1 = arith.constant 0 : i32
    return %c0_i32, %c0_i32_0 : i32, i32
  }
  func.func @transform_2(%arg0: i32) -> (i32, i32) {
    %c0_i32 = arith.constant 0 : i32
    %c0_i32_0 = arith.constant 0 : i32
    %c0_i32_1 = arith.constant 0 : i32
    return %c0_i32, %c0_i32_0 : i32, i32
  }
  func.func @transform_3(%arg0: i32) -> (i32, i32) {
    %c0_i32 = arith.constant 0 : i32
    %c0_i32_0 = arith.constant 0 : i32
    %c0_i32_1 = arith.constant 0 : i32
    return %c0_i32, %c0_i32_0 : i32, i32
  }
  func.func @transform_4(%arg0: i32) -> (i32, i32) {
    %c0_i32 = arith.constant 0 : i32
    %c0_i32_0 = arith.constant 0 : i32
    %c0_i32_1 = arith.constant 0 : i32
    return %c0_i32, %c0_i32_0 : i32, i32
  }
  func.func @transform_5(%arg0: i32) -> (i32, i32, i32) {
    %c0_i32 = arith.constant 0 : i32
    %c0_i32_0 = arith.constant 0 : i32
    %c0_i32_1 = arith.constant 0 : i32
    return %arg0, %c0_i32, %c0_i32_0 : i32, i32, i32
  }
}

</mosaic_0001>

<llo_original>
// kernel: classification_head.1
$region0: #{classification_head.1}
  #allocation0 [shape = 'u32[]', space=smem, size = 0x4, offset = 0x4, fixed_abs, tag = 'smem constant byte address 0x4 - core index']
  #allocation1 [shape = 'u32[144,128]{1,0:T(1,128)}', space=vmem, size = 0x12000, scoped, tag = 'internal scratch']
  #allocation2 [shape = 'bf16[512,128]{1,0:T(16,128)(2,1)}', space=vmem, size = 0x20000, scoped, tag = 'scratch operand']
  %s0 = inlined_call_operand.vmem [shape: f32[8,128,64], index: 0, kind: input, shape index: {}]
  %s1 = inlined_call_operand.vmem [shape: bf16[128,1280], index: 1, kind: input, shape index: {}]
  %s2 = inlined_call_operand.vmem [shape: f32[1,1280], index: 2, kind: input, shape index: {}]
  %s3 = inlined_call_operand.vmem [shape: f32[1280,128], index: 3, kind: input, shape index: {}]
  %s4 = inlined_call_operand.vmem [shape: f32[1,128], index: 4, kind: input, shape index: {}]
  %s5 = inlined_call_operand.hbm [shape: f32[1,8,128], index: 5, kind: output, shape index: {}]
  %s6 = sld [smem:[#allocation0]]
  $region30: #{classification_head.1} parent=0
    _
  %s8 = ssub.s32 1, %s6
  %s9 = scalar_select 0, %s8, %s6
  $region1: #{classification_head.1} parent=0
    #allocation3 [shape = 'u8[4096]{0}', space=vmem, size = 0x1000, scoped, tag = 'output window, operand 0, single buffered']
    #allocation4 [shape = 's32[1]{0}', space=sflag, size = 0x4, scoped, tag = 'scoped memory for classification_head.1']
    %10 = vsyncpa [#allocation4], 0
    // Predicated region
    $region2: #{classification_head.1} parent=1 // pred_check
      _
    $region3: #{classification_head.1} parent=1 // pred_check_branch
      %12 = sbr.rel (0) target = $region5
    $region4: #{classification_head.1} parent=1 // pred_region
      _
    $region5: #{classification_head.1} parent=1 // pred_fallthru
      _
    // Predicated region
    $region6: #{classification_head.1} parent=1 // pred_check
      _
    $region7: #{classification_head.1} parent=1 // pred_check_branch
      %14 = sbr.rel (0) target = $region9
    $region8: #{classification_head.1} parent=1 // pred_region
      _
    $region9: #{classification_head.1} parent=1 // pred_fallthru
      _
    // Predicated region
    $region10: #{classification_head.1} parent=1 // pred_check
      _
    $region11: #{classification_head.1} parent=1 // pred_check_branch
      %16 = sbr.rel (0) target = $region13
    $region12: #{classification_head.1} parent=1 // pred_region
      _
    $region13: #{classification_head.1} parent=1 // pred_fallthru
      _
    // Predicated region
    $region14: #{classification_head.1} parent=1 // pred_check
      _
    $region15: #{classification_head.1} parent=1 // pred_check_branch
      %18 = sbr.rel (0) target = $region17
    $region16: #{classification_head.1} parent=1 // pred_region
      _
    $region17: #{classification_head.1} parent=1 // pred_fallthru
      _
    // Predicated region
    $region18: #{classification_head.1} parent=1 // pred_check
      _
    $region19: #{classification_head.1} parent=1 // pred_check_branch
      %20 = sbr.rel (0) target = $region21
    $region20: #{classification_head.1} parent=1 // pred_region
      _
    $region21: #{classification_head.1} parent=1 // pred_fallthru
      _
    %v22 = vld [vmem:[%s0] sm:$0xff]
    %v23 = vld [vmem:[%s0 + $0x8] sm:$0xff]
    %v24 = vld [vmem:[%s0 + $0x10] sm:$0xff]
    %v25 = vld [vmem:[%s0 + $0x18] sm:$0xff]
    %v26 = vld [vmem:[%s0 + $0x20] sm:$0xff]
    %v27 = vld [vmem:[%s0 + $0x28] sm:$0xff]
    %v28 = vld [vmem:[%s0 + $0x30] sm:$0xff]
    %v29 = vld [vmem:[%s0 + $0x38] sm:$0xff]
    %v30 = vld [vmem:[%s0 + $0x40] sm:$0xff]
    %v31 = vld [vmem:[%s0 + $0x48] sm:$0xff]
    %v32 = vld [vmem:[%s0 + $0x50] sm:$0xff]
    %v33 = vld [vmem:[%s0 + $0x58] sm:$0xff]
    %v34 = vld [vmem:[%s0 + $0x60] sm:$0xff]
    %v35 = vld [vmem:[%s0 + $0x68] sm:$0xff]
    %v36 = vld [vmem:[%s0 + $0x70] sm:$0xff]
    %v37 = vld [vmem:[%s0 + $0x78] sm:$0xff]
    %38 = vxpose.xlu0.b32.start [1/16] %v22, 128
    %39 = vxpose.xlu0.b32.cont [2/16] %v23, 128
    %40 = vxpose.xlu0.b32.cont [3/16] %v24, 128
    %41 = vxpose.xlu0.b32.cont [4/16] %v25, 128
    %42 = vxpose.xlu0.b32.cont [5/16] %v26, 128
    %43 = vxpose.xlu0.b32.cont [6/16] %v27, 128
    %44 = vxpose.xlu0.b32.cont [7/16] %v28, 128
    %45 = vxpose.xlu0.b32.cont [8/16] %v29, 128
    %46 = vxpose.xlu0.b32.cont [9/16] %v30, 128
    %47 = vxpose.xlu0.b32.cont [10/16] %v31, 128
    %48 = vxpose.xlu0.b32.cont [11/16] %v32, 128
    %49 = vxpose.xlu0.b32.cont [12/16] %v33, 128
    %50 = vxpose.xlu0.b32.cont [13/16] %v34, 128
    %51 = vxpose.xlu0.b32.cont [14/16] %v35, 128
    %52 = vxpose.xlu0.b32.cont [15/16] %v36, 128
    %53 = vxpose.xlu0.b32.end [16/16] %v37, 128
    %v54 = vpop.trf.xlu0
    %v55 = vpop.trf.xlu0
    %v56 = vpop.trf.xlu0
    %v57 = vpop.trf.xlu0
    %v58 = vpop.trf.xlu0
    %v59 = vpop.trf.xlu0
    %v60 = vpop.trf.xlu0
    %v61 = vpop.trf.xlu0
    %v62 = vpop.trf.xlu0
    %v63 = vpop.trf.xlu0
    %v64 = vpop.trf.xlu0
    %v65 = vpop.trf.xlu0
    %v66 = vpop.trf.xlu0
    %v67 = vpop.trf.xlu0
    %v68 = vpop.trf.xlu0
    %v69 = vpop.trf.xlu0
    %v70 = vpack.c.bf16 %v55, %v54
    %v71 = vpack.c.bf16 %v57, %v56
    %v72 = vpack.c.bf16 %v59, %v58
    %v73 = vpack.c.bf16 %v61, %v60
    %74 = vst [vmem:[#allocation2] sm:$0xff] %v70
    %75 = vst [vmem:[#allocation2 + $0x8] sm:$0xff] %v71
    %76 = vst [vmem:[#allocation2 + $0x10] sm:$0xff] %v72
    %77 = vst [vmem:[#allocation2 + $0x18] sm:$0xff] %v73
    %s78 = scalar_lea.vmem %s0, 128
    %v79 = vld [vmem:[%s78] sm:$0xff]
    %v80 = vld [vmem:[%s78 + $0x8] sm:$0xff]
    %v81 = vld [vmem:[%s78 + $0x10] sm:$0xff]
    %v82 = vld [vmem:[%s78 + $0x18] sm:$0xff]
    %v83 = vld [vmem:[%s78 + $0x20] sm:$0xff]
    %v84 = vld [vmem:[%s78 + $0x28] sm:$0xff]
    %v85 = vld [vmem:[%s78 + $0x30] sm:$0xff]
    %v86 = vld [vmem:[%s78 + $0x38] sm:$0xff]
    %v87 = vld [vmem:[%s78 + $0x40] sm:$0xff]
    %v88 = vld [vmem:[%s78 + $0x48] sm:$0xff]
    %v89 = vld [vmem:[%s78 + $0x50] sm:$0xff]
    %v90 = vld [vmem:[%s78 + $0x58] sm:$0xff]
    %v91 = vld [vmem:[%s78 + $0x60] sm:$0xff]
    %v92 = vld [vmem:[%s78 + $0x68] sm:$0xff]
    %v93 = vld [vmem:[%s78 + $0x70] sm:$0xff]
    %v94 = vld [vmem:[%s78 + $0x78] sm:$0xff]
    %95 = vxpose.xlu0.b32.start [1/16] %v79, 128
    %96 = vxpose.xlu0.b32.cont [2/16] %v80, 128
    %97 = vxpose.xlu0.b32.cont [3/16] %v81, 128
    %98 = vxpose.xlu0.b32.cont [4/16] %v82, 128
    %99 = vxpose.xlu0.b32.cont [5/16] %v83, 128
    %100 = vxpose.xlu0.b32.cont [6/16] %v84, 128
    %101 = vxpose.xlu0.b32.cont [7/16] %v85, 128
    %102 = vxpose.xlu0.b32.cont [8/16] %v86, 128
    %103 = vxpose.xlu0.b32.cont [9/16] %v87, 128
    %104 = vxpose.xlu0.b32.cont [10/16] %v88, 128
    %105 = vxpose.xlu0.b32.cont [11/16] %v89, 128
    %106 = vxpose.xlu0.b32.cont [12/16] %v90, 128
    %107 = vxpose.xlu0.b32.cont [13/16] %v91, 128
    %108 = vxpose.xlu0.b32.cont [14/16] %v92, 128
    %109 = vxpose.xlu0.b32.cont [15/16] %v93, 128
    %110 = vxpose.xlu0.b32.end [16/16] %v94, 128
    %v111 = vpop.trf.xlu0
    %v112 = vpop.trf.xlu0
    %v113 = vpop.trf.xlu0
    %v114 = vpop.trf.xlu0
    %v115 = vpop.trf.xlu0
    %v116 = vpop.trf.xlu0
    %v117 = vpop.trf.xlu0
    %v118 = vpop.trf.xlu0
    %v119 = vpop.trf.xlu0
    %v120 = vpop.trf.xlu0
    %v121 = vpop.trf.xlu0
    %v122 = vpop.trf.xlu0
    %v123 = vpop.trf.xlu0
    %v124 = vpop.trf.xlu0
    %v125 = vpop.trf.xlu0
    %v126 = vpop.trf.xlu0
    %v127 = vpack.c.bf16 %v112, %v111
    %v128 = vpack.c.bf16 %v114, %v113
    %v129 = vpack.c.bf16 %v116, %v115
    %v130 = vpack.c.bf16 %v118, %v117
    %131 = vst [vmem:[#allocation2 + $0x20] sm:$0xff] %v127
    %132 = vst [vmem:[#allocation2 + $0x28] sm:$0xff] %v128
    %133 = vst [vmem:[#allocation2 + $0x30] sm:$0xff] %v129
    %134 = vst [vmem:[#allocation2 + $0x38] sm:$0xff] %v130
    %s135 = scalar_lea.vmem %s0, 256
    %v136 = vld [vmem:[%s135] sm:$0xff]
    %v137 = vld [vmem:[%s135 + $0x8] sm:$0xff]
    %v138 = vld [vmem:[%s135 + $0x10] sm:$0xff]
    %v139 = vld [vmem:[%s135 + $0x18] sm:$0xff]
    %v140 = vld [vmem:[%s135 + $0x20] sm:$0xff]
    %v141 = vld [vmem:[%s135 + $0x28] sm:$0xff]
    %v142 = vld [vmem:[%s135 + $0x30] sm:$0xff]
    %v143 = vld [vmem:[%s135 + $0x38] sm:$0xff]
    %v144 = vld [vmem:[%s135 + $0x40] sm:$0xff]
    %v145 = vld [vmem:[%s135 + $0x48] sm:$0xff]
    %v146 = vld [vmem:[%s135 + $0x50] sm:$0xff]
    %v147 = vld [vmem:[%s135 + $0x58] sm:$0xff]
    %v148 = vld [vmem:[%s135 + $0x60] sm:$0xff]
    %v149 = vld [vmem:[%s135 + $0x68] sm:$0xff]
    %v150 = vld [vmem:[%s135 + $0x70] sm:$0xff]
    %v151 = vld [vmem:[%s135 + $0x78] sm:$0xff]
    %152 = vxpose.xlu0.b32.start [1/16] %v136, 128
    %153 = vxpose.xlu0.b32.cont [2/16] %v137, 128
    %154 = vxpose.xlu0.b32.cont [3/16] %v138, 128
    %155 = vxpose.xlu0.b32.cont [4/16] %v139, 128
    %156 = vxpose.xlu0.b32.cont [5/16] %v140, 128
    %157 = vxpose.xlu0.b32.cont [6/16] %v141, 128
    %158 = vxpose.xlu0.b32.cont [7/16] %v142, 128
    %159 = vxpose.xlu0.b32.cont [8/16] %v143, 128
    %160 = vxpose.xlu0.b32.cont [9/16] %v144, 128
    %161 = vxpose.xlu0.b32.cont [10/16] %v145, 128
    %162 = vxpose.xlu0.b32.cont [11/16] %v146, 128
    %163 = vxpose.xlu0.b32.cont [12/16] %v147, 128
    %164 = vxpose.xlu0.b32.cont [13/16] %v148, 128
    %165 = vxpose.xlu0.b32.cont [14/16] %v149, 128
    %166 = vxpose.xlu0.b32.cont [15/16] %v150, 128
    %167 = vxpose.xlu0.b32.end [16/16] %v151, 128
    %v168 = vpop.trf.xlu0
    %v169 = vpop.trf.xlu0
    %v170 = vpop.trf.xlu0
    %v171 = vpop.trf.xlu0
    %v172 = vpop.trf.xlu0
    %v173 = vpop.trf.xlu0
    %v174 = vpop.trf.xlu0
    %v175 = vpop.trf.xlu0
    %v176 = vpop.trf.xlu0
    %v177 = vpop.trf.xlu0
    %v178 = vpop.trf.xlu0
    %v179 = vpop.trf.xlu0
    %v180 = vpop.trf.xlu0
    %v181 = vpop.trf.xlu0
    %v182 = vpop.trf.xlu0
    %v183 = vpop.trf.xlu0
    %v184 = vpack.c.bf16 %v169, %v168
    %v185 = vpack.c.bf16 %v171, %v170
    %v186 = vpack.c.bf16 %v173, %v172
    %v187 = vpack.c.bf16 %v175, %v174
    %188 = vst [vmem:[#allocation2 + $0x40] sm:$0xff] %v184
    %189 = vst [vmem:[#allocation2 + $0x48] sm:$0xff] %v185
    %190 = vst [vmem:[#allocation2 + $0x50] sm:$0xff] %v186
    %191 = vst [vmem:[#allocation2 + $0x58] sm:$0xff] %v187
    %s192 = scalar_lea.vmem %s0, 384
    %v193 = vld [vmem:[%s192] sm:$0xff]
    %v194 = vld [vmem:[%s192 + $0x8] sm:$0xff]
    %v195 = vld [vmem:[%s192 + $0x10] sm:$0xff]
    %v196 = vld [vmem:[%s192 + $0x18] sm:$0xff]
    %v197 = vld [vmem:[%s192 + $0x20] sm:$0xff]
    %v198 = vld [vmem:[%s192 + $0x28] sm:$0xff]
    %v199 = vld [vmem:[%s192 + $0x30] sm:$0xff]
    %v200 = vld [vmem:[%s192 + $0x38] sm:$0xff]
    %v201 = vld [vmem:[%s192 + $0x40] sm:$0xff]
    %v202 = vld [vmem:[%s192 + $0x48] sm:$0xff]
    %v203 = vld [vmem:[%s192 + $0x50] sm:$0xff]
    %v204 = vld [vmem:[%s192 + $0x58] sm:$0xff]
    %v205 = vld [vmem:[%s192 + $0x60] sm:$0xff]
    %v206 = vld [vmem:[%s192 + $0x68] sm:$0xff]
    %v207 = vld [vmem:[%s192 + $0x70] sm:$0xff]
    %v208 = vld [vmem:[%s192 + $0x78] sm:$0xff]
    %209 = vxpose.xlu0.b32.start [1/16] %v193, 128
    %210 = vxpose.xlu0.b32.cont [2/16] %v194, 128
    %211 = vxpose.xlu0.b32.cont [3/16] %v195, 128
    %212 = vxpose.xlu0.b32.cont [4/16] %v196, 128
    %213 = vxpose.xlu0.b32.cont [5/16] %v197, 128
    %214 = vxpose.xlu0.b32.cont [6/16] %v198, 128
    %215 = vxpose.xlu0.b32.cont [7/16] %v199, 128
    %216 = vxpose.xlu0.b32.cont [8/16] %v200, 128
    %217 = vxpose.xlu0.b32.cont [9/16] %v201, 128
    %218 = vxpose.xlu0.b32.cont [10/16] %v202, 128
    %219 = vxpose.xlu0.b32.cont [11/16] %v203, 128
    %220 = vxpose.xlu0.b32.cont [12/16] %v204, 128
    %221 = vxpose.xlu0.b32.cont [13/16] %v205, 128
    %222 = vxpose.xlu0.b32.cont [14/16] %v206, 128
    %223 = vxpose.xlu0.b32.cont [15/16] %v207, 128
    %224 = vxpose.xlu0.b32.end [16/16] %v208, 128
    %v225 = vpop.trf.xlu0
    %v226 = vpop.trf.xlu0
    %v227 = vpop.trf.xlu0
    %v228 = vpop.trf.xlu0
    %v229 = vpop.trf.xlu0
    %v230 = vpop.trf.xlu0
    %v231 = vpop.trf.xlu0
    %v232 = vpop.trf.xlu0
    %v233 = vpop.trf.xlu0
    %v234 = vpop.trf.xlu0
    %v235 = vpop.trf.xlu0
    %v236 = vpop.trf.xlu0
    %v237 = vpop.trf.xlu0
    %v238 = vpop.trf.xlu0
    %v239 = vpop.trf.xlu0
    %v240 = vpop.trf.xlu0
    %v241 = vpack.c.bf16 %v226, %v225
    %v242 = vpack.c.bf16 %v228, %v227
    %v243 = vpack.c.bf16 %v230, %v229
    %v244 = vpack.c.bf16 %v232, %v231
    %245 = vst [vmem:[#allocation2 + $0x60] sm:$0xff] %v241
    %246 = vst [vmem:[#allocation2 + $0x68] sm:$0xff] %v242
    %247 = vst [vmem:[#allocation2 + $0x70] sm:$0xff] %v243
    %248 = vst [vmem:[#allocation2 + $0x78] sm:$0xff] %v244
    %s249 = scalar_lea.vmem %s0, 512
    %v250 = vld [vmem:[%s249] sm:$0xff]
    %v251 = vld [vmem:[%s249 + $0x8] sm:$0xff]
    %v252 = vld [vmem:[%s249 + $0x10] sm:$0xff]
    %v253 = vld [vmem:[%s249 + $0x18] sm:$0xff]
    %v254 = vld [vmem:[%s249 + $0x20] sm:$0xff]
    %v255 = vld [vmem:[%s249 + $0x28] sm:$0xff]
    %v256 = vld [vmem:[%s249 + $0x30] sm:$0xff]
    %v257 = vld [vmem:[%s249 + $0x38] sm:$0xff]
    %v258 = vld [vmem:[%s249 + $0x40] sm:$0xff]
    %v259 = vld [vmem:[%s249 + $0x48] sm:$0xff]
    %v260 = vld [vmem:[%s249 + $0x50] sm:$0xff]
    %v261 = vld [vmem:[%s249 + $0x58] sm:$0xff]
    %v262 = vld [vmem:[%s249 + $0x60] sm:$0xff]
    %v263 = vld [vmem:[%s249 + $0x68] sm:$0xff]
    %v264 = vld [vmem:[%s249 + $0x70] sm:$0xff]
    %v265 = vld [vmem:[%s249 + $0x78] sm:$0xff]
    %266 = vxpose.xlu0.b32.start [1/16] %v250, 128
    %267 = vxpose.xlu0.b32.cont [2/16] %v251, 128
    %268 = vxpose.xlu0.b32.cont [3/16] %v252, 128
    %269 = vxpose.xlu0.b32.cont [4/16] %v253, 128
    %270 = vxpose.xlu0.b32.cont [5/16] %v254, 128
    %271 = vxpose.xlu0.b32.cont [6/16] %v255, 128
    %272 = vxpose.xlu0.b32.cont [7/16] %v256, 128
    %273 = vxpose.xlu0.b32.cont [8/16] %v257, 128
    %274 = vxpose.xlu0.b32.cont [9/16] %v258, 128
    %275 = vxpose.xlu0.b32.cont [10/16] %v259, 128
    %276 = vxpose.xlu0.b32.cont [11/16] %v260, 128
    %277 = vxpose.xlu0.b32.cont [12/16] %v261, 128
    %278 = vxpose.xlu0.b32.cont [13/16] %v262, 128
    %279 = vxpose.xlu0.b32.cont [14/16] %v263, 128
    %280 = vxpose.xlu0.b32.cont [15/16] %v264, 128
    %281 = vxpose.xlu0.b32.end [16/16] %v265, 128
    %v282 = vpop.trf.xlu0
    %v283 = vpop.trf.xlu0
    %v284 = vpop.trf.xlu0
    %v285 = vpop.trf.xlu0
    %v286 = vpop.trf.xlu0
    %v287 = vpop.trf.xlu0
    %v288 = vpop.trf.xlu0
    %v289 = vpop.trf.xlu0
    %v290 = vpop.trf.xlu0
    %v291 = vpop.trf.xlu0
    %v292 = vpop.trf.xlu0
    %v293 = vpop.trf.xlu0
    %v294 = vpop.trf.xlu0
    %v295 = vpop.trf.xlu0
    %v296 = vpop.trf.xlu0
    %v297 = vpop.trf.xlu0
    %v298 = vpack.c.bf16 %v283, %v282
    %v299 = vpack.c.bf16 %v285, %v284
    %v300 = vpack.c.bf16 %v287, %v286
    %v301 = vpack.c.bf16 %v289, %v288
    %302 = vst [vmem:[#allocation2 + $0x80] sm:$0xff] %v298
    %303 = vst [vmem:[#allocation2 + $0x88] sm:$0xff] %v299
    %304 = vst [vmem:[#allocation2 + $0x90] sm:$0xff] %v300
    %305 = vst [vmem:[#allocation2 + $0x98] sm:$0xff] %v301
    %s306 = scalar_lea.vmem %s0, 640
    %v307 = vld [vmem:[%s306] sm:$0xff]
    %v308 = vld [vmem:[%s306 + $0x8] sm:$0xff]
    %v309 = vld [vmem:[%s306 + $0x10] sm:$0xff]
    %v310 = vld [vmem:[%s306 + $0x18] sm:$0xff]
    %v311 = vld [vmem:[%s306 + $0x20] sm:$0xff]
    %v312 = vld [vmem:[%s306 + $0x28] sm:$0xff]
    %v313 = vld [vmem:[%s306 + $0x30] sm:$0xff]
    %v314 = vld [vmem:[%s306 + $0x38] sm:$0xff]
    %v315 = vld [vmem:[%s306 + $0x40] sm:$0xff]
    %v316 = vld [vmem:[%s306 + $0x48] sm:$0xff]
    %v317 = vld [vmem:[%s306 + $0x50] sm:$0xff]
    %v318 = vld [vmem:[%s306 + $0x58] sm:$0xff]
    %v319 = vld [vmem:[%s306 + $0x60] sm:$0xff]
    %v320 = vld [vmem:[%s306 + $0x68] sm:$0xff]
    %v321 = vld [vmem:[%s306 + $0x70] sm:$0xff]
    %v322 = vld [vmem:[%s306 + $0x78] sm:$0xff]
    %323 = vxpose.xlu0.b32.start [1/16] %v307, 128
    %324 = vxpose.xlu0.b32.cont [2/16] %v308, 128
    %325 = vxpose.xlu0.b32.cont [3/16] %v309, 128
    %326 = vxpose.xlu0.b32.cont [4/16] %v310, 128
    %327 = vxpose.xlu0.b32.cont [5/16] %v311, 128
    %328 = vxpose.xlu0.b32.cont [6/16] %v312, 128
    %329 = vxpose.xlu0.b32.cont [7/16] %v313, 128
    %330 = vxpose.xlu0.b32.cont [8/16] %v314, 128
    %331 = vxpose.xlu0.b32.cont [9/16] %v315, 128
    %332 = vxpose.xlu0.b32.cont [10/16] %v316, 128
    %333 = vxpose.xlu0.b32.cont [11/16] %v317, 128
    %334 = vxpose.xlu0.b32.cont [12/16] %v318, 128
    %335 = vxpose.xlu0.b32.cont [13/16] %v319, 128
    %336 = vxpose.xlu0.b32.cont [14/16] %v320, 128
    %337 = vxpose.xlu0.b32.cont [15/16] %v321, 128
    %338 = vxpose.xlu0.b32.end [16/16] %v322, 128
    %v339 = vpop.trf.xlu0
    %v340 = vpop.trf.xlu0
    %v341 = vpop.trf.xlu0
    %v342 = vpop.trf.xlu0
    %v343 = vpop.trf.xlu0
    %v344 = vpop.trf.xlu0
    %v345 = vpop.trf.xlu0
    %v346 = vpop.trf.xlu0
    %v347 = vpop.trf.xlu0
    %v348 = vpop.trf.xlu0
    %v349 = vpop.trf.xlu0
    %v350 = vpop.trf.xlu0
    %v351 = vpop.trf.xlu0
    %v352 = vpop.trf.xlu0
    %v353 = vpop.trf.xlu0
    %v354 = vpop.trf.xlu0
    %v355 = vpack.c.bf16 %v340, %v339
    %v356 = vpack.c.bf16 %v342, %v341
    %v357 = vpack.c.bf16 %v344, %v343
    %v358 = vpack.c.bf16 %v346, %v345
    %359 = vst [vmem:[#allocation2 + $0xa0] sm:$0xff] %v355
    %360 = vst [vmem:[#allocation2 + $0xa8] sm:$0xff] %v356
    %361 = vst [vmem:[#allocation2 + $0xb0] sm:$0xff] %v357
    %362 = vst [vmem:[#allocation2 + $0xb8] sm:$0xff] %v358
    %s363 = scalar_lea.vmem %s0, 768
    %v364 = vld [vmem:[%s363] sm:$0xff]
    %v365 = vld [vmem:[%s363 + $0x8] sm:$0xff]
    %v366 = vld [vmem:[%s363 + $0x10] sm:$0xff]
    %v367 = vld [vmem:[%s363 + $0x18] sm:$0xff]
    %v368 = vld [vmem:[%s363 + $0x20] sm:$0xff]
    %v369 = vld [vmem:[%s363 + $0x28] sm:$0xff]
    %v370 = vld [vmem:[%s363 + $0x30] sm:$0xff]
    %v371 = vld [vmem:[%s363 + $0x38] sm:$0xff]
    %v372 = vld [vmem:[%s363 + $0x40] sm:$0xff]
    %v373 = vld [vmem:[%s363 + $0x48] sm:$0xff]
    %v374 = vld [vmem:[%s363 + $0x50] sm:$0xff]
    %v375 = vld [vmem:[%s363 + $0x58] sm:$0xff]
    %v376 = vld [vmem:[%s363 + $0x60] sm:$0xff]
    %v377 = vld [vmem:[%s363 + $0x68] sm:$0xff]
    %v378 = vld [vmem:[%s363 + $0x70] sm:$0xff]
    %v379 = vld [vmem:[%s363 + $0x78] sm:$0xff]
    %380 = vxpose.xlu0.b32.start [1/16] %v364, 128
    %381 = vxpose.xlu0.b32.cont [2/16] %v365, 128
    %382 = vxpose.xlu0.b32.cont [3/16] %v366, 128
    %383 = vxpose.xlu0.b32.cont [4/16] %v367, 128
    %384 = vxpose.xlu0.b32.cont [5/16] %v368, 128
    %385 = vxpose.xlu0.b32.cont [6/16] %v369, 128
    %386 = vxpose.xlu0.b32.cont [7/16] %v370, 128
    %387 = vxpose.xlu0.b32.cont [8/16] %v371, 128
    %388 = vxpose.xlu0.b32.cont [9/16] %v372, 128
    %389 = vxpose.xlu0.b32.cont [10/16] %v373, 128
    %390 = vxpose.xlu0.b32.cont [11/16] %v374, 128
    %391 = vxpose.xlu0.b32.cont [12/16] %v375, 128
    %392 = vxpose.xlu0.b32.cont [13/16] %v376, 128
    %393 = vxpose.xlu0.b32.cont [14/16] %v377, 128
    %394 = vxpose.xlu0.b32.cont [15/16] %v378, 128
    %395 = vxpose.xlu0.b32.end [16/16] %v379, 128
    %v396 = vpop.trf.xlu0
    %v397 = vpop.trf.xlu0
    %v398 = vpop.trf.xlu0
    %v399 = vpop.trf.xlu0
    %v400 = vpop.trf.xlu0
    %v401 = vpop.trf.xlu0
    %v402 = vpop.trf.xlu0
    %v403 = vpop.trf.xlu0
    %v404 = vpop.trf.xlu0
    %v405 = vpop.trf.xlu0
    %v406 = vpop.trf.xlu0
    %v407 = vpop.trf.xlu0
    %v408 = vpop.trf.xlu0
    %v409 = vpop.trf.xlu0
    %v410 = vpop.trf.xlu0
    %v411 = vpop.trf.xlu0
    %v412 = vpack.c.bf16 %v397, %v396
    %v413 = vpack.c.bf16 %v399, %v398
    %v414 = vpack.c.bf16 %v401, %v400
    %v415 = vpack.c.bf16 %v403, %v402
    %416 = vst [vmem:[#allocation2 + $0xc0] sm:$0xff] %v412
    %417 = vst [vmem:[#allocation2 + $0xc8] sm:$0xff] %v413
    %418 = vst [vmem:[#allocation2 + $0xd0] sm:$0xff] %v414
    %419 = vst [vmem:[#allocation2 + $0xd8] sm:$0xff] %v415
    %s420 = scalar_lea.vmem %s0, 896
    %v421 = vld [vmem:[%s420] sm:$0xff]
    %v422 = vld [vmem:[%s420 + $0x8] sm:$0xff]
    %v423 = vld [vmem:[%s420 + $0x10] sm:$0xff]
    %v424 = vld [vmem:[%s420 + $0x18] sm:$0xff]
    %v425 = vld [vmem:[%s420 + $0x20] sm:$0xff]
    %v426 = vld [vmem:[%s420 + $0x28] sm:$0xff]
    %v427 = vld [vmem:[%s420 + $0x30] sm:$0xff]
    %v428 = vld [vmem:[%s420 + $0x38] sm:$0xff]
    %v429 = vld [vmem:[%s420 + $0x40] sm:$0xff]
    %v430 = vld [vmem:[%s420 + $0x48] sm:$0xff]
    %v431 = vld [vmem:[%s420 + $0x50] sm:$0xff]
    %v432 = vld [vmem:[%s420 + $0x58] sm:$0xff]
    %v433 = vld [vmem:[%s420 + $0x60] sm:$0xff]
    %v434 = vld [vmem:[%s420 + $0x68] sm:$0xff]
    %v435 = vld [vmem:[%s420 + $0x70] sm:$0xff]
    %v436 = vld [vmem:[%s420 + $0x78] sm:$0xff]
    %437 = vxpose.xlu0.b32.start [1/16] %v421, 128
    %438 = vxpose.xlu0.b32.cont [2/16] %v422, 128
    %439 = vxpose.xlu0.b32.cont [3/16] %v423, 128
    %440 = vxpose.xlu0.b32.cont [4/16] %v424, 128
    %441 = vxpose.xlu0.b32.cont [5/16] %v425, 128
    %442 = vxpose.xlu0.b32.cont [6/16] %v426, 128
    %443 = vxpose.xlu0.b32.cont [7/16] %v427, 128
    %444 = vxpose.xlu0.b32.cont [8/16] %v428, 128
    %445 = vxpose.xlu0.b32.cont [9/16] %v429, 128
    %446 = vxpose.xlu0.b32.cont [10/16] %v430, 128
    %447 = vxpose.xlu0.b32.cont [11/16] %v431, 128
    %448 = vxpose.xlu0.b32.cont [12/16] %v432, 128
    %449 = vxpose.xlu0.b32.cont [13/16] %v433, 128
    %450 = vxpose.xlu0.b32.cont [14/16] %v434, 128
    %451 = vxpose.xlu0.b32.cont [15/16] %v435, 128
    %452 = vxpose.xlu0.b32.end [16/16] %v436, 128
    %v453 = vpop.trf.xlu0
    %v454 = vpop.trf.xlu0
    %v455 = vpop.trf.xlu0
    %v456 = vpop.trf.xlu0
    %v457 = vpop.trf.xlu0
    %v458 = vpop.trf.xlu0
    %v459 = vpop.trf.xlu0
    %v460 = vpop.trf.xlu0
    %v461 = vpop.trf.xlu0
    %v462 = vpop.trf.xlu0
    %v463 = vpop.trf.xlu0
    %v464 = vpop.trf.xlu0
    %v465 = vpop.trf.xlu0
    %v466 = vpop.trf.xlu0
    %v467 = vpop.trf.xlu0
    %v468 = vpop.trf.xlu0
    %v469 = vpack.c.bf16 %v454, %v453
    %v470 = vpack.c.bf16 %v456, %v455
    %v471 = vpack.c.bf16 %v458, %v457
    %v472 = vpack.c.bf16 %v460, %v459
    %473 = vst [vmem:[#allocation2 + $0xe0] sm:$0xff] %v469
    %474 = vst [vmem:[#allocation2 + $0xe8] sm:$0xff] %v470
    %475 = vst [vmem:[#allocation2 + $0xf0] sm:$0xff] %v471
    %476 = vst [vmem:[#allocation2 + $0xf8] sm:$0xff] %v472
    %v477 = vld [vmem:[#allocation2] sm:$0xff]
    %v478 = vld [vmem:[#allocation2 + $0x8] sm:$0xff]
    %v479 = vld [vmem:[#allocation2 + $0x10] sm:$0xff]
    %v480 = vld [vmem:[#allocation2 + $0x18] sm:$0xff]
    %v481 = vld [vmem:[#allocation2 + $0x20] sm:$0xff]
    %v482 = vld [vmem:[#allocation2 + $0x28] sm:$0xff]
    %v483 = vld [vmem:[#allocation2 + $0x30] sm:$0xff]
    %v484 = vld [vmem:[#allocation2 + $0x38] sm:$0xff]
    %v485 = vld [vmem:[#allocation2 + $0x40] sm:$0xff]
    %v486 = vld [vmem:[#allocation2 + $0x48] sm:$0xff]
    %v487 = vld [vmem:[#allocation2 + $0x50] sm:$0xff]
    %v488 = vld [vmem:[#allocation2 + $0x58] sm:$0xff]
    %v489 = vld [vmem:[#allocation2 + $0x60] sm:$0xff]
    %v490 = vld [vmem:[#allocation2 + $0x68] sm:$0xff]
    %v491 = vld [vmem:[#allocation2 + $0x70] sm:$0xff]
    %v492 = vld [vmem:[#allocation2 + $0x78] sm:$0xff]
    %v493 = vld [vmem:[#allocation2 + $0x80] sm:$0xff]
    %v494 = vld [vmem:[#allocation2 + $0x88] sm:$0xff]
    %v495 = vld [vmem:[#allocation2 + $0x90] sm:$0xff]
    %v496 = vld [vmem:[#allocation2 + $0x98] sm:$0xff]
    %v497 = vld [vmem:[#allocation2 + $0xa0] sm:$0xff]
    %v498 = vld [vmem:[#allocation2 + $0xa8] sm:$0xff]
    %v499 = vld [vmem:[#allocation2 + $0xb0] sm:$0xff]
    %v500 = vld [vmem:[#allocation2 + $0xb8] sm:$0xff]
    %v501 = vld [vmem:[#allocation2 + $0xc0] sm:$0xff]
    %v502 = vld [vmem:[#allocation2 + $0xc8] sm:$0xff]
    %v503 = vld [vmem:[#allocation2 + $0xd0] sm:$0xff]
    %v504 = vld [vmem:[#allocation2 + $0xd8] sm:$0xff]
    %v505 = vld [vmem:[#allocation2 + $0xe0] sm:$0xff]
    %v506 = vld [vmem:[#allocation2 + $0xe8] sm:$0xff]
    %v507 = vld [vmem:[#allocation2 + $0xf0] sm:$0xff]
    %v508 = vld [vmem:[#allocation2 + $0xf8] sm:$0xff]
    %v509 = vld [vmem:[%s1] sm:$0xff]
    %v510 = vld [vmem:[%s1 + $0x28] sm:$0xff]
    %v511 = vld [vmem:[%s1 + $0x50] sm:$0xff]
    %v512 = vld [vmem:[%s1 + $0x78] sm:$0xff]
    %v513 = vld [vmem:[%s1 + $0xa0] sm:$0xff]
    %v514 = vld [vmem:[%s1 + $0xc8] sm:$0xff]
    %v515 = vld [vmem:[%s1 + $0xf0] sm:$0xff]
    %v516 = vld [vmem:[%s1 + $0x118] sm:$0xff]
    %v517 = vld [vmem:[%s1 + $0x140] sm:$0xff]
    %v518 = vld [vmem:[%s1 + $0x168] sm:$0xff]
    %v519 = vld [vmem:[%s1 + $0x190] sm:$0xff]
    %v520 = vld [vmem:[%s1 + $0x1b8] sm:$0xff]
    %v521 = vld [vmem:[%s1 + $0x1e0] sm:$0xff]
    %v522 = vld [vmem:[%s1 + $0x208] sm:$0xff]
    %v523 = vld [vmem:[%s1 + $0x230] sm:$0xff]
    %v524 = vld [vmem:[%s1 + $0x258] sm:$0xff]
    %v525 = vld [vmem:[%s2] sm:$0x3]
    %v527 = vlaneseq
    %v528 = vshrl.u32 %v527, 7
    %v529 = vsub.s32 0, %v528
    %v530 = vrot.slane %v525, %v529
    %v531 = vlaneseq
    %v532 = vshrl.u32 %v531, 7
    %v533 = vsub.s32 1, %v532
    %v534 = vrot.slane %v525, %v533
    %v553 = vunpack.c.l.b16 %v509
    %v554 = vunpack.c.h.b16 %v509
    %v555 = vunpack.c.l.b16 %v510
    %v556 = vunpack.c.h.b16 %v510
    %v557 = vunpack.c.l.b16 %v511
    %v558 = vunpack.c.h.b16 %v511
    %v559 = vunpack.c.l.b16 %v512
    %v560 = vunpack.c.h.b16 %v512
    %v561 = vunpack.c.l.b16 %v513
    %v562 = vunpack.c.h.b16 %v513
    %v563 = vunpack.c.l.b16 %v514
    %v564 = vunpack.c.h.b16 %v514
    %v565 = vunpack.c.l.b16 %v515
    %v566 = vunpack.c.h.b16 %v515
    %v567 = vunpack.c.l.b16 %v516
    %v568 = vunpack.c.h.b16 %v516
    %v569 = vunpack.c.l.b16 %v517
    %v570 = vunpack.c.h.b16 %v517
    %v571 = vunpack.c.l.b16 %v518
    %v572 = vunpack.c.h.b16 %v518
    %v573 = vunpack.c.l.b16 %v519
    %v574 = vunpack.c.h.b16 %v519
    %v575 = vunpack.c.l.b16 %v520
    %v576 = vunpack.c.h.b16 %v520
    %v577 = vunpack.c.l.b16 %v521
    %v578 = vunpack.c.h.b16 %v521
    %v579 = vunpack.c.l.b16 %v522
    %v580 = vunpack.c.h.b16 %v522
    %v581 = vunpack.c.l.b16 %v523
    %v582 = vunpack.c.h.b16 %v523
    %v583 = vunpack.c.l.b16 %v524
    %v584 = vunpack.c.h.b16 %v524
    %v585 = vpack.c.b16 %v555, %v553
    %v586 = vpack.c.b16 %v556, %v554
    %v587 = vpack.c.b16 %v559, %v557
    %v588 = vpack.c.b16 %v560, %v558
    %v589 = vpack.c.b16 %v563, %v561
    %v590 = vpack.c.b16 %v564, %v562
    %v591 = vpack.c.b16 %v567, %v565
    %v592 = vpack.c.b16 %v568, %v566
    %v593 = vpack.c.b16 %v571, %v569
    %v594 = vpack.c.b16 %v572, %v570
    %v595 = vpack.c.b16 %v575, %v573
    %v596 = vpack.c.b16 %v576, %v574
    %v597 = vpack.c.b16 %v579, %v577
    %v598 = vpack.c.b16 %v580, %v578
    %v599 = vpack.c.b16 %v583, %v581
    %v600 = vpack.c.b16 %v584, %v582
    %617 = vmatprep.subr.bf16.mxu0 %v586
    %618 = vmatpush1.bf16.msra.mxu0 %v585
    %619 = vmatprep.subr.bf16.mxu0 %v588
    %620 = vmatpush1.bf16.msra.mxu0 %v587
    %621 = vmatprep.subr.bf16.mxu0 %v590
    %622 = vmatpush1.bf16.msra.mxu0 %v589
    %623 = vmatprep.subr.bf16.mxu0 %v592
    %624 = vmatpush1.bf16.msra.mxu0 %v591
    %625 = vmatprep.subr.bf16.mxu0 %v594
    %626 = vmatpush1.bf16.msra.mxu0 %v593
    %627 = vmatprep.subr.bf16.mxu0 %v596
    %628 = vmatpush1.bf16.msra.mxu0 %v595
    %629 = vmatprep.subr.bf16.mxu0 %v598
    %630 = vmatpush1.bf16.msra.mxu0 %v597
    %631 = vmatprep.subr.bf16.mxu0 %v600
    %632 = vmatpush1.bf16.msra.mxu0 %v599
    %633 = vmatprep.subr.bf16.mxu0 0
    %634 = vmatpush1.bf16.msra.mxu0 0
    %635 = vmatprep.subr.bf16.mxu0 0
    %636 = vmatpush1.bf16.msra.mxu0 0
    %637 = vmatprep.subr.bf16.mxu0 0
    %638 = vmatpush1.bf16.msra.mxu0 0
    %639 = vmatprep.subr.bf16.mxu0 0
    %640 = vmatpush1.bf16.msra.mxu0 0
    %641 = vmatprep.subr.bf16.mxu0 0
    %642 = vmatpush1.bf16.msra.mxu0 0
    %643 = vmatprep.subr.bf16.mxu0 0
    %644 = vmatpush1.bf16.msra.mxu0 0
    %645 = vmatprep.subr.bf16.mxu0 0
    %646 = vmatpush1.bf16.msra.mxu0 0
    %647 = vmatprep.subr.bf16.mxu0 0
    %648 = vmatpush1.bf16.msra.mxu0 0
    %649 = vmatprep.mubr.bf16.mxu0 0
    %650 = vmatmul.mubr.bf16.gmra.mrb[0].mxu0 %v477
    %v651 = vpop.f32.mrb[0].mxu0
    %v652 = vadd.f32 %v530, %v651
    %v653 = vpop.f32.mrb[0].mxu0
    %v654 = vadd.f32 %v534, %v653
    %v655 = vpop.f32.mrb[0].mxu0
    %v656 = vadd.f32 %v530, %v655
    %v657 = vpop.f32.mrb[0].mxu0
    %v658 = vadd.f32 %v534, %v657
    %659 = vmatprep.mubr.bf16.mxu0 0
    %660 = vmatmul.mubr.bf16.gmra.mrb[0].mxu0 %v478
    %v661 = vpop.f32.mrb[0].mxu0
    %v662 = vadd.f32 %v530, %v661
    %v663 = vpop.f32.mrb[0].mxu0
    %v664 = vadd.f32 %v534, %v663
    %v665 = vpop.f32.mrb[0].mxu0
    %v666 = vadd.f32 %v530, %v665
    %v667 = vpop.f32.mrb[0].mxu0
    %v668 = vadd.f32 %v534, %v667
    %669 = vmatprep.mubr.bf16.mxu0 0
    %670 = vmatmul.mubr.bf16.gmra.mrb[0].mxu0 %v479
    %v671 = vpop.f32.mrb[0].mxu0
    %v672 = vadd.f32 %v530, %v671
    %v673 = vpop.f32.mrb[0].mxu0
    %v674 = vadd.f32 %v534, %v673
    %v675 = vpop.f32.mrb[0].mxu0
    %v676 = vadd.f32 %v530, %v675
    %v677 = vpop.f32.mrb[0].mxu0
    %v678 = vadd.f32 %v534, %v677
    %679 = vmatprep.mubr.bf16.mxu0 0
    %680 = vmatmul.mubr.bf16.gmra.mrb[0].mxu0 %v480
    %v681 = vpop.f32.mrb[0].mxu0
    %v682 = vadd.f32 %v530, %v681
    %v683 = vpop.f32.mrb[0].mxu0
    %v684 = vadd.f32 %v534, %v683
    %v685 = vpop.f32.mrb[0].mxu0
    %v686 = vadd.f32 %v530, %v685
    %v687 = vpop.f32.mrb[0].mxu0
    %v688 = vadd.f32 %v534, %v687
    %689 = vmatprep.mubr.bf16.mxu0 0
    %690 = vmatmul.mubr.bf16.gmra.mrb[0].mxu0 %v481
    %v691 = vpop.f32.mrb[0].mxu0
    %v692 = vadd.f32 %v530, %v691
    %v693 = vpop.f32.mrb[0].mxu0
    %v694 = vadd.f32 %v534, %v693
    %v695 = vpop.f32.mrb[0].mxu0
    %v696 = vadd.f32 %v530, %v695
    %v697 = vpop.f32.mrb[0].mxu0
    %v698 = vadd.f32 %v534, %v697
    %699 = vmatprep.mubr.bf16.mxu0 0
    %700 = vmatmul.mubr.bf16.gmra.mrb[0].mxu0 %v482
    %v701 = vpop.f32.mrb[0].mxu0
    %v702 = vadd.f32 %v530, %v701
    %v703 = vpop.f32.mrb[0].mxu0
    %v704 = vadd.f32 %v534, %v703
    %v705 = vpop.f32.mrb[0].mxu0
    %v706 = vadd.f32 %v530, %v705
    %v707 = vpop.f32.mrb[0].mxu0
    %v708 = vadd.f32 %v534, %v707
    %709 = vmatprep.mubr.bf16.mxu0 0
    %710 = vmatmul.mubr.bf16.gmra.mrb[0].mxu0 %v483
    %v711 = vpop.f32.mrb[0].mxu0
    %v712 = vadd.f32 %v530, %v711
    %v713 = vpop.f32.mrb[0].mxu0
    %v714 = vadd.f32 %v534, %v713
    %v715 = vpop.f32.mrb[0].mxu0
    %v716 = vadd.f32 %v530, %v715
    %v717 = vpop.f32.mrb[0].mxu0
    %v718 = vadd.f32 %v534, %v717
    %719 = vmatprep.mubr.bf16.mxu0 0
    %720 = vmatmul.mubr.bf16.gmra.mrb[0].mxu0 %v484
    %v721 = vpop.f32.mrb[0].mxu0
    %v722 = vadd.f32 %v530, %v721
    %v723 = vpop.f32.mrb[0].mxu0
    %v724 = vadd.f32 %v534, %v723
    %v725 = vpop.f32.mrb[0].mxu0
    %v726 = vadd.f32 %v530, %v725
    %v727 = vpop.f32.mrb[0].mxu0
    %v728 = vadd.f32 %v534, %v727
    %729 = vmatprep.mubr.bf16.mxu0 0
    %730 = vmatmul.mubr.bf16.gmra.mrb[0].mxu0 %v485
    %v731 = vpop.f32.mrb[0].mxu0
    %v732 = vadd.f32 %v530, %v731
    %v733 = vpop.f32.mrb[0].mxu0
    %v734 = vadd.f32 %v534, %v733
    %v735 = vpop.f32.mrb[0].mxu0
    %v736 = vadd.f32 %v530, %v735
    %v737 = vpop.f32.mrb[0].mxu0
    %v738 = vadd.f32 %v534, %v737
    %739 = vmatprep.mubr.bf16.mxu0 0
    %740 = vmatmul.mubr.bf16.gmra.mrb[0].mxu0 %v486
    %v741 = vpop.f32.mrb[0].mxu0
    %v742 = vadd.f32 %v530, %v741
    %v743 = vpop.f32.mrb[0].mxu0
    %v744 = vadd.f32 %v534, %v743
    %v745 = vpop.f32.mrb[0].mxu0
    %v746 = vadd.f32 %v530, %v745
    %v747 = vpop.f32.mrb[0].mxu0
    %v748 = vadd.f32 %v534, %v747
    %749 = vmatprep.mubr.bf16.mxu0 0
    %750 = vmatmul.mubr.bf16.gmra.mrb[0].mxu0 %v487
    %v751 = vpop.f32.mrb[0].mxu0
    %v752 = vadd.f32 %v530, %v751
    %v753 = vpop.f32.mrb[0].mxu0
    %v754 = vadd.f32 %v534, %v753
    %v755 = vpop.f32.mrb[0].mxu0
    %v756 = vadd.f32 %v530, %v755
    %v757 = vpop.f32.mrb[0].mxu0
    %v758 = vadd.f32 %v534, %v757
    %759 = vmatprep.mubr.bf16.mxu0 0
    %760 = vmatmul.mubr.bf16.gmra.mrb[0].mxu0 %v488
    %v761 = vpop.f32.mrb[0].mxu0
    %v762 = vadd.f32 %v530, %v761
    %v763 = vpop.f32.mrb[0].mxu0
    %v764 = vadd.f32 %v534, %v763
    %v765 = vpop.f32.mrb[0].mxu0
    %v766 = vadd.f32 %v530, %v765
    %v767 = vpop.f32.mrb[0].mxu0
    %v768 = vadd.f32 %v534, %v767
    %769 = vmatprep.mubr.bf16.mxu0 0
    %770 = vmatmul.mubr.bf16.gmra.mrb[0].mxu0 %v489
    %v771 = vpop.f32.mrb[0].mxu0
    %v772 = vadd.f32 %v530, %v771
    %v773 = vpop.f32.mrb[0].mxu0
    %v774 = vadd.f32 %v534, %v773
    %v775 = vpop.f32.mrb[0].mxu0
    %v776 = vadd.f32 %v530, %v775
    %v777 = vpop.f32.mrb[0].mxu0
    %v778 = vadd.f32 %v534, %v777
    %779 = vmatprep.mubr.bf16.mxu0 0
    %780 = vmatmul.mubr.bf16.gmra.mrb[0].mxu0 %v490
    %v781 = vpop.f32.mrb[0].mxu0
    %v782 = vadd.f32 %v530, %v781
    %v783 = vpop.f32.mrb[0].mxu0
    %v784 = vadd.f32 %v534, %v783
    %v785 = vpop.f32.mrb[0].mxu0
    %v786 = vadd.f32 %v530, %v785
    %v787 = vpop.f32.mrb[0].mxu0
    %v788 = vadd.f32 %v534, %v787
    %789 = vmatprep.mubr.bf16.mxu0 0
    %790 = vmatmul.mubr.bf16.gmra.mrb[0].mxu0 %v491
    %v791 = vpop.f32.mrb[0].mxu0
    %v792 = vadd.f32 %v530, %v791
    %v793 = vpop.f32.mrb[0].mxu0
    %v794 = vadd.f32 %v534, %v793
    %v795 = vpop.f32.mrb[0].mxu0
    %v796 = vadd.f32 %v530, %v795
    %v797 = vpop.f32.mrb[0].mxu0
    %v798 = vadd.f32 %v534, %v797
    %799 = vmatprep.mubr.bf16.mxu0 0
    %800 = vmatmul.mubr.bf16.gmra.mrb[0].mxu0 %v492
    %v801 = vpop.f32.mrb[0].mxu0
    %v802 = vadd.f32 %v530, %v801
    %v803 = vpop.f32.mrb[0].mxu0
    %v804 = vadd.f32 %v534, %v803
    %v805 = vpop.f32.mrb[0].mxu0
    %v806 = vadd.f32 %v530, %v805
    %v807 = vpop.f32.mrb[0].mxu0
    %v808 = vadd.f32 %v534, %v807
    %809 = vmatprep.mubr.bf16.mxu0 0
    %810 = vmatmul.mubr.bf16.gmra.mrb[0].mxu0 %v493
    %v811 = vpop.f32.mrb[0].mxu0
    %v812 = vadd.f32 %v530, %v811
    %v813 = vpop.f32.mrb[0].mxu0
    %v814 = vadd.f32 %v534, %v813
    %v815 = vpop.f32.mrb[0].mxu0
    %v816 = vadd.f32 %v530, %v815
    %v817 = vpop.f32.mrb[0].mxu0
    %v818 = vadd.f32 %v534, %v817
    %819 = vmatprep.mubr.bf16.mxu0 0
    %820 = vmatmul.mubr.bf16.gmra.mrb[0].mxu0 %v494
    %v821 = vpop.f32.mrb[0].mxu0
    %v822 = vadd.f32 %v530, %v821
    %v823 = vpop.f32.mrb[0].mxu0
    %v824 = vadd.f32 %v534, %v823
    %v825 = vpop.f32.mrb[0].mxu0
    %v826 = vadd.f32 %v530, %v825
    %v827 = vpop.f32.mrb[0].mxu0
    %v828 = vadd.f32 %v534, %v827
    %829 = vmatprep.mubr.bf16.mxu0 0
    %830 = vmatmul.mubr.bf16.gmra.mrb[0].mxu0 %v495
    %v831 = vpop.f32.mrb[0].mxu0
    %v832 = vadd.f32 %v530, %v831
    %v833 = vpop.f32.mrb[0].mxu0
    %v834 = vadd.f32 %v534, %v833
    %v835 = vpop.f32.mrb[0].mxu0
    %v836 = vadd.f32 %v530, %v835
    %v837 = vpop.f32.mrb[0].mxu0
    %v838 = vadd.f32 %v534, %v837
    %839 = vmatprep.mubr.bf16.mxu0 0
    %840 = vmatmul.mubr.bf16.gmra.mrb[0].mxu0 %v496
    %v841 = vpop.f32.mrb[0].mxu0
    %v842 = vadd.f32 %v530, %v841
    %v843 = vpop.f32.mrb[0].mxu0
    %v844 = vadd.f32 %v534, %v843
    %v845 = vpop.f32.mrb[0].mxu0
    %v846 = vadd.f32 %v530, %v845
    %v847 = vpop.f32.mrb[0].mxu0
    %v848 = vadd.f32 %v534, %v847
    %849 = vmatprep.mubr.bf16.mxu0 0
    %850 = vmatmul.mubr.bf16.gmra.mrb[0].mxu0 %v497
    %v851 = vpop.f32.mrb[0].mxu0
    %v852 = vadd.f32 %v530, %v851
    %v853 = vpop.f32.mrb[0].mxu0
    %v854 = vadd.f32 %v534, %v853
    %v855 = vpop.f32.mrb[0].mxu0
    %v856 = vadd.f32 %v530, %v855
    %v857 = vpop.f32.mrb[0].mxu0
    %v858 = vadd.f32 %v534, %v857
    %859 = vmatprep.mubr.bf16.mxu0 0
    %860 = vmatmul.mubr.bf16.gmra.mrb[0].mxu0 %v498
    %v861 = vpop.f32.mrb[0].mxu0
    %v862 = vadd.f32 %v530, %v861
    %v863 = vpop.f32.mrb[0].mxu0
    %v864 = vadd.f32 %v534, %v863
    %v865 = vpop.f32.mrb[0].mxu0
    %v866 = vadd.f32 %v530, %v865
    %v867 = vpop.f32.mrb[0].mxu0
    %v868 = vadd.f32 %v534, %v867
    %869 = vmatprep.mubr.bf16.mxu0 0
    %870 = vmatmul.mubr.bf16.gmra.mrb[0].mxu0 %v499
    %v871 = vpop.f32.mrb[0].mxu0
    %v872 = vadd.f32 %v530, %v871
    %v873 = vpop.f32.mrb[0].mxu0
    %v874 = vadd.f32 %v534, %v873
    %v875 = vpop.f32.mrb[0].mxu0
    %v876 = vadd.f32 %v530, %v875
    %v877 = vpop.f32.mrb[0].mxu0
    %v878 = vadd.f32 %v534, %v877
    %879 = vmatprep.mubr.bf16.mxu0 0
    %880 = vmatmul.mubr.bf16.gmra.mrb[0].mxu0 %v500
    %v881 = vpop.f32.mrb[0].mxu0
    %v882 = vadd.f32 %v530, %v881
    %v883 = vpop.f32.mrb[0].mxu0
    %v884 = vadd.f32 %v534, %v883
    %v885 = vpop.f32.mrb[0].mxu0
    %v886 = vadd.f32 %v530, %v885
    %v887 = vpop.f32.mrb[0].mxu0
    %v888 = vadd.f32 %v534, %v887
    %889 = vmatprep.mubr.bf16.mxu0 0
    %890 = vmatmul.mubr.bf16.gmra.mrb[0].mxu0 %v501
    %v891 = vpop.f32.mrb[0].mxu0
    %v892 = vadd.f32 %v530, %v891
    %v893 = vpop.f32.mrb[0].mxu0
    %v894 = vadd.f32 %v534, %v893
    %v895 = vpop.f32.mrb[0].mxu0
    %v896 = vadd.f32 %v530, %v895
    %v897 = vpop.f32.mrb[0].mxu0
    %v898 = vadd.f32 %v534, %v897
    %899 = vmatprep.mubr.bf16.mxu0 0
    %900 = vmatmul.mubr.bf16.gmra.mrb[0].mxu0 %v502
    %v901 = vpop.f32.mrb[0].mxu0
    %v902 = vadd.f32 %v530, %v901
    %v903 = vpop.f32.mrb[0].mxu0
    %v904 = vadd.f32 %v534, %v903
    %v905 = vpop.f32.mrb[0].mxu0
    %v906 = vadd.f32 %v530, %v905
    %v907 = vpop.f32.mrb[0].mxu0
    %v908 = vadd.f32 %v534, %v907
    %909 = vmatprep.mubr.bf16.mxu0 0
    %910 = vmatmul.mubr.bf16.gmra.mrb[0].mxu0 %v503
    %v911 = vpop.f32.mrb[0].mxu0
    %v912 = vadd.f32 %v530, %v911
    %v913 = vpop.f32.mrb[0].mxu0
    %v914 = vadd.f32 %v534, %v913
    %v915 = vpop.f32.mrb[0].mxu0
    %v916 = vadd.f32 %v530, %v915
    %v917 = vpop.f32.mrb[0].mxu0
    %v918 = vadd.f32 %v534, %v917
    %919 = vmatprep.mubr.bf16.mxu0 0
    %920 = vmatmul.mubr.bf16.gmra.mrb[0].mxu0 %v504
    %v921 = vpop.f32.mrb[0].mxu0
    %v922 = vadd.f32 %v530, %v921
    %v923 = vpop.f32.mrb[0].mxu0
    %v924 = vadd.f32 %v534, %v923
    %v925 = vpop.f32.mrb[0].mxu0
    %v926 = vadd.f32 %v530, %v925
    %v927 = vpop.f32.mrb[0].mxu0
    %v928 = vadd.f32 %v534, %v927
    %929 = vmatprep.mubr.bf16.mxu0 0
    %930 = vmatmul.mubr.bf16.gmra.mrb[0].mxu0 %v505
    %v931 = vpop.f32.mrb[0].mxu0
    %v932 = vadd.f32 %v530, %v931
    %v933 = vpop.f32.mrb[0].mxu0
    %v934 = vadd.f32 %v534, %v933
    %v935 = vpop.f32.mrb[0].mxu0
    %v936 = vadd.f32 %v530, %v935
    %v937 = vpop.f32.mrb[0].mxu0
    %v938 = vadd.f32 %v534, %v937
    %939 = vmatprep.mubr.bf16.mxu0 0
    %940 = vmatmul.mubr.bf16.gmra.mrb[0].mxu0 %v506
    %v941 = vpop.f32.mrb[0].mxu0
    %v942 = vadd.f32 %v530, %v941
    %v943 = vpop.f32.mrb[0].mxu0
    %v944 = vadd.f32 %v534, %v943
    %v945 = vpop.f32.mrb[0].mxu0
    %v946 = vadd.f32 %v530, %v945
    %v947 = vpop.f32.mrb[0].mxu0
    %v948 = vadd.f32 %v534, %v947
    %949 = vmatprep.mubr.bf16.mxu0 0
    %950 = vmatmul.mubr.bf16.gmra.mrb[0].mxu0 %v507
    %v951 = vpop.f32.mrb[0].mxu0
    %v952 = vadd.f32 %v530, %v951
    %v953 = vpop.f32.mrb[0].mxu0
    %v954 = vadd.f32 %v534, %v953
    %v955 = vpop.f32.mrb[0].mxu0
    %v956 = vadd.f32 %v530, %v955
    %v957 = vpop.f32.mrb[0].mxu0
    %v958 = vadd.f32 %v534, %v957
    %959 = vmatprep.mubr.bf16.mxu0 0
    %960 = vmatmul.mubr.bf16.gmra.mrb[0].mxu0 %v508
    %v961 = vpop.f32.mrb[0].mxu0
    %v962 = vadd.f32 %v530, %v961
    %v963 = vpop.f32.mrb[0].mxu0
    %v964 = vadd.f32 %v534, %v963
    %v965 = vpop.f32.mrb[0].mxu0
    %v966 = vadd.f32 %v530, %v965
    %v967 = vpop.f32.mrb[0].mxu0
    %v968 = vadd.f32 %v534, %v967
    %969 = vdwg.mxu0
    %v970 = vmax.f32 %v652, 0.0
    %v971 = vmax.f32 %v654, 0.0
    %v972 = vmax.f32 %v656, 0.0
    %v973 = vmax.f32 %v658, 0.0
    %v974 = vmax.f32 %v662, 0.0
    %v975 = vmax.f32 %v664, 0.0
    %v976 = vmax.f32 %v666, 0.0
    %v977 = vmax.f32 %v668, 0.0
    %v978 = vmax.f32 %v672, 0.0
    %v979 = vmax.f32 %v674, 0.0
    %v980 = vmax.f32 %v676, 0.0
    %v981 = vmax.f32 %v678, 0.0
    %v982 = vmax.f32 %v682, 0.0
    %v983 = vmax.f32 %v684, 0.0
    %v984 = vmax.f32 %v686, 0.0
    %v985 = vmax.f32 %v688, 0.0
    %v986 = vmax.f32 %v692, 0.0
    %v987 = vmax.f32 %v694, 0.0
    %v988 = vmax.f32 %v696, 0.0
    %v989 = vmax.f32 %v698, 0.0
    %v990 = vmax.f32 %v702, 0.0
    %v991 = vmax.f32 %v704, 0.0
    %v992 = vmax.f32 %v706, 0.0
    %v993 = vmax.f32 %v708, 0.0
    %v994 = vmax.f32 %v712, 0.0
    %v995 = vmax.f32 %v714, 0.0
    %v996 = vmax.f32 %v716, 0.0
    %v997 = vmax.f32 %v718, 0.0
    %v998 = vmax.f32 %v722, 0.0
    %v999 = vmax.f32 %v724, 0.0
    %v1000 = vmax.f32 %v726, 0.0
    %v1001 = vmax.f32 %v728, 0.0
    %v1002 = vmax.f32 %v732, 0.0
    %v1003 = vmax.f32 %v734, 0.0
    %v1004 = vmax.f32 %v736, 0.0
    %v1005 = vmax.f32 %v738, 0.0
    %v1006 = vmax.f32 %v742, 0.0
    %v1007 = vmax.f32 %v744, 0.0
    %v1008 = vmax.f32 %v746, 0.0
    %v1009 = vmax.f32 %v748, 0.0
    %v1010 = vmax.f32 %v752, 0.0
    %v1011 = vmax.f32 %v754, 0.0
    %v1012 = vmax.f32 %v756, 0.0
    %v1013 = vmax.f32 %v758, 0.0
    %v1014 = vmax.f32 %v762, 0.0
    %v1015 = vmax.f32 %v764, 0.0
    %v1016 = vmax.f32 %v766, 0.0
    %v1017 = vmax.f32 %v768, 0.0
    %v1018 = vmax.f32 %v772, 0.0
    %v1019 = vmax.f32 %v774, 0.0
    %v1020 = vmax.f32 %v776, 0.0
    %v1021 = vmax.f32 %v778, 0.0
    %v1022 = vmax.f32 %v782, 0.0
    %v1023 = vmax.f32 %v784, 0.0
    %v1024 = vmax.f32 %v786, 0.0
    %v1025 = vmax.f32 %v788, 0.0
    %v1026 = vmax.f32 %v792, 0.0
    %v1027 = vmax.f32 %v794, 0.0
    %v1028 = vmax.f32 %v796, 0.0
    %v1029 = vmax.f32 %v798, 0.0
    %v1030 = vmax.f32 %v802, 0.0
    %v1031 = vmax.f32 %v804, 0.0
    %v1032 = vmax.f32 %v806, 0.0
    %v1033 = vmax.f32 %v808, 0.0
    %v1034 = vmax.f32 %v812, 0.0
    %v1035 = vmax.f32 %v814, 0.0
    %v1036 = vmax.f32 %v816, 0.0
    %v1037 = vmax.f32 %v818, 0.0
    %v1038 = vmax.f32 %v822, 0.0
    %v1039 = vmax.f32 %v824, 0.0
    %v1040 = vmax.f32 %v826, 0.0
    %v1041 = vmax.f32 %v828, 0.0
    %v1042 = vmax.f32 %v832, 0.0
    %v1043 = vmax.f32 %v834, 0.0
    %v1044 = vmax.f32 %v836, 0.0
    %v1045 = vmax.f32 %v838, 0.0
    %v1046 = vmax.f32 %v842, 0.0
    %v1047 = vmax.f32 %v844, 0.0
    %v1048 = vmax.f32 %v846, 0.0
    %v1049 = vmax.f32 %v848, 0.0
    %v1050 = vmax.f32 %v852, 0.0
    %v1051 = vmax.f32 %v854, 0.0
    %v1052 = vmax.f32 %v856, 0.0
    %v1053 = vmax.f32 %v858, 0.0
    %v1054 = vmax.f32 %v862, 0.0
    %v1055 = vmax.f32 %v864, 0.0
    %v1056 = vmax.f32 %v866, 0.0
    %v1057 = vmax.f32 %v868, 0.0
    %v1058 = vmax.f32 %v872, 0.0
    %v1059 = vmax.f32 %v874, 0.0
    %v1060 = vmax.f32 %v876, 0.0
    %v1061 = vmax.f32 %v878, 0.0
    %v1062 = vmax.f32 %v882, 0.0
    %v1063 = vmax.f32 %v884, 0.0
    %v1064 = vmax.f32 %v886, 0.0
    %v1065 = vmax.f32 %v888, 0.0
    %v1066 = vmax.f32 %v892, 0.0
    %v1067 = vmax.f32 %v894, 0.0
    %v1068 = vmax.f32 %v896, 0.0
    %v1069 = vmax.f32 %v898, 0.0
    %v1070 = vmax.f32 %v902, 0.0
    %v1071 = vmax.f32 %v904, 0.0
    %v1072 = vmax.f32 %v906, 0.0
    %v1073 = vmax.f32 %v908, 0.0
    %v1074 = vmax.f32 %v912, 0.0
    %v1075 = vmax.f32 %v914, 0.0
    %v1076 = vmax.f32 %v916, 0.0
    %v1077 = vmax.f32 %v918, 0.0
    %v1078 = vmax.f32 %v922, 0.0
    %v1079 = vmax.f32 %v924, 0.0
    %v1080 = vmax.f32 %v926, 0.0
    %v1081 = vmax.f32 %v928, 0.0
    %v1082 = vmax.f32 %v932, 0.0
    %v1083 = vmax.f32 %v934, 0.0
    %v1084 = vmax.f32 %v936, 0.0
    %v1085 = vmax.f32 %v938, 0.0
    %v1086 = vmax.f32 %v942, 0.0
    %v1087 = vmax.f32 %v944, 0.0
    %v1088 = vmax.f32 %v946, 0.0
    %v1089 = vmax.f32 %v948, 0.0
    %v1090 = vmax.f32 %v952, 0.0
    %v1091 = vmax.f32 %v954, 0.0
    %v1092 = vmax.f32 %v956, 0.0
    %v1093 = vmax.f32 %v958, 0.0
    %v1094 = vmax.f32 %v962, 0.0
    %v1095 = vmax.f32 %v964, 0.0
    %v1096 = vmax.f32 %v966, 0.0
    %v1097 = vmax.f32 %v968, 0.0
    %v1098 = vadd.f32 %v970, %v972
    %v1099 = vadd.f32 %v1098, %v974
    %v1100 = vadd.f32 %v1099, %v976
    %v1101 = vadd.f32 %v1100, %v978
    %v1102 = vadd.f32 %v1101, %v980
    %v1103 = vadd.f32 %v1102, %v982
    %v1104 = vadd.f32 %v1103, %v984
    %v1105 = vrot.slane %v1104, 4
    %v1106 = vadd.f32 %v1104, %v1105
    %v1107 = vrot.slane %v1106, 2
    %v1108 = vadd.f32 %v1106, %v1107
    %v1109 = vrot.slane %v1108, 1
    %v1110 = vadd.f32 %v1108, %v1109
    %v1111 = vadd.f32 %v971, %v973
    %v1112 = vadd.f32 %v1111, %v975
    %v1113 = vadd.f32 %v1112, %v977
    %v1114 = vadd.f32 %v1113, %v979
    %v1115 = vadd.f32 %v1114, %v981
    %v1116 = vadd.f32 %v1115, %v983
    %v1117 = vadd.f32 %v1116, %v985
    %v1118 = vrot.slane %v1117, 4
    %v1119 = vadd.f32 %v1117, %v1118
    %v1120 = vrot.slane %v1119, 2
    %v1121 = vadd.f32 %v1119, %v1120
    %v1122 = vrot.slane %v1121, 1
    %v1123 = vadd.f32 %v1121, %v1122
    %v1124 = vadd.f32 %v986, %v988
    %v1125 = vadd.f32 %v1124, %v990
    %v1126 = vadd.f32 %v1125, %v992
    %v1127 = vadd.f32 %v1126, %v994
    %v1128 = vadd.f32 %v1127, %v996
    %v1129 = vadd.f32 %v1128, %v998
    %v1130 = vadd.f32 %v1129, %v1000
    %v1131 = vrot.slane %v1130, 4
    %v1132 = vadd.f32 %v1130, %v1131
    %v1133 = vrot.slane %v1132, 2
    %v1134 = vadd.f32 %v1132, %v1133
    %v1135 = vrot.slane %v1134, 1
    %v1136 = vadd.f32 %v1134, %v1135
    %v1137 = vadd.f32 %v987, %v989
    %v1138 = vadd.f32 %v1137, %v991
    %v1139 = vadd.f32 %v1138, %v993
    %v1140 = vadd.f32 %v1139, %v995
    %v1141 = vadd.f32 %v1140, %v997
    %v1142 = vadd.f32 %v1141, %v999
    %v1143 = vadd.f32 %v1142, %v1001
    %v1144 = vrot.slane %v1143, 4
    %v1145 = vadd.f32 %v1143, %v1144
    %v1146 = vrot.slane %v1145, 2
    %v1147 = vadd.f32 %v1145, %v1146
    %v1148 = vrot.slane %v1147, 1
    %v1149 = vadd.f32 %v1147, %v1148
    %v1150 = vadd.f32 %v1002, %v1004
    %v1151 = vadd.f32 %v1150, %v1006
    %v1152 = vadd.f32 %v1151, %v1008
    %v1153 = vadd.f32 %v1152, %v1010
    %v1154 = vadd.f32 %v1153, %v1012
    %v1155 = vadd.f32 %v1154, %v1014
    %v1156 = vadd.f32 %v1155, %v1016
    %v1157 = vrot.slane %v1156, 4
    %v1158 = vadd.f32 %v1156, %v1157
    %v1159 = vrot.slane %v1158, 2
    %v1160 = vadd.f32 %v1158, %v1159
    %v1161 = vrot.slane %v1160, 1
    %v1162 = vadd.f32 %v1160, %v1161
    %v1163 = vadd.f32 %v1003, %v1005
    %v1164 = vadd.f32 %v1163, %v1007
    %v1165 = vadd.f32 %v1164, %v1009
    %v1166 = vadd.f32 %v1165, %v1011
    %v1167 = vadd.f32 %v1166, %v1013
    %v1168 = vadd.f32 %v1167, %v1015
    %v1169 = vadd.f32 %v1168, %v1017
    %v1170 = vrot.slane %v1169, 4
    %v1171 = vadd.f32 %v1169, %v1170
    %v1172 = vrot.slane %v1171, 2
    %v1173 = vadd.f32 %v1171, %v1172
    %v1174 = vrot.slane %v1173, 1
    %v1175 = vadd.f32 %v1173, %v1174
    %v1176 = vadd.f32 %v1018, %v1020
    %v1177 = vadd.f32 %v1176, %v1022
    %v1178 = vadd.f32 %v1177, %v1024
    %v1179 = vadd.f32 %v1178, %v1026
    %v1180 = vadd.f32 %v1179, %v1028
    %v1181 = vadd.f32 %v1180, %v1030
    %v1182 = vadd.f32 %v1181, %v1032
    %v1183 = vrot.slane %v1182, 4
    %v1184 = vadd.f32 %v1182, %v1183
    %v1185 = vrot.slane %v1184, 2
    %v1186 = vadd.f32 %v1184, %v1185
    %v1187 = vrot.slane %v1186, 1
    %v1188 = vadd.f32 %v1186, %v1187
    %v1189 = vadd.f32 %v1019, %v1021
    %v1190 = vadd.f32 %v1189, %v1023
    %v1191 = vadd.f32 %v1190, %v1025
    %v1192 = vadd.f32 %v1191, %v1027
    %v1193 = vadd.f32 %v1192, %v1029
    %v1194 = vadd.f32 %v1193, %v1031
    %v1195 = vadd.f32 %v1194, %v1033
    %v1196 = vrot.slane %v1195, 4
    %v1197 = vadd.f32 %v1195, %v1196
    %v1198 = vrot.slane %v1197, 2
    %v1199 = vadd.f32 %v1197, %v1198
    %v1200 = vrot.slane %v1199, 1
    %v1201 = vadd.f32 %v1199, %v1200
    %v1202 = vadd.f32 %v1034, %v1036
    %v1203 = vadd.f32 %v1202, %v1038
    %v1204 = vadd.f32 %v1203, %v1040
    %v1205 = vadd.f32 %v1204, %v1042
    %v1206 = vadd.f32 %v1205, %v1044
    %v1207 = vadd.f32 %v1206, %v1046
    %v1208 = vadd.f32 %v1207, %v1048
    %v1209 = vrot.slane %v1208, 4
    %v1210 = vadd.f32 %v1208, %v1209
    %v1211 = vrot.slane %v1210, 2
    %v1212 = vadd.f32 %v1210, %v1211
    %v1213 = vrot.slane %v1212, 1
    %v1214 = vadd.f32 %v1212, %v1213
    %v1215 = vadd.f32 %v1035, %v1037
    %v1216 = vadd.f32 %v1215, %v1039
    %v1217 = vadd.f32 %v1216, %v1041
    %v1218 = vadd.f32 %v1217, %v1043
    %v1219 = vadd.f32 %v1218, %v1045
    %v1220 = vadd.f32 %v1219, %v1047
    %v1221 = vadd.f32 %v1220, %v1049
    %v1222 = vrot.slane %v1221, 4
    %v1223 = vadd.f32 %v1221, %v1222
    %v1224 = vrot.slane %v1223, 2
    %v1225 = vadd.f32 %v1223, %v1224
    %v1226 = vrot.slane %v1225, 1
    %v1227 = vadd.f32 %v1225, %v1226
    %v1228 = vadd.f32 %v1050, %v1052
    %v1229 = vadd.f32 %v1228, %v1054
    %v1230 = vadd.f32 %v1229, %v1056
    %v1231 = vadd.f32 %v1230, %v1058
    %v1232 = vadd.f32 %v1231, %v1060
    %v1233 = vadd.f32 %v1232, %v1062
    %v1234 = vadd.f32 %v1233, %v1064
    %v1235 = vrot.slane %v1234, 4
    %v1236 = vadd.f32 %v1234, %v1235
    %v1237 = vrot.slane %v1236, 2
    %v1238 = vadd.f32 %v1236, %v1237
    %v1239 = vrot.slane %v1238, 1
    %v1240 = vadd.f32 %v1238, %v1239
    %v1241 = vadd.f32 %v1051, %v1053
    %v1242 = vadd.f32 %v1241, %v1055
    %v1243 = vadd.f32 %v1242, %v1057
    %v1244 = vadd.f32 %v1243, %v1059
    %v1245 = vadd.f32 %v1244, %v1061
    %v1246 = vadd.f32 %v1245, %v1063
    %v1247 = vadd.f32 %v1246, %v1065
    %v1248 = vrot.slane %v1247, 4
    %v1249 = vadd.f32 %v1247, %v1248
    %v1250 = vrot.slane %v1249, 2
    %v1251 = vadd.f32 %v1249, %v1250
    %v1252 = vrot.slane %v1251, 1
    %v1253 = vadd.f32 %v1251, %v1252
    %v1254 = vadd.f32 %v1066, %v1068
    %v1255 = vadd.f32 %v1254, %v1070
    %v1256 = vadd.f32 %v1255, %v1072
    %v1257 = vadd.f32 %v1256, %v1074
    %v1258 = vadd.f32 %v1257, %v1076
    %v1259 = vadd.f32 %v1258, %v1078
    %v1260 = vadd.f32 %v1259, %v1080
    %v1261 = vrot.slane %v1260, 4
    %v1262 = vadd.f32 %v1260, %v1261
    %v1263 = vrot.slane %v1262, 2
    %v1264 = vadd.f32 %v1262, %v1263
    %v1265 = vrot.slane %v1264, 1
    %v1266 = vadd.f32 %v1264, %v1265
    %v1267 = vadd.f32 %v1067, %v1069
    %v1268 = vadd.f32 %v1267, %v1071
    %v1269 = vadd.f32 %v1268, %v1073
    %v1270 = vadd.f32 %v1269, %v1075
    %v1271 = vadd.f32 %v1270, %v1077
    %v1272 = vadd.f32 %v1271, %v1079
    %v1273 = vadd.f32 %v1272, %v1081
    %v1274 = vrot.slane %v1273, 4
    %v1275 = vadd.f32 %v1273, %v1274
    %v1276 = vrot.slane %v1275, 2
    %v1277 = vadd.f32 %v1275, %v1276
    %v1278 = vrot.slane %v1277, 1
    %v1279 = vadd.f32 %v1277, %v1278
    %v1280 = vadd.f32 %v1082, %v1084
    %v1281 = vadd.f32 %v1280, %v1086
    %v1282 = vadd.f32 %v1281, %v1088
    %v1283 = vadd.f32 %v1282, %v1090
    %v1284 = vadd.f32 %v1283, %v1092
    %v1285 = vadd.f32 %v1284, %v1094
    %v1286 = vadd.f32 %v1285, %v1096
    %v1287 = vrot.slane %v1286, 4
    %v1288 = vadd.f32 %v1286, %v1287
    %v1289 = vrot.slane %v1288, 2
    %v1290 = vadd.f32 %v1288, %v1289
    %v1291 = vrot.slane %v1290, 1
    %v1292 = vadd.f32 %v1290, %v1291
    %v1293 = vadd.f32 %v1083, %v1085
    %v1294 = vadd.f32 %v1293, %v1087
    %v1295 = vadd.f32 %v1294, %v1089
    %v1296 = vadd.f32 %v1295, %v1091
    %v1297 = vadd.f32 %v1296, %v1093
    %v1298 = vadd.f32 %v1297, %v1095
    %v1299 = vadd.f32 %v1298, %v1097
    %v1300 = vrot.slane %v1299, 4
    %v1301 = vadd.f32 %v1299, %v1300
    %v1302 = vrot.slane %v1301, 2
    %v1303 = vadd.f32 %v1301, %v1302
    %v1304 = vrot.slane %v1303, 1
    %v1305 = vadd.f32 %v1303, %v1304
    %v1306 = vld [vmem:[%s3] sm:$0xff]
    %v1307 = vld [vmem:[%s3 + $0x8] sm:$0xff]
    %v1308 = vld [vmem:[%s3 + $0x10] sm:$0xff]
    %v1309 = vld [vmem:[%s3 + $0x18] sm:$0xff]
    %v1310 = vld [vmem:[%s3 + $0x20] sm:$0xff]
    %v1311 = vld [vmem:[%s3 + $0x28] sm:$0xff]
    %v1312 = vld [vmem:[%s3 + $0x30] sm:$0xff]
    %v1313 = vld [vmem:[%s3 + $0x38] sm:$0xff]
    %v1314 = vld [vmem:[%s3 + $0x40] sm:$0xff]
    %v1315 = vld [vmem:[%s3 + $0x48] sm:$0xff]
    %v1316 = vld [vmem:[%s3 + $0x50] sm:$0xff]
    %v1317 = vld [vmem:[%s3 + $0x58] sm:$0xff]
    %v1318 = vld [vmem:[%s3 + $0x60] sm:$0xff]
    %v1319 = vld [vmem:[%s3 + $0x68] sm:$0xff]
    %v1320 = vld [vmem:[%s3 + $0x70] sm:$0xff]
    %v1321 = vld [vmem:[%s3 + $0x78] sm:$0xff]
    %v1322 = vld [vmem:[%s3 + $0x80] sm:$0xff]
    %v1323 = vld [vmem:[%s3 + $0x88] sm:$0xff]
    %v1324 = vld [vmem:[%s3 + $0x90] sm:$0xff]
    %v1325 = vld [vmem:[%s3 + $0x98] sm:$0xff]
    %v1326 = vld [vmem:[%s3 + $0xa0] sm:$0xff]
    %v1327 = vld [vmem:[%s3 + $0xa8] sm:$0xff]
    %v1328 = vld [vmem:[%s3 + $0xb0] sm:$0xff]
    %v1329 = vld [vmem:[%s3 + $0xb8] sm:$0xff]
    %v1330 = vld [vmem:[%s3 + $0xc0] sm:$0xff]
    %v1331 = vld [vmem:[%s3 + $0xc8] sm:$0xff]
    %v1332 = vld [vmem:[%s3 + $0xd0] sm:$0xff]
    %v1333 = vld [vmem:[%s3 + $0xd8] sm:$0xff]
    %v1334 = vld [vmem:[%s3 + $0xe0] sm:$0xff]
    %v1335 = vld [vmem:[%s3 + $0xe8] sm:$0xff]
    %v1336 = vld [vmem:[%s3 + $0xf0] sm:$0xff]
    %v1337 = vld [vmem:[%s3 + $0xf8] sm:$0xff]
    %v1338 = vld [vmem:[%s1 + $0x8] sm:$0xff]
    %v1339 = vld [vmem:[%s1 + $0x30] sm:$0xff]
    %v1340 = vld [vmem:[%s1 + $0x58] sm:$0xff]
    %v1341 = vld [vmem:[%s1 + $0x80] sm:$0xff]
    %v1342 = vld [vmem:[%s1 + $0xa8] sm:$0xff]
    %v1343 = vld [vmem:[%s1 + $0xd0] sm:$0xff]
    %v1344 = vld [vmem:[%s1 + $0xf8] sm:$0xff]
    %v1345 = vld [vmem:[%s1 + $0x120] sm:$0xff]
    %v1346 = vld [vmem:[%s1 + $0x148] sm:$0xff]
    %v1347 = vld [vmem:[%s1 + $0x170] sm:$0xff]
    %v1348 = vld [vmem:[%s1 + $0x198] sm:$0xff]
    %v1349 = vld [vmem:[%s1 + $0x1c0] sm:$0xff]
    %v1350 = vld [vmem:[%s1 + $0x1e8] sm:$0xff]
    %v1351 = vld [vmem:[%s1 + $0x210] sm:$0xff]
    %v1352 = vld [vmem:[%s1 + $0x238] sm:$0xff]
    %v1353 = vld [vmem:[%s1 + $0x260] sm:$0xff]
    %v1354 = vld [vmem:[%s2 + $0x2] sm:$0x3]
    %v1356 = vlaneseq
    %v1357 = vshrl.u32 %v1356, 7
    %v1358 = vsub.s32 0, %v1357
    %v1359 = vrot.slane %v1354, %v1358
    %v1360 = vlaneseq
    %v1361 = vshrl.u32 %v1360, 7
    %v1362 = vsub.s32 1, %v1361
    %v1363 = vrot.slane %v1354, %v1362
    %v1382 = vunpack.c.l.b16 %v1338
    %v1383 = vunpack.c.h.b16 %v1338
    %v1384 = vunpack.c.l.b16 %v1339
    %v1385 = vunpack.c.h.b16 %v1339
    %v1386 = vunpack.c.l.b16 %v1340
    %v1387 = vunpack.c.h.b16 %v1340
    %v1388 = vunpack.c.l.b16 %v1341
    %v1389 = vunpack.c.h.b16 %v1341
    %v1390 = vunpack.c.l.b16 %v1342
    %v1391 = vunpack.c.h.b16 %v1342
    %v1392 = vunpack.c.l.b16 %v1343
    %v1393 = vunpack.c.h.b16 %v1343
    %v1394 = vunpack.c.l.b16 %v1344
    %v1395 = vunpack.c.h.b16 %v1344
    %v1396 = vunpack.c.l.b16 %v1345
    %v1397 = vunpack.c.h.b16 %v1345
    %v1398 = vunpack.c.l.b16 %v1346
    %v1399 = vunpack.c.h.b16 %v1346
    %v1400 = vunpack.c.l.b16 %v1347
    %v1401 = vunpack.c.h.b16 %v1347
    %v1402 = vunpack.c.l.b16 %v1348
    %v1403 = vunpack.c.h.b16 %v1348
    %v1404 = vunpack.c.l.b16 %v1349
    %v1405 = vunpack.c.h.b16 %v1349
    %v1406 = vunpack.c.l.b16 %v1350
    %v1407 = vunpack.c.h.b16 %v1350
    %v1408 = vunpack.c.l.b16 %v1351
    %v1409 = vunpack.c.h.b16 %v1351
    %v1410 = vunpack.c.l.b16 %v1352
    %v1411 = vunpack.c.h.b16 %v1352
    %v1412 = vunpack.c.l.b16 %v1353
    %v1413 = vunpack.c.h.b16 %v1353
    %v1414 = vpack.c.b16 %v1384, %v1382
    %v1415 = vpack.c.b16 %v1385, %v1383
    %v1416 = vpack.c.b16 %v1388, %v1386
    %v1417 = vpack.c.b16 %v1389, %v1387
    %v1418 = vpack.c.b16 %v1392, %v1390
    %v1419 = vpack.c.b16 %v1393, %v1391
    %v1420 = vpack.c.b16 %v1396, %v1394
    %v1421 = vpack.c.b16 %v1397, %v1395
    %v1422 = vpack.c.b16 %v1400, %v1398
    %v1423 = vpack.c.b16 %v1401, %v1399
    %v1424 = vpack.c.b16 %v1404, %v1402
    %v1425 = vpack.c.b16 %v1405, %v1403
    %v1426 = vpack.c.b16 %v1408, %v1406
    %v1427 = vpack.c.b16 %v1409, %v1407
    %v1428 = vpack.c.b16 %v1412, %v1410
    %v1429 = vpack.c.b16 %v1413, %v1411
    %1446 = vmatprep.subr.bf16.mxu0 %v1415
    %1447 = vmatpush1.bf16.msra.mxu0 %v1414
    %1448 = vmatprep.subr.bf16.mxu0 %v1417
    %1449 = vmatpush1.bf16.msra.mxu0 %v1416
    %1450 = vmatprep.subr.bf16.mxu0 %v1419
    %1451 = vmatpush1.bf16.msra.mxu0 %v1418
    %1452 = vmatprep.subr.bf16.mxu0 %v1421
    %1453 = vmatpush1.bf16.msra.mxu0 %v1420
    %1454 = vmatprep.subr.bf16.mxu0 %v1423
    %1455 = vmatpush1.bf16.msra.mxu0 %v1422
    %1456 = vmatprep.subr.bf16.mxu0 %v1425
    %1457 = vmatpush1.bf16.msra.mxu0 %v1424
    %1458 = vmatprep.subr.bf16.mxu0 %v1427
    %1459 = vmatpush1.bf16.msra.mxu0 %v1426
    %1460 = vmatprep.subr.bf16.mxu0 %v1429
    %1461 = vmatpush1.bf16.msra.mxu0 %v1428
    %1462 = vmatprep.subr.bf16.mxu0 0
    %1463 = vmatpush1.bf16.msra.mxu0 0
    %1464 = vmatprep.subr.bf16.mxu0 0
    %1465 = vmatpush1.bf16.msra.mxu0 0
    %1466 = vmatprep.subr.bf16.mxu0 0
    %1467 = vmatpush1.bf16.msra.mxu0 0
    %1468 = vmatprep.subr.bf16.mxu0 0
    %1469 = vmatpush1.bf16.msra.mxu0 0
    %1470 = vmatprep.subr.bf16.mxu0 0
    %1471 = vmatpush1.bf16.msra.mxu0 0
    %1472 = vmatprep.subr.bf16.mxu0 0
    %1473 = vmatpush1.bf16.msra.mxu0 0
    %1474 = vmatprep.subr.bf16.mxu0 0
    %1475 = vmatpush1.bf16.msra.mxu0 0
    %1476 = vmatprep.subr.bf16.mxu0 0
    %1477 = vmatpush1.bf16.msra.mxu0 0
    %1478 = vmatprep.mubr.bf16.mxu0 0
    %1479 = vmatmul.mubr.bf16.gmra.mrb[0].mxu0 %v477
    %v1480 = vpop.f32.mrb[0].mxu0
    %v1481 = vadd.f32 %v1359, %v1480
    %v1482 = vpop.f32.mrb[0].mxu0
    %v1483 = vadd.f32 %v1363, %v1482
    %v1484 = vpop.f32.mrb[0].mxu0
    %v1485 = vadd.f32 %v1359, %v1484
    %v1486 = vpop.f32.mrb[0].mxu0
    %v1487 = vadd.f32 %v1363, %v1486
    %1488 = vmatprep.mubr.bf16.mxu0 0
    %1489 = vmatmul.mubr.bf16.gmra.mrb[0].mxu0 %v478
    %v1490 = vpop.f32.mrb[0].mxu0
    %v1491 = vadd.f32 %v1359, %v1490
    %v1492 = vpop.f32.mrb[0].mxu0
    %v1493 = vadd.f32 %v1363, %v1492
    %v1494 = vpop.f32.mrb[0].mxu0
    %v1495 = vadd.f32 %v1359, %v1494
    %v1496 = vpop.f32.mrb[0].mxu0
    %v1497 = vadd.f32 %v1363, %v1496
    %1498 = vmatprep.mubr.bf16.mxu0 0
    %1499 = vmatmul.mubr.bf16.gmra.mrb[0].mxu0 %v479
    %v1500 = vpop.f32.mrb[0].mxu0
    %v1501 = vadd.f32 %v1359, %v1500
    %v1502 = vpop.f32.mrb[0].mxu0
    %v1503 = vadd.f32 %v1363, %v1502
    %v1504 = vpop.f32.mrb[0].mxu0
    %v1505 = vadd.f32 %v1359, %v1504
    %v1506 = vpop.f32.mrb[0].mxu0
    %v1507 = vadd.f32 %v1363, %v1506
    %1508 = vmatprep.mubr.bf16.mxu0 0
    %1509 = vmatmul.mubr.bf16.gmra.mrb[0].mxu0 %v480
    %v1510 = vpop.f32.mrb[0].mxu0
    %v1511 = vadd.f32 %v1359, %v1510
    %v1512 = vpop.f32.mrb[0].mxu0
    %v1513 = vadd.f32 %v1363, %v1512
    %v1514 = vpop.f32.mrb[0].mxu0
    %v1515 = vadd.f32 %v1359, %v1514
    %v1516 = vpop.f32.mrb[0].mxu0
    %v1517 = vadd.f32 %v1363, %v1516
    %1518 = vmatprep.mubr.bf16.mxu0 0
    %1519 = vmatmul.mubr.bf16.gmra.mrb[0].mxu0 %v481
    %v1520 = vpop.f32.mrb[0].mxu0
    %v1521 = vadd.f32 %v1359, %v1520
    %v1522 = vpop.f32.mrb[0].mxu0
    %v1523 = vadd.f32 %v1363, %v1522
    %v1524 = vpop.f32.mrb[0].mxu0
    %v1525 = vadd.f32 %v1359, %v1524
    %v1526 = vpop.f32.mrb[0].mxu0
    %v1527 = vadd.f32 %v1363, %v1526
    %1528 = vmatprep.mubr.bf16.mxu0 0
    %1529 = vmatmul.mubr.bf16.gmra.mrb[0].mxu0 %v482
    %v1530 = vpop.f32.mrb[0].mxu0
    %v1531 = vadd.f32 %v1359, %v1530
    %v1532 = vpop.f32.mrb[0].mxu0
    %v1533 = vadd.f32 %v1363, %v1532
    %v1534 = vpop.f32.mrb[0].mxu0
    %v1535 = vadd.f32 %v1359, %v1534
    %v1536 = vpop.f32.mrb[0].mxu0
    %v1537 = vadd.f32 %v1363, %v1536
    %1538 = vmatprep.mubr.bf16.mxu0 0
    %1539 = vmatmul.mubr.bf16.gmra.mrb[0].mxu0 %v483
    %v1540 = vpop.f32.mrb[0].mxu0
    %v1541 = vadd.f32 %v1359, %v1540
    %v1542 = vpop.f32.mrb[0].mxu0
    %v1543 = vadd.f32 %v1363, %v1542
    %v1544 = vpop.f32.mrb[0].mxu0
    %v1545 = vadd.f32 %v1359, %v1544
    %v1546 = vpop.f32.mrb[0].mxu0
    %v1547 = vadd.f32 %v1363, %v1546
    %1548 = vmatprep.mubr.bf16.mxu0 0
    %1549 = vmatmul.mubr.bf16.gmra.mrb[0].mxu0 %v484
    %v1550 = vpop.f32.mrb[0].mxu0
    %v1551 = vadd.f32 %v1359, %v1550
    %v1552 = vpop.f32.mrb[0].mxu0
    %v1553 = vadd.f32 %v1363, %v1552
    %v1554 = vpop.f32.mrb[0].mxu0
    %v1555 = vadd.f32 %v1359, %v1554
    %v1556 = vpop.f32.mrb[0].mxu0
    %v1557 = vadd.f32 %v1363, %v1556
    %1558 = vmatprep.mubr.bf16.mxu0 0
    %1559 = vmatmul.mubr.bf16.gmra.mrb[0].mxu0 %v485
    %v1560 = vpop.f32.mrb[0].mxu0
    %v1561 = vadd.f32 %v1359, %v1560
    %v1562 = vpop.f32.mrb[0].mxu0
    %v1563 = vadd.f32 %v1363, %v1562
    %v1564 = vpop.f32.mrb[0].mxu0
    %v1565 = vadd.f32 %v1359, %v1564
    %v1566 = vpop.f32.mrb[0].mxu0
    %v1567 = vadd.f32 %v1363, %v1566
    %1568 = vmatprep.mubr.bf16.mxu0 0
    %1569 = vmatmul.mubr.bf16.gmra.mrb[0].mxu0 %v486
    %v1570 = vpop.f32.mrb[0].mxu0
    %v1571 = vadd.f32 %v1359, %v1570
    %v1572 = vpop.f32.mrb[0].mxu0
    %v1573 = vadd.f32 %v1363, %v1572
    %v1574 = vpop.f32.mrb[0].mxu0
    %v1575 = vadd.f32 %v1359, %v1574
    %v1576 = vpop.f32.mrb[0].mxu0
    %v1577 = vadd.f32 %v1363, %v1576
    %1578 = vmatprep.mubr.bf16.mxu0 0
    %1579 = vmatmul.mubr.bf16.gmra.mrb[0].mxu0 %v487
    %v1580 = vpop.f32.mrb[0].mxu0
    %v1581 = vadd.f32 %v1359, %v1580
    %v1582 = vpop.f32.mrb[0].mxu0
    %v1583 = vadd.f32 %v1363, %v1582
    %v1584 = vpop.f32.mrb[0].mxu0
    %v1585 = vadd.f32 %v1359, %v1584
    %v1586 = vpop.f32.mrb[0].mxu0
    %v1587 = vadd.f32 %v1363, %v1586
    %1588 = vmatprep.mubr.bf16.mxu0 0
    %1589 = vmatmul.mubr.bf16.gmra.mrb[0].mxu0 %v488
    %v1590 = vpop.f32.mrb[0].mxu0
    %v1591 = vadd.f32 %v1359, %v1590
    %v1592 = vpop.f32.mrb[0].mxu0
    %v1593 = vadd.f32 %v1363, %v1592
    %v1594 = vpop.f32.mrb[0].mxu0
    %v1595 = vadd.f32 %v1359, %v1594
    %v1596 = vpop.f32.mrb[0].mxu0
    %v1597 = vadd.f32 %v1363, %v1596
    %1598 = vmatprep.mubr.bf16.mxu0 0
    %1599 = vmatmul.mubr.bf16.gmra.mrb[0].mxu0 %v489
    %v1600 = vpop.f32.mrb[0].mxu0
    %v1601 = vadd.f32 %v1359, %v1600
    %v1602 = vpop.f32.mrb[0].mxu0
    %v1603 = vadd.f32 %v1363, %v1602
    %v1604 = vpop.f32.mrb[0].mxu0
    %v1605 = vadd.f32 %v1359, %v1604
    %v1606 = vpop.f32.mrb[0].mxu0
    %v1607 = vadd.f32 %v1363, %v1606
    %1608 = vmatprep.mubr.bf16.mxu0 0
    %1609 = vmatmul.mubr.bf16.gmra.mrb[0].mxu0 %v490
    %v1610 = vpop.f32.mrb[0].mxu0
    %v1611 = vadd.f32 %v1359, %v1610
    %v1612 = vpop.f32.mrb[0].mxu0
    %v1613 = vadd.f32 %v1363, %v1612
    %v1614 = vpop.f32.mrb[0].mxu0
    %v1615 = vadd.f32 %v1359, %v1614
    %v1616 = vpop.f32.mrb[0].mxu0
    %v1617 = vadd.f32 %v1363, %v1616
    %1618 = vmatprep.mubr.bf16.mxu0 0
    %1619 = vmatmul.mubr.bf16.gmra.mrb[0].mxu0 %v491
    %v1620 = vpop.f32.mrb[0].mxu0
    %v1621 = vadd.f32 %v1359, %v1620
    %v1622 = vpop.f32.mrb[0].mxu0
    %v1623 = vadd.f32 %v1363, %v1622
    %v1624 = vpop.f32.mrb[0].mxu0
    %v1625 = vadd.f32 %v1359, %v1624
    %v1626 = vpop.f32.mrb[0].mxu0
    %v1627 = vadd.f32 %v1363, %v1626
    %1628 = vmatprep.mubr.bf16.mxu0 0
    %1629 = vmatmul.mubr.bf16.gmra.mrb[0].mxu0 %v492
    %v1630 = vpop.f32.mrb[0].mxu0
    %v1631 = vadd.f32 %v1359, %v1630
    %v1632 = vpop.f32.mrb[0].mxu0
    %v1633 = vadd.f32 %v1363, %v1632
    %v1634 = vpop.f32.mrb[0].mxu0
    %v1635 = vadd.f32 %v1359, %v1634
    %v1636 = vpop.f32.mrb[0].mxu0
    %v1637 = vadd.f32 %v1363, %v1636
    %1638 = vmatprep.mubr.bf16.mxu0 0
    %1639 = vmatmul.mubr.bf16.gmra.mrb[0].mxu0 %v493
    %v1640 = vpop.f32.mrb[0].mxu0
    %v1641 = vadd.f32 %v1359, %v1640
    %v1642 = vpop.f32.mrb[0].mxu0
    %v1643 = vadd.f32 %v1363, %v1642
    %v1644 = vpop.f32.mrb[0].mxu0
    %v1645 = vadd.f32 %v1359, %v1644
    %v1646 = vpop.f32.mrb[0].mxu0
    %v1647 = vadd.f32 %v1363, %v1646
    %1648 = vmatprep.mubr.bf16.mxu0 0
    %1649 = vmatmul.mubr.bf16.gmra.mrb[0].mxu0 %v494
    %v1650 = vpop.f32.mrb[0].mxu0
    %v1651 = vadd.f32 %v1359, %v1650
    %v1652 = vpop.f32.mrb[0].mxu0
    %v1653 = vadd.f32 %v1363, %v1652
    %v1654 = vpop.f32.mrb[0].mxu0
    %v1655 = vadd.f32 %v1359, %v1654
    %v1656 = vpop.f32.mrb[0].mxu0
    %v1657 = vadd.f32 %v1363, %v1656
    %1658 = vmatprep.mubr.bf16.mxu0 0
    %1659 = vmatmul.mubr.bf16.gmra.mrb[0].mxu0 %v495
    %v1660 = vpop.f32.mrb[0].mxu0
    %v1661 = vadd.f32 %v1359, %v1660
    %v1662 = vpop.f32.mrb[0].mxu0
    %v1663 = vadd.f32 %v1363, %v1662
    %v1664 = vpop.f32.mrb[0].mxu0
    %v1665 = vadd.f32 %v1359, %v1664
    %v1666 = vpop.f32.mrb[0].mxu0
    %v1667 = vadd.f32 %v1363, %v1666
    %1668 = vmatprep.mubr.bf16.mxu0 0
    %1669 = vmatmul.mubr.bf16.gmra.mrb[0].mxu0 %v496
    %v1670 = vpop.f32.mrb[0].mxu0
    %v1671 = vadd.f32 %v1359, %v1670
    %v1672 = vpop.f32.mrb[0].mxu0
    %v1673 = vadd.f32 %v1363, %v1672
    %v1674 = vpop.f32.mrb[0].mxu0
    %v1675 = vadd.f32 %v1359, %v1674
    %v1676 = vpop.f32.mrb[0].mxu0
    %v1677 = vadd.f32 %v1363, %v1676
    %1678 = vmatprep.mubr.bf16.mxu0 0
    %1679 = vmatmul.mubr.bf16.gmra.mrb[0].mxu0 %v497
    %v1680 = vpop.f32.mrb[0].mxu0
    %v1681 = vadd.f32 %v1359, %v1680
    %v1682 = vpop.f32.mrb[0].mxu0
    %v1683 = vadd.f32 %v1363, %v1682
    %v1684 = vpop.f32.mrb[0].mxu0
    %v1685 = vadd.f32 %v1359, %v1684
    %v1686 = vpop.f32.mrb[0].mxu0
    %v1687 = vadd.f32 %v1363, %v1686
    %1688 = vmatprep.mubr.bf16.mxu0 0
    %1689 = vmatmul.mubr.bf16.gmra.mrb[0].mxu0 %v498
    %v1690 = vpop.f32.mrb[0].mxu0
    %v1691 = vadd.f32 %v1359, %v1690
    %v1692 = vpop.f32.mrb[0].mxu0
    %v1693 = vadd.f32 %v1363, %v1692
    %v1694 = vpop.f32.mrb[0].mxu0
    %v1695 = vadd.f32 %v1359, %v1694
    %v1696 = vpop.f32.mrb[0].mxu0
    %v1697 = vadd.f32 %v1363, %v1696
    %1698 = vmatprep.mubr.bf16.mxu0 0
    %1699 = vmatmul.mubr.bf16.gmra.mrb[0].mxu0 %v499
    %v1700 = vpop.f32.mrb[0].mxu0
    %v1701 = vadd.f32 %v1359, %v1700
    %v1702 = vpop.f32.mrb[0].mxu0
    %v1703 = vadd.f32 %v1363, %v1702
    %v1704 = vpop.f32.mrb[0].mxu0
    %v1705 = vadd.f32 %v1359, %v1704
    %v1706 = vpop.f32.mrb[0].mxu0
    %v1707 = vadd.f32 %v1363, %v1706
    %1708 = vmatprep.mubr.bf16.mxu0 0
    %1709 = vmatmul.mubr.bf16.gmra.mrb[0].mxu0 %v500
    %v1710 = vpop.f32.mrb[0].mxu0
    %v1711 = vadd.f32 %v1359, %v1710
    %v1712 = vpop.f32.mrb[0].mxu0
    %v1713 = vadd.f32 %v1363, %v1712
    %v1714 = vpop.f32.mrb[0].mxu0
    %v1715 = vadd.f32 %v1359, %v1714
    %v1716 = vpop.f32.mrb[0].mxu0
    %v1717 = vadd.f32 %v1363, %v1716
    %1718 = vmatprep.mubr.bf16.mxu0 0
    %1719 = vmatmul.mubr.bf16.gmra.mrb[0].mxu0 %v501
    %v1720 = vpop.f32.mrb[0].mxu0
    %v1721 = vadd.f32 %v1359, %v1720
    %v1722 = vpop.f32.mrb[0].mxu0
    %v1723 = vadd.f32 %v1363, %v1722
    %v1724 = vpop.f32.mrb[0].mxu0
    %v1725 = vadd.f32 %v1359, %v1724
    %v1726 = vpop.f32.mrb[0].mxu0
    %v1727 = vadd.f32 %v1363, %v1726
    %1728 = vmatprep.mubr.bf16.mxu0 0
    %1729 = vmatmul.mubr.bf16.gmra.mrb[0].mxu0 %v502
    %v1730 = vpop.f32.mrb[0].mxu0
    %v1731 = vadd.f32 %v1359, %v1730
    %v1732 = vpop.f32.mrb[0].mxu0
    %v1733 = vadd.f32 %v1363, %v1732
    %v1734 = vpop.f32.mrb[0].mxu0
    %v1735 = vadd.f32 %v1359, %v1734
    %v1736 = vpop.f32.mrb[0].mxu0
    %v1737 = vadd.f32 %v1363, %v1736
    %1738 = vmatprep.mubr.bf16.mxu0 0
    %1739 = vmatmul.mubr.bf16.gmra.mrb[0].mxu0 %v503
    %v1740 = vpop.f32.mrb[0].mxu0
    %v1741 = vadd.f32 %v1359, %v1740
    %v1742 = vpop.f32.mrb[0].mxu0
    %v1743 = vadd.f32 %v1363, %v1742
    %v1744 = vpop.f32.mrb[0].mxu0
    %v1745 = vadd.f32 %v1359, %v1744
    %v1746 = vpop.f32.mrb[0].mxu0
    %v1747 = vadd.f32 %v1363, %v1746
    %1748 = vmatprep.mubr.bf16.mxu0 0
    %1749 = vmatmul.mubr.bf16.gmra.mrb[0].mxu0 %v504
    %v1750 = vpop.f32.mrb[0].mxu0
    %v1751 = vadd.f32 %v1359, %v1750
    %v1752 = vpop.f32.mrb[0].mxu0
    %v1753 = vadd.f32 %v1363, %v1752
    %v1754 = vpop.f32.mrb[0].mxu0
    %v1755 = vadd.f32 %v1359, %v1754
    %v1756 = vpop.f32.mrb[0].mxu0
    %v1757 = vadd.f32 %v1363, %v1756
    %1758 = vmatprep.mubr.bf16.mxu0 0
    %1759 = vmatmul.mubr.bf16.gmra.mrb[0].mxu0 %v505
    %v1760 = vpop.f32.mrb[0].mxu0
    %v1761 = vadd.f32 %v1359, %v1760
    %v1762 = vpop.f32.mrb[0].mxu0
    %v1763 = vadd.f32 %v1363, %v1762
    %v1764 = vpop.f32.mrb[0].mxu0
    %v1765 = vadd.f32 %v1359, %v1764
    %v1766 = vpop.f32.mrb[0].mxu0
    %v1767 = vadd.f32 %v1363, %v1766
    %1768 = vmatprep.mubr.bf16.mxu0 0
    %1769 = vmatmul.mubr.bf16.gmra.mrb[0].mxu0 %v506
    %v1770 = vpop.f32.mrb[0].mxu0
    %v1771 = vadd.f32 %v1359, %v1770
    %v1772 = vpop.f32.mrb[0].mxu0
    %v1773 = vadd.f32 %v1363, %v1772
    %v1774 = vpop.f32.mrb[0].mxu0
    %v1775 = vadd.f32 %v1359, %v1774
    %v1776 = vpop.f32.mrb[0].mxu0
    %v1777 = vadd.f32 %v1363, %v1776
    %1778 = vmatprep.mubr.bf16.mxu0 0
    %1779 = vmatmul.mubr.bf16.gmra.mrb[0].mxu0 %v507
    %v1780 = vpop.f32.mrb[0].mxu0
    %v1781 = vadd.f32 %v1359, %v1780
    %v1782 = vpop.f32.mrb[0].mxu0
    %v1783 = vadd.f32 %v1363, %v1782
    %v1784 = vpop.f32.mrb[0].mxu0
    %v1785 = vadd.f32 %v1359, %v1784
    %v1786 = vpop.f32.mrb[0].mxu0
    %v1787 = vadd.f32 %v1363, %v1786
    %1788 = vmatprep.mubr.bf16.mxu0 0
    %1789 = vmatmul.mubr.bf16.gmra.mrb[0].mxu0 %v508
    %v1790 = vpop.f32.mrb[0].mxu0
    %v1791 = vadd.f32 %v1359, %v1790
    %v1792 = vpop.f32.mrb[0].mxu0
    %v1793 = vadd.f32 %v1363, %v1792
    %v1794 = vpop.f32.mrb[0].mxu0
    %v1795 = vadd.f32 %v1359, %v1794
    %v1796 = vpop.f32.mrb[0].mxu0
    %v1797 = vadd.f32 %v1363, %v1796
    %1798 = vdwg.mxu0
    %v1799 = vmax.f32 %v1481, 0.0
    %v1800 = vmax.f32 %v1483, 0.0
    %v1801 = vmax.f32 %v1485, 0.0
    %v1802 = vmax.f32 %v1487, 0.0
    %v1803 = vmax.f32 %v1491, 0.0
    %v1804 = vmax.f32 %v1493, 0.0
    %v1805 = vmax.f32 %v1495, 0.0
    %v1806 = vmax.f32 %v1497, 0.0
    %v1807 = vmax.f32 %v1501, 0.0
    %v1808 = vmax.f32 %v1503, 0.0
    %v1809 = vmax.f32 %v1505, 0.0
    %v1810 = vmax.f32 %v1507, 0.0
    %v1811 = vmax.f32 %v1511, 0.0
    %v1812 = vmax.f32 %v1513, 0.0
    %v1813 = vmax.f32 %v1515, 0.0
    %v1814 = vmax.f32 %v1517, 0.0
    %v1815 = vmax.f32 %v1521, 0.0
    %v1816 = vmax.f32 %v1523, 0.0
    %v1817 = vmax.f32 %v1525, 0.0
    %v1818 = vmax.f32 %v1527, 0.0
    %v1819 = vmax.f32 %v1531, 0.0
    %v1820 = vmax.f32 %v1533, 0.0
    %v1821 = vmax.f32 %v1535, 0.0
    %v1822 = vmax.f32 %v1537, 0.0
    %v1823 = vmax.f32 %v1541, 0.0
    %v1824 = vmax.f32 %v1543, 0.0
    %v1825 = vmax.f32 %v1545, 0.0
    %v1826 = vmax.f32 %v1547, 0.0
    %v1827 = vmax.f32 %v1551, 0.0
    %v1828 = vmax.f32 %v1553, 0.0
    %v1829 = vmax.f32 %v1555, 0.0
    %v1830 = vmax.f32 %v1557, 0.0
    %v1831 = vmax.f32 %v1561, 0.0
    %v1832 = vmax.f32 %v1563, 0.0
    %v1833 = vmax.f32 %v1565, 0.0
    %v1834 = vmax.f32 %v1567, 0.0
    %v1835 = vmax.f32 %v1571, 0.0
    %v1836 = vmax.f32 %v1573, 0.0
    %v1837 = vmax.f32 %v1575, 0.0
    %v1838 = vmax.f32 %v1577, 0.0
    %v1839 = vmax.f32 %v1581, 0.0
    %v1840 = vmax.f32 %v1583, 0.0
    %v1841 = vmax.f32 %v1585, 0.0
    %v1842 = vmax.f32 %v1587, 0.0
    %v1843 = vmax.f32 %v1591, 0.0
    %v1844 = vmax.f32 %v1593, 0.0
    %v1845 = vmax.f32 %v1595, 0.0
    %v1846 = vmax.f32 %v1597, 0.0
    %v1847 = vmax.f32 %v1601, 0.0
    %v1848 = vmax.f32 %v1603, 0.0
    %v1849 = vmax.f32 %v1605, 0.0
    %v1850 = vmax.f32 %v1607, 0.0
    %v1851 = vmax.f32 %v1611, 0.0
    %v1852 = vmax.f32 %v1613, 0.0
    %v1853 = vmax.f32 %v1615, 0.0
    %v1854 = vmax.f32 %v1617, 0.0
    %v1855 = vmax.f32 %v1621, 0.0
    %v1856 = vmax.f32 %v1623, 0.0
    %v1857 = vmax.f32 %v1625, 0.0
    %v1858 = vmax.f32 %v1627, 0.0
    %v1859 = vmax.f32 %v1631, 0.0
    %v1860 = vmax.f32 %v1633, 0.0
    %v1861 = vmax.f32 %v1635, 0.0
    %v1862 = vmax.f32 %v1637, 0.0
    %v1863 = vmax.f32 %v1641, 0.0
    %v1864 = vmax.f32 %v1643, 0.0
    %v1865 = vmax.f32 %v1645, 0.0
    %v1866 = vmax.f32 %v1647, 0.0
    %v1867 = vmax.f32 %v1651, 0.0
    %v1868 = vmax.f32 %v1653, 0.0
    %v1869 = vmax.f32 %v1655, 0.0
    %v1870 = vmax.f32 %v1657, 0.0
    %v1871 = vmax.f32 %v1661, 0.0
    %v1872 = vmax.f32 %v1663, 0.0
    %v1873 = vmax.f32 %v1665, 0.0
    %v1874 = vmax.f32 %v1667, 0.0
    %v1875 = vmax.f32 %v1671, 0.0
    %v1876 = vmax.f32 %v1673, 0.0
    %v1877 = vmax.f32 %v1675, 0.0
    %v1878 = vmax.f32 %v1677, 0.0
    %v1879 = vmax.f32 %v1681, 0.0
    %v1880 = vmax.f32 %v1683, 0.0
    %v1881 = vmax.f32 %v1685, 0.0
    %v1882 = vmax.f32 %v1687, 0.0
    %v1883 = vmax.f32 %v1691, 0.0
    %v1884 = vmax.f32 %v1693, 0.0
    %v1885 = vmax.f32 %v1695, 0.0
    %v1886 = vmax.f32 %v1697, 0.0
    %v1887 = vmax.f32 %v1701, 0.0
    %v1888 = vmax.f32 %v1703, 0.0
    %v1889 = vmax.f32 %v1705, 0.0
    %v1890 = vmax.f32 %v1707, 0.0
    %v1891 = vmax.f32 %v1711, 0.0
    %v1892 = vmax.f32 %v1713, 0.0
    %v1893 = vmax.f32 %v1715, 0.0
    %v1894 = vmax.f32 %v1717, 0.0
    %v1895 = vmax.f32 %v1721, 0.0
    %v1896 = vmax.f32 %v1723, 0.0
    %v1897 = vmax.f32 %v1725, 0.0
    %v1898 = vmax.f32 %v1727, 0.0
    %v1899 = vmax.f32 %v1731, 0.0
    %v1900 = vmax.f32 %v1733, 0.0
    %v1901 = vmax.f32 %v1735, 0.0
    %v1902 = vmax.f32 %v1737, 0.0
    %v1903 = vmax.f32 %v1741, 0.0
    %v1904 = vmax.f32 %v1743, 0.0
    %v1905 = vmax.f32 %v1745, 0.0
    %v1906 = vmax.f32 %v1747, 0.0
    %v1907 = vmax.f32 %v1751, 0.0
    %v1908 = vmax.f32 %v1753, 0.0
    %v1909 = vmax.f32 %v1755, 0.0
    %v1910 = vmax.f32 %v1757, 0.0
    %v1911 = vmax.f32 %v1761, 0.0
    %v1912 = vmax.f32 %v1763, 0.0
    %v1913 = vmax.f32 %v1765, 0.0
    %v1914 = vmax.f32 %v1767, 0.0
    %v1915 = vmax.f32 %v1771, 0.0
    %v1916 = vmax.f32 %v1773, 0.0
    %v1917 = vmax.f32 %v1775, 0.0
    %v1918 = vmax.f32 %v1777, 0.0
    %v1919 = vmax.f32 %v1781, 0.0
    %v1920 = vmax.f32 %v1783, 0.0
    %v1921 = vmax.f32 %v1785, 0.0
    %v1922 = vmax.f32 %v1787, 0.0
    %v1923 = vmax.f32 %v1791, 0.0
    %v1924 = vmax.f32 %v1793, 0.0
    %v1925 = vmax.f32 %v1795, 0.0
    %v1926 = vmax.f32 %v1797, 0.0
    %v1927 = vadd.f32 %v1799, %v1801
    %v1928 = vadd.f32 %v1927, %v1803
    %v1929 = vadd.f32 %v1928, %v1805
    %v1930 = vadd.f32 %v1929, %v1807
    %v1931 = vadd.f32 %v1930, %v1809
    %v1932 = vadd.f32 %v1931, %v1811
    %v1933 = vadd.f32 %v1932, %v1813
    %v1934 = vrot.slane %v1933, 4
    %v1935 = vadd.f32 %v1933, %v1934
    %v1936 = vrot.slane %v1935, 2
    %v1937 = vadd.f32 %v1935, %v1936
    %v1938 = vrot.slane %v1937, 1
    %v1939 = vadd.f32 %v1937, %v1938
    %v1940 = vadd.f32 %v1800, %v1802
    %v1941 = vadd.f32 %v1940, %v1804
    %v1942 = vadd.f32 %v1941, %v1806
    %v1943 = vadd.f32 %v1942, %v1808
    %v1944 = vadd.f32 %v1943, %v1810
    %v1945 = vadd.f32 %v1944, %v1812
    %v1946 = vadd.f32 %v1945, %v1814
    %v1947 = vrot.slane %v1946, 4
    %v1948 = vadd.f32 %v1946, %v1947
    %v1949 = vrot.slane %v1948, 2
    %v1950 = vadd.f32 %v1948, %v1949
    %v1951 = vrot.slane %v1950, 1
    %v1952 = vadd.f32 %v1950, %v1951
    %v1953 = vadd.f32 %v1815, %v1817
    %v1954 = vadd.f32 %v1953, %v1819
    %v1955 = vadd.f32 %v1954, %v1821
    %v1956 = vadd.f32 %v1955, %v1823
    %v1957 = vadd.f32 %v1956, %v1825
    %v1958 = vadd.f32 %v1957, %v1827
    %v1959 = vadd.f32 %v1958, %v1829
    %v1960 = vrot.slane %v1959, 4
    %v1961 = vadd.f32 %v1959, %v1960
    %v1962 = vrot.slane %v1961, 2
    %v1963 = vadd.f32 %v1961, %v1962
    %v1964 = vrot.slane %v1963, 1
    %v1965 = vadd.f32 %v1963, %v1964
    %v1966 = vadd.f32 %v1816, %v1818
    %v1967 = vadd.f32 %v1966, %v1820
    %v1968 = vadd.f32 %v1967, %v1822
    %v1969 = vadd.f32 %v1968, %v1824
    %v1970 = vadd.f32 %v1969, %v1826
    %v1971 = vadd.f32 %v1970, %v1828
    %v1972 = vadd.f32 %v1971, %v1830
    %v1973 = vrot.slane %v1972, 4
    %v1974 = vadd.f32 %v1972, %v1973
    %v1975 = vrot.slane %v1974, 2
    %v1976 = vadd.f32 %v1974, %v1975
    %v1977 = vrot.slane %v1976, 1
    %v1978 = vadd.f32 %v1976, %v1977
    %v1979 = vadd.f32 %v1831, %v1833
    %v1980 = vadd.f32 %v1979, %v1835
    %v1981 = vadd.f32 %v1980, %v1837
    %v1982 = vadd.f32 %v1981, %v1839
    %v1983 = vadd.f32 %v1982, %v1841
    %v1984 = vadd.f32 %v1983, %v1843
    %v1985 = vadd.f32 %v1984, %v1845
    %v1986 = vrot.slane %v1985, 4
    %v1987 = vadd.f32 %v1985, %v1986
    %v1988 = vrot.slane %v1987, 2
    %v1989 = vadd.f32 %v1987, %v1988
    %v1990 = vrot.slane %v1989, 1
    %v1991 = vadd.f32 %v1989, %v1990
    %v1992 = vadd.f32 %v1832, %v1834
    %v1993 = vadd.f32 %v1992, %v1836
    %v1994 = vadd.f32 %v1993, %v1838
    %v1995 = vadd.f32 %v1994, %v1840
    %v1996 = vadd.f32 %v1995, %v1842
    %v1997 = vadd.f32 %v1996, %v1844
    %v1998 = vadd.f32 %v1997, %v1846
    %v1999 = vrot.slane %v1998, 4
    %v2000 = vadd.f32 %v1998, %v1999
    %v2001 = vrot.slane %v2000, 2
    %v2002 = vadd.f32 %v2000, %v2001
    %v2003 = vrot.slane %v2002, 1
    %v2004 = vadd.f32 %v2002, %v2003
    %v2005 = vadd.f32 %v1847, %v1849
    %v2006 = vadd.f32 %v2005, %v1851
    %v2007 = vadd.f32 %v2006, %v1853
    %v2008 = vadd.f32 %v2007, %v1855
    %v2009 = vadd.f32 %v2008, %v1857
    %v2010 = vadd.f32 %v2009, %v1859
    %v2011 = vadd.f32 %v2010, %v1861
    %v2012 = vrot.slane %v2011, 4
    %v2013 = vadd.f32 %v2011, %v2012
    %v2014 = vrot.slane %v2013, 2
    %v2015 = vadd.f32 %v2013, %v2014
    %v2016 = vrot.slane %v2015, 1
    %v2017 = vadd.f32 %v2015, %v2016
    %v2018 = vadd.f32 %v1848, %v1850
    %v2019 = vadd.f32 %v2018, %v1852
    %v2020 = vadd.f32 %v2019, %v1854
    %v2021 = vadd.f32 %v2020, %v1856
    %v2022 = vadd.f32 %v2021, %v1858
    %v2023 = vadd.f32 %v2022, %v1860
    %v2024 = vadd.f32 %v2023, %v1862
    %v2025 = vrot.slane %v2024, 4
    %v2026 = vadd.f32 %v2024, %v2025
    %v2027 = vrot.slane %v2026, 2
    %v2028 = vadd.f32 %v2026, %v2027
    %v2029 = vrot.slane %v2028, 1
    %v2030 = vadd.f32 %v2028, %v2029
    %v2031 = vadd.f32 %v1863, %v1865
    %v2032 = vadd.f32 %v2031, %v1867
    %v2033 = vadd.f32 %v2032, %v1869
    %v2034 = vadd.f32 %v2033, %v1871
    %v2035 = vadd.f32 %v2034, %v1873
    %v2036 = vadd.f32 %v2035, %v1875
    %v2037 = vadd.f32 %v2036, %v1877
    %v2038 = vrot.slane %v2037, 4
    %v2039 = vadd.f32 %v2037, %v2038
    %v2040 = vrot.slane %v2039, 2
    %v2041 = vadd.f32 %v2039, %v2040
    %v2042 = vrot.slane %v2041, 1
    %v2043 = vadd.f32 %v2041, %v2042
    %v2044 = vadd.f32 %v1864, %v1866
    %v2045 = vadd.f32 %v2044, %v1868
    %v2046 = vadd.f32 %v2045, %v1870
    %v2047 = vadd.f32 %v2046, %v1872
    %v2048 = vadd.f32 %v2047, %v1874
    %v2049 = vadd.f32 %v2048, %v1876
    %v2050 = vadd.f32 %v2049, %v1878
    %v2051 = vrot.slane %v2050, 4
    %v2052 = vadd.f32 %v2050, %v2051
    %v2053 = vrot.slane %v2052, 2
    %v2054 = vadd.f32 %v2052, %v2053
    %v2055 = vrot.slane %v2054, 1
    %v2056 = vadd.f32 %v2054, %v2055
    %v2057 = vadd.f32 %v1879, %v1881
    %v2058 = vadd.f32 %v2057, %v1883
    %v2059 = vadd.f32 %v2058, %v1885
    %v2060 = vadd.f32 %v2059, %v1887
    %v2061 = vadd.f32 %v2060, %v1889
    %v2062 = vadd.f32 %v2061, %v1891
    %v2063 = vadd.f32 %v2062, %v1893
    %v2064 = vrot.slane %v2063, 4
    %v2065 = vadd.f32 %v2063, %v2064
    %v2066 = vrot.slane %v2065, 2
    %v2067 = vadd.f32 %v2065, %v2066
    %v2068 = vrot.slane %v2067, 1
    %v2069 = vadd.f32 %v2067, %v2068
    %v2070 = vadd.f32 %v1880, %v1882
    %v2071 = vadd.f32 %v2070, %v1884
    %v2072 = vadd.f32 %v2071, %v1886
    %v2073 = vadd.f32 %v2072, %v1888
    %v2074 = vadd.f32 %v2073, %v1890
    %v2075 = vadd.f32 %v2074, %v1892
    %v2076 = vadd.f32 %v2075, %v1894
    %v2077 = vrot.slane %v2076, 4
    %v2078 = vadd.f32 %v2076, %v2077
    %v2079 = vrot.slane %v2078, 2
    %v2080 = vadd.f32 %v2078, %v2079
    %v2081 = vrot.slane %v2080, 1
    %v2082 = vadd.f32 %v2080, %v2081
    %v2083 = vadd.f32 %v1895, %v1897
    %v2084 = vadd.f32 %v2083, %v1899
    %v2085 = vadd.f32 %v2084, %v1901
    %v2086 = vadd.f32 %v2085, %v1903
    %v2087 = vadd.f32 %v2086, %v1905
    %v2088 = vadd.f32 %v2087, %v1907
    %v2089 = vadd.f32 %v2088, %v1909
    %v2090 = vrot.slane %v2089, 4
    %v2091 = vadd.f32 %v2089, %v2090
    %v2092 = vrot.slane %v2091, 2
    %v2093 = vadd.f32 %v2091, %v2092
    %v2094 = vrot.slane %v2093, 1
    %v2095 = vadd.f32 %v2093, %v2094
    %v2096 = vadd.f32 %v1896, %v1898
    %v2097 = vadd.f32 %v2096, %v1900
    %v2098 = vadd.f32 %v2097, %v1902
    %v2099 = vadd.f32 %v2098, %v1904
    %v2100 = vadd.f32 %v2099, %v1906
    %v2101 = vadd.f32 %v2100, %v1908
    %v2102 = vadd.f32 %v2101, %v1910
    %v2103 = vrot.slane %v2102, 4
    %v2104 = vadd.f32 %v2102, %v2103
    %v2105 = vrot.slane %v2104, 2
    %v2106 = vadd.f32 %v2104, %v2105
    %v2107 = vrot.slane %v2106, 1
    %v2108 = vadd.f32 %v2106, %v2107
    %v2109 = vadd.f32 %v1911, %v1913
    %v2110 = vadd.f32 %v2109, %v1915
    %v2111 = vadd.f32 %v2110, %v1917
    %v2112 = vadd.f32 %v2111, %v1919
    %v2113 = vadd.f32 %v2112, %v1921
    %v2114 = vadd.f32 %v2113, %v1923
    %v2115 = vadd.f32 %v2114, %v1925
    %v2116 = vrot.slane %v2115, 4
    %v2117 = vadd.f32 %v2115, %v2116
    %v2118 = vrot.slane %v2117, 2
    %v2119 = vadd.f32 %v2117, %v2118
    %v2120 = vrot.slane %v2119, 1
    %v2121 = vadd.f32 %v2119, %v2120
    %v2122 = vadd.f32 %v1912, %v1914
    %v2123 = vadd.f32 %v2122, %v1916
    %v2124 = vadd.f32 %v2123, %v1918
    %v2125 = vadd.f32 %v2124, %v1920
    %v2126 = vadd.f32 %v2125, %v1922
    %v2127 = vadd.f32 %v2126, %v1924
    %v2128 = vadd.f32 %v2127, %v1926
    %v2129 = vrot.slane %v2128, 4
    %v2130 = vadd.f32 %v2128, %v2129
    %v2131 = vrot.slane %v2130, 2
    %v2132 = vadd.f32 %v2130, %v2131
    %v2133 = vrot.slane %v2132, 1
    %v2134 = vadd.f32 %v2132, %v2133
    %v2135 = vld [vmem:[%s3 + $0x100] sm:$0xff]
    %v2136 = vld [vmem:[%s3 + $0x108] sm:$0xff]
    %v2137 = vld [vmem:[%s3 + $0x110] sm:$0xff]
    %v2138 = vld [vmem:[%s3 + $0x118] sm:$0xff]
    %v2139 = vld [vmem:[%s3 + $0x120] sm:$0xff]
    %v2140 = vld [vmem:[%s3 + $0x128] sm:$0xff]
    %v2141 = vld [vmem:[%s3 + $0x130] sm:$0xff]
    %v2142 = vld [vmem:[%s3 + $0x138] sm:$0xff]
    %v2143 = vld [vmem:[%s3 + $0x140] sm:$0xff]
    %v2144 = vld [vmem:[%s3 + $0x148] sm:$0xff]
    %v2145 = vld [vmem:[%s3 + $0x150] sm:$0xff]
    %v2146 = vld [vmem:[%s3 + $0x158] sm:$0xff]
    %v2147 = vld [vmem:[%s3 + $0x160] sm:$0xff]
    %v2148 = vld [vmem:[%s3 + $0x168] sm:$0xff]
    %v2149 = vld [vmem:[%s3 + $0x170] sm:$0xff]
    %v2150 = vld [vmem:[%s3 + $0x178] sm:$0xff]
    %v2151 = vld [vmem:[%s3 + $0x180] sm:$0xff]
    %v2152 = vld [vmem:[%s3 + $0x188] sm:$0xff]
    %v2153 = vld [vmem:[%s3 + $0x190] sm:$0xff]
    %v2154 = vld [vmem:[%s3 + $0x198] sm:$0xff]
    %v2155 = vld [vmem:[%s3 + $0x1a0] sm:$0xff]
    %v2156 = vld [vmem:[%s3 + $0x1a8] sm:$0xff]
    %v2157 = vld [vmem:[%s3 + $0x1b0] sm:$0xff]
    %v2158 = vld [vmem:[%s3 + $0x1b8] sm:$0xff]
    %v2159 = vld [vmem:[%s3 + $0x1c0] sm:$0xff]
    %v2160 = vld [vmem:[%s3 + $0x1c8] sm:$0xff]
    %v2161 = vld [vmem:[%s3 + $0x1d0] sm:$0xff]
    %v2162 = vld [vmem:[%s3 + $0x1d8] sm:$0xff]
    %v2163 = vld [vmem:[%s3 + $0x1e0] sm:$0xff]
    %v2164 = vld [vmem:[%s3 + $0x1e8] sm:$0xff]
    %v2165 = vld [vmem:[%s3 + $0x1f0] sm:$0xff]
    %v2166 = vld [vmem:[%s3 + $0x1f8] sm:$0xff]
    %vm2183 = vcmask 1041409
    %v2184 = vsel %vm2183, %v1965, %v1939
    %vm2185 = vcmask 1042434
    %v2186 = vsel %vm2185, %v1991, %v2184
    %vm2187 = vcmask 1043459
    %v2188 = vsel %vm2187, %v2017, %v2186
    %vm2189 = vcmask 1044484
    %v2190 = vsel %vm2189, %v2043, %v2188
    %vm2191 = vcmask 1045509
    %v2192 = vsel %vm2191, %v2069, %v2190
    %vm2193 = vcmask 1046534
    %v2194 = vsel %vm2193, %v2095, %v2192
    %vm2195 = vcmask 1047559
    %v2196 = vsel %vm2195, %v2121, %v2194
    %v2197 = vsel %vm2183, %v1978, %v1952
    %v2198 = vsel %vm2185, %v2004, %v2197
    %v2199 = vsel %vm2187, %v2030, %v2198
    %v2200 = vsel %vm2189, %v2056, %v2199
    %v2201 = vsel %vm2191, %v2082, %v2200
    %v2202 = vsel %vm2193, %v2108, %v2201
    %v2203 = vsel %vm2195, %v2134, %v2202
    %2206 = vmatprep.subr.mxu0 0.0
    %2207 = vmatpush1.msra.mxu0 %v2135
    %2208 = vmatprep.subr.mxu0 0.0
    %2209 = vmatpush1.msra.mxu0 %v2136
    %2210 = vmatprep.subr.mxu0 0.0
    %2211 = vmatpush1.msra.mxu0 %v2137
    %2212 = vmatprep.subr.mxu0 0.0
    %2213 = vmatpush1.msra.mxu0 %v2138
    %2214 = vmatprep.subr.mxu0 0.0
    %2215 = vmatpush1.msra.mxu0 %v2139
    %2216 = vmatprep.subr.mxu0 0.0
    %2217 = vmatpush1.msra.mxu0 %v2140
    %2218 = vmatprep.subr.mxu0 0.0
    %2219 = vmatpush1.msra.mxu0 %v2141
    %2220 = vmatprep.subr.mxu0 0.0
    %2221 = vmatpush1.msra.mxu0 %v2142
    %2222 = vmatprep.subr.mxu0 0.0
    %2223 = vmatpush1.msra.mxu0 %v2143
    %2224 = vmatprep.subr.mxu0 0.0
    %2225 = vmatpush1.msra.mxu0 %v2144
    %2226 = vmatprep.subr.mxu0 0.0
    %2227 = vmatpush1.msra.mxu0 %v2145
    %2228 = vmatprep.subr.mxu0 0.0
    %2229 = vmatpush1.msra.mxu0 %v2146
    %2230 = vmatprep.subr.mxu0 0.0
    %2231 = vmatpush1.msra.mxu0 %v2147
    %2232 = vmatprep.subr.mxu0 0.0
    %2233 = vmatpush1.msra.mxu0 %v2148
    %2234 = vmatprep.subr.mxu0 0.0
    %2235 = vmatpush1.msra.mxu0 %v2149
    %2236 = vmatprep.subr.mxu0 0.0
    %2237 = vmatpush1.msra.mxu0 %v2150
    %2238 = vmatprep.subr.mxu0 0.0
    %2239 = vmatpush1.msra.mxu0 %v2151
    %2240 = vmatprep.subr.mxu0 0.0
    %2241 = vmatpush1.msra.mxu0 %v2152
    %2242 = vmatprep.subr.mxu0 0.0
    %2243 = vmatpush1.msra.mxu0 %v2153
    %2244 = vmatprep.subr.mxu0 0.0
    %2245 = vmatpush1.msra.mxu0 %v2154
    %2246 = vmatprep.subr.mxu0 0.0
    %2247 = vmatpush1.msra.mxu0 %v2155
    %2248 = vmatprep.subr.mxu0 0.0
    %2249 = vmatpush1.msra.mxu0 %v2156
    %2250 = vmatprep.subr.mxu0 0.0
    %2251 = vmatpush1.msra.mxu0 %v2157
    %2252 = vmatprep.subr.mxu0 0.0
    %2253 = vmatpush1.msra.mxu0 %v2158
    %2254 = vmatprep.subr.mxu0 0.0
    %2255 = vmatpush1.msra.mxu0 %v2159
    %2256 = vmatprep.subr.mxu0 0.0
    %2257 = vmatpush1.msra.mxu0 %v2160
    %2258 = vmatprep.subr.mxu0 0.0
    %2259 = vmatpush1.msra.mxu0 %v2161
    %2260 = vmatprep.subr.mxu0 0.0
    %2261 = vmatpush1.msra.mxu0 %v2162
    %2262 = vmatprep.subr.mxu0 0.0
    %2263 = vmatpush1.msra.mxu0 %v2163
    %2264 = vmatprep.subr.mxu0 0.0
    %2265 = vmatpush1.msra.mxu0 %v2164
    %2266 = vmatprep.subr.mxu0 0.0
    %2267 = vmatpush1.msra.mxu0 %v2165
    %2268 = vmatprep.subr.mxu0 0.0
    %2269 = vmatpush1.msra.mxu0 %v2166
    %2270 = vmatprep.mubr.f32.mxu0 %v2203
    %2271 = vmatmul.mubr.f32.gmra.mrb[0].mxu0 %v2196
    %v2272 = vpop.f32.mrb[0].mxu0
    %v2273 = vadd.f32 0.0, %v2272
    %v2274 = vpop.f32.mrb[0].mxu0
    %2275 = vdwg.mxu0
    %v2292 = vsel %vm2183, %v1136, %v1110
    %v2293 = vsel %vm2185, %v1162, %v2292
    %v2294 = vsel %vm2187, %v1188, %v2293
    %v2295 = vsel %vm2189, %v1214, %v2294
    %v2296 = vsel %vm2191, %v1240, %v2295
    %v2297 = vsel %vm2193, %v1266, %v2296
    %v2298 = vsel %vm2195, %v1292, %v2297
    %v2299 = vsel %vm2183, %v1149, %v1123
    %v2300 = vsel %vm2185, %v1175, %v2299
    %v2301 = vsel %vm2187, %v1201, %v2300
    %v2302 = vsel %vm2189, %v1227, %v2301
    %v2303 = vsel %vm2191, %v1253, %v2302
    %v2304 = vsel %vm2193, %v1279, %v2303
    %v2305 = vsel %vm2195, %v1305, %v2304
    %2308 = vmatprep.subr.mxu0 0.0
    %2309 = vmatpush1.msra.mxu0 %v1306
    %2310 = vmatprep.subr.mxu0 0.0
    %2311 = vmatpush1.msra.mxu0 %v1307
    %2312 = vmatprep.subr.mxu0 0.0
    %2313 = vmatpush1.msra.mxu0 %v1308
    %2314 = vmatprep.subr.mxu0 0.0
    %2315 = vmatpush1.msra.mxu0 %v1309
    %2316 = vmatprep.subr.mxu0 0.0
    %2317 = vmatpush1.msra.mxu0 %v1310
    %2318 = vmatprep.subr.mxu0 0.0
    %2319 = vmatpush1.msra.mxu0 %v1311
    %2320 = vmatprep.subr.mxu0 0.0
    %2321 = vmatpush1.msra.mxu0 %v1312
    %2322 = vmatprep.subr.mxu0 0.0
    %2323 = vmatpush1.msra.mxu0 %v1313
    %2324 = vmatprep.subr.mxu0 0.0
    %2325 = vmatpush1.msra.mxu0 %v1314
    %2326 = vmatprep.subr.mxu0 0.0
    %2327 = vmatpush1.msra.mxu0 %v1315
    %2328 = vmatprep.subr.mxu0 0.0
    %2329 = vmatpush1.msra.mxu0 %v1316
    %2330 = vmatprep.subr.mxu0 0.0
    %2331 = vmatpush1.msra.mxu0 %v1317
    %2332 = vmatprep.subr.mxu0 0.0
    %2333 = vmatpush1.msra.mxu0 %v1318
    %2334 = vmatprep.subr.mxu0 0.0
    %2335 = vmatpush1.msra.mxu0 %v1319
    %2336 = vmatprep.subr.mxu0 0.0
    %2337 = vmatpush1.msra.mxu0 %v1320
    %2338 = vmatprep.subr.mxu0 0.0
    %2339 = vmatpush1.msra.mxu0 %v1321
    %2340 = vmatprep.subr.mxu0 0.0
    %2341 = vmatpush1.msra.mxu0 %v1322
    %2342 = vmatprep.subr.mxu0 0.0
    %2343 = vmatpush1.msra.mxu0 %v1323
    %2344 = vmatprep.subr.mxu0 0.0
    %2345 = vmatpush1.msra.mxu0 %v1324
    %2346 = vmatprep.subr.mxu0 0.0
    %2347 = vmatpush1.msra.mxu0 %v1325
    %2348 = vmatprep.subr.mxu0 0.0
    %2349 = vmatpush1.msra.mxu0 %v1326
    %2350 = vmatprep.subr.mxu0 0.0
    %2351 = vmatpush1.msra.mxu0 %v1327
    %2352 = vmatprep.subr.mxu0 0.0
    %2353 = vmatpush1.msra.mxu0 %v1328
    %2354 = vmatprep.subr.mxu0 0.0
    %2355 = vmatpush1.msra.mxu0 %v1329
    %2356 = vmatprep.subr.mxu0 0.0
    %2357 = vmatpush1.msra.mxu0 %v1330
    %2358 = vmatprep.subr.mxu0 0.0
    %2359 = vmatpush1.msra.mxu0 %v1331
    %2360 = vmatprep.subr.mxu0 0.0
    %2361 = vmatpush1.msra.mxu0 %v1332
    %2362 = vmatprep.subr.mxu0 0.0
    %2363 = vmatpush1.msra.mxu0 %v1333
    %2364 = vmatprep.subr.mxu0 0.0
    %2365 = vmatpush1.msra.mxu0 %v1334
    %2366 = vmatprep.subr.mxu0 0.0
    %2367 = vmatpush1.msra.mxu0 %v1335
    %2368 = vmatprep.subr.mxu0 0.0
    %2369 = vmatpush1.msra.mxu0 %v1336
    %2370 = vmatprep.subr.mxu0 0.0
    %2371 = vmatpush1.msra.mxu0 %v1337
    %2372 = vmatprep.mubr.f32.mxu0 %v2305
    %2373 = vmatmul.mubr.f32.gmra.mrb[0].mxu0 %v2298
    %v2374 = vpop.f32.mrb[0].mxu0
    %v2375 = vadd.f32 %v2273, %v2374
    %v2376 = vpop.f32.mrb[0].mxu0
    %2377 = vdwg.mxu0
    %v2378 = vld [vmem:[%s1 + $0x10] sm:$0xff]
    %v2379 = vld [vmem:[%s1 + $0x38] sm:$0xff]
    %v2380 = vld [vmem:[%s1 + $0x60] sm:$0xff]
    %v2381 = vld [vmem:[%s1 + $0x88] sm:$0xff]
    %v2382 = vld [vmem:[%s1 + $0xb0] sm:$0xff]
    %v2383 = vld [vmem:[%s1 + $0xd8] sm:$0xff]
    %v2384 = vld [vmem:[%s1 + $0x100] sm:$0xff]
    %v2385 = vld [vmem:[%s1 + $0x128] sm:$0xff]
    %v2386 = vld [vmem:[%s1 + $0x150] sm:$0xff]
    %v2387 = vld [vmem:[%s1 + $0x178] sm:$0xff]
    %v2388 = vld [vmem:[%s1 + $0x1a0] sm:$0xff]
    %v2389 = vld [vmem:[%s1 + $0x1c8] sm:$0xff]
    %v2390 = vld [vmem:[%s1 + $0x1f0] sm:$0xff]
    %v2391 = vld [vmem:[%s1 + $0x218] sm:$0xff]
    %v2392 = vld [vmem:[%s1 + $0x240] sm:$0xff]
    %v2393 = vld [vmem:[%s1 + $0x268] sm:$0xff]
    %v2394 = vld [vmem:[%s2 + $0x4] sm:$0x3]
    %v2396 = vlaneseq
    %v2397 = vshrl.u32 %v2396, 7
    %v2398 = vsub.s32 0, %v2397
    %v2399 = vrot.slane %v2394, %v2398
    %v2400 = vlaneseq
    %v2401 = vshrl.u32 %v2400, 7
    %v2402 = vsub.s32 1, %v2401
    %v2403 = vrot.slane %v2394, %v2402
    %v2422 = vunpack.c.l.b16 %v2378
    %v2423 = vunpack.c.h.b16 %v2378
    %v2424 = vunpack.c.l.b16 %v2379
    %v2425 = vunpack.c.h.b16 %v2379
    %v2426 = vunpack.c.l.b16 %v2380
    %v2427 = vunpack.c.h.b16 %v2380
    %v2428 = vunpack.c.l.b16 %v2381
    %v2429 = vunpack.c.h.b16 %v2381
    %v2430 = vunpack.c.l.b16 %v2382
    %v2431 = vunpack.c.h.b16 %v2382
    %v2432 = vunpack.c.l.b16 %v2383
    %v2433 = vunpack.c.h.b16 %v2383
    %v2434 = vunpack.c.l.b16 %v2384
    %v2435 = vunpack.c.h.b16 %v2384
    %v2436 = vunpack.c.l.b16 %v2385
    %v2437 = vunpack.c.h.b16 %v2385
    %v2438 = vunpack.c.l.b16 %v2386
    %v2439 = vunpack.c.h.b16 %v2386
    %v2440 = vunpack.c.l.b16 %v2387
    %v2441 = vunpack.c.h.b16 %v2387
    %v2442 = vunpack.c.l.b16 %v2388
    %v2443 = vunpack.c.h.b16 %v2388
    %v2444 = vunpack.c.l.b16 %v2389
    %v2445 = vunpack.c.h.b16 %v2389
    %v2446 = vunpack.c.l.b16 %v2390
    %v2447 = vunpack.c.h.b16 %v2390
    %v2448 = vunpack.c.l.b16 %v2391
    %v2449 = vunpack.c.h.b16 %v2391
    %v2450 = vunpack.c.l.b16 %v2392
    %v2451 = vunpack.c.h.b16 %v2392
    %v2452 = vunpack.c.l.b16 %v2393
    %v2453 = vunpack.c.h.b16 %v2393
    %v2454 = vpack.c.b16 %v2424, %v2422
    %v2455 = vpack.c.b16 %v2425, %v2423
    %v2456 = vpack.c.b16 %v2428, %v2426
    %v2457 = vpack.c.b16 %v2429, %v2427
    %v2458 = vpack.c.b16 %v2432, %v2430
    %v2459 = vpack.c.b16 %v2433, %v2431
    %v2460 = vpack.c.b16 %v2436, %v2434
    %v2461 = vpack.c.b16 %v2437, %v2435
    %v2462 = vpack.c.b16 %v2440, %v2438
    %v2463 = vpack.c.b16 %v2441, %v2439
    %v2464 = vpack.c.b16 %v2444, %v2442
    %v2465 = vpack.c.b16 %v2445, %v2443
    %v2466 = vpack.c.b16 %v2448, %v2446
    %v2467 = vpack.c.b16 %v2449, %v2447
    %v2468 = vpack.c.b16 %v2452, %v2450
    %v2469 = vpack.c.b16 %v2453, %v2451
    %2486 = vmatprep.subr.bf16.mxu0 %v2455
    %2487 = vmatpush1.bf16.msra.mxu0 %v2454
    %2488 = vmatprep.subr.bf16.mxu0 %v2457
    %2489 = vmatpush1.bf16.msra.mxu0 %v2456
    %2490 = vmatprep.subr.bf16.mxu0 %v2459
    %2491 = vmatpush1.bf16.msra.mxu0 %v2458
    %2492 = vmatprep.subr.bf16.mxu0 %v2461
    %2493 = vmatpush1.bf16.msra.mxu0 %v2460
    %2494 = vmatprep.subr.bf16.mxu0 %v2463
    %2495 = vmatpush1.bf16.msra.mxu0 %v2462
    %2496 = vmatprep.subr.bf16.mxu0 %v2465
    %2497 = vmatpush1.bf16.msra.mxu0 %v2464
    %2498 = vmatprep.subr.bf16.mxu0 %v2467
    %2499 = vmatpush1.bf16.msra.mxu0 %v2466
    %2500 = vmatprep.subr.bf16.mxu0 %v2469
    %2501 = vmatpush1.bf16.msra.mxu0 %v2468
    %2502 = vmatprep.subr.bf16.mxu0 0
    %2503 = vmatpush1.bf16.msra.mxu0 0
    %2504 = vmatprep.subr.bf16.mxu0 0
    %2505 = vmatpush1.bf16.msra.mxu0 0
    %2506 = vmatprep.subr.bf16.mxu0 0
    %2507 = vmatpush1.bf16.msra.mxu0 0
    %2508 = vmatprep.subr.bf16.mxu0 0
    %2509 = vmatpush1.bf16.msra.mxu0 0
    %2510 = vmatprep.subr.bf16.mxu0 0
    %2511 = vmatpush1.bf16.msra.mxu0 0
    %2512 = vmatprep.subr.bf16.mxu0 0
    %2513 = vmatpush1.bf16.msra.mxu0 0
    %2514 = vmatprep.subr.bf16.mxu0 0
    %2515 = vmatpush1.bf16.msra.mxu0 0
    %2516 = vmatprep.subr.bf16.mxu0 0
    %2517 = vmatpush1.bf16.msra.mxu0 0
    %2518 = vmatprep.mubr.bf16.mxu0 0
    %2519 = vmatmul.mubr.bf16.gmra.mrb[0].mxu0 %v477
    %v2520 = vpop.f32.mrb[0].mxu0
    %v2521 = vadd.f32 %v2399, %v2520
    %v2522 = vpop.f32.mrb[0].mxu0
    %v2523 = vadd.f32 %v2403, %v2522
    %v2524 = vpop.f32.mrb[0].mxu0
    %v2525 = vadd.f32 %v2399, %v2524
    %v2526 = vpop.f32.mrb[0].mxu0
    %v2527 = vadd.f32 %v2403, %v2526
    %2528 = vmatprep.mubr.bf16.mxu0 0
    %2529 = vmatmul.mubr.bf16.gmra.mrb[0].mxu0 %v478
    %v2530 = vpop.f32.mrb[0].mxu0
    %v2531 = vadd.f32 %v2399, %v2530
    %v2532 = vpop.f32.mrb[0].mxu0
    %v2533 = vadd.f32 %v2403, %v2532
    %v2534 = vpop.f32.mrb[0].mxu0
    %v2535 = vadd.f32 %v2399, %v2534
    %v2536 = vpop.f32.mrb[0].mxu0
    %v2537 = vadd.f32 %v2403, %v2536
    %2538 = vmatprep.mubr.bf16.mxu0 0
    %2539 = vmatmul.mubr.bf16.gmra.mrb[0].mxu0 %v479
    %v2540 = vpop.f32.mrb[0].mxu0
    %v2541 = vadd.f32 %v2399, %v2540
    %v2542 = vpop.f32.mrb[0].mxu0
    %v2543 = vadd.f32 %v2403, %v2542
    %v2544 = vpop.f32.mrb[0].mxu0
    %v2545 = vadd.f32 %v2399, %v2544
    %v2546 = vpop.f32.mrb[0].mxu0
    %v2547 = vadd.f32 %v2403, %v2546
    %2548 = vmatprep.mubr.bf16.mxu0 0
    %2549 = vmatmul.mubr.bf16.gmra.mrb[0].mxu0 %v480
    %v2550 = vpop.f32.mrb[0].mxu0
    %v2551 = vadd.f32 %v2399, %v2550
    %v2552 = vpop.f32.mrb[0].mxu0
    %v2553 = vadd.f32 %v2403, %v2552
    %v2554 = vpop.f32.mrb[0].mxu0
    %v2555 = vadd.f32 %v2399, %v2554
    %v2556 = vpop.f32.mrb[0].mxu0
    %v2557 = vadd.f32 %v2403, %v2556
    %2558 = vmatprep.mubr.bf16.mxu0 0
    %2559 = vmatmul.mubr.bf16.gmra.mrb[0].mxu0 %v481
    %v2560 = vpop.f32.mrb[0].mxu0
    %v2561 = vadd.f32 %v2399, %v2560
    %v2562 = vpop.f32.mrb[0].mxu0
    %v2563 = vadd.f32 %v2403, %v2562
    %v2564 = vpop.f32.mrb[0].mxu0
    %v2565 = vadd.f32 %v2399, %v2564
    %v2566 = vpop.f32.mrb[0].mxu0
    %v2567 = vadd.f32 %v2403, %v2566
    %2568 = vmatprep.mubr.bf16.mxu0 0
    %2569 = vmatmul.mubr.bf16.gmra.mrb[0].mxu0 %v482
    %v2570 = vpop.f32.mrb[0].mxu0
    %v2571 = vadd.f32 %v2399, %v2570
    %v2572 = vpop.f32.mrb[0].mxu0
    %v2573 = vadd.f32 %v2403, %v2572
    %v2574 = vpop.f32.mrb[0].mxu0
    %v2575 = vadd.f32 %v2399, %v2574
    %v2576 = vpop.f32.mrb[0].mxu0
    %v2577 = vadd.f32 %v2403, %v2576
    %2578 = vmatprep.mubr.bf16.mxu0 0
    %2579 = vmatmul.mubr.bf16.gmra.mrb[0].mxu0 %v483
    %v2580 = vpop.f32.mrb[0].mxu0
    %v2581 = vadd.f32 %v2399, %v2580
    %v2582 = vpop.f32.mrb[0].mxu0
    %v2583 = vadd.f32 %v2403, %v2582
    %v2584 = vpop.f32.mrb[0].mxu0
    %v2585 = vadd.f32 %v2399, %v2584
    %v2586 = vpop.f32.mrb[0].mxu0
    %v2587 = vadd.f32 %v2403, %v2586
    %2588 = vmatprep.mubr.bf16.mxu0 0
    %2589 = vmatmul.mubr.bf16.gmra.mrb[0].mxu0 %v484
    %v2590 = vpop.f32.mrb[0].mxu0
    %v2591 = vadd.f32 %v2399, %v2590
    %v2592 = vpop.f32.mrb[0].mxu0
    %v2593 = vadd.f32 %v2403, %v2592
    %v2594 = vpop.f32.mrb[0].mxu0
    %v2595 = vadd.f32 %v2399, %v2594
    %v2596 = vpop.f32.mrb[0].mxu0
    %v2597 = vadd.f32 %v2403, %v2596
    %2598 = vmatprep.mubr.bf16.mxu0 0
    %2599 = vmatmul.mubr.bf16.gmra.mrb[0].mxu0 %v485
    %v2600 = vpop.f32.mrb[0].mxu0
    %v2601 = vadd.f32 %v2399, %v2600
    %v2602 = vpop.f32.mrb[0].mxu0
    %v2603 = vadd.f32 %v2403, %v2602
    %v2604 = vpop.f32.mrb[0].mxu0
    %v2605 = vadd.f32 %v2399, %v2604
    %v2606 = vpop.f32.mrb[0].mxu0
    %v2607 = vadd.f32 %v2403, %v2606
    %2608 = vmatprep.mubr.bf16.mxu0 0
    %2609 = vmatmul.mubr.bf16.gmra.mrb[0].mxu0 %v486
    %v2610 = vpop.f32.mrb[0].mxu0
    %v2611 = vadd.f32 %v2399, %v2610
    %v2612 = vpop.f32.mrb[0].mxu0
    %v2613 = vadd.f32 %v2403, %v2612
    %v2614 = vpop.f32.mrb[0].mxu0
    %v2615 = vadd.f32 %v2399, %v2614
    %v2616 = vpop.f32.mrb[0].mxu0
    %v2617 = vadd.f32 %v2403, %v2616
    %2618 = vmatprep.mubr.bf16.mxu0 0
    %2619 = vmatmul.mubr.bf16.gmra.mrb[0].mxu0 %v487
    %v2620 = vpop.f32.mrb[0].mxu0
    %v2621 = vadd.f32 %v2399, %v2620
    %v2622 = vpop.f32.mrb[0].mxu0
    %v2623 = vadd.f32 %v2403, %v2622
    %v2624 = vpop.f32.mrb[0].mxu0
    %v2625 = vadd.f32 %v2399, %v2624
    %v2626 = vpop.f32.mrb[0].mxu0
    %v2627 = vadd.f32 %v2403, %v2626
    %2628 = vmatprep.mubr.bf16.mxu0 0
    %2629 = vmatmul.mubr.bf16.gmra.mrb[0].mxu0 %v488
    %v2630 = vpop.f32.mrb[0].mxu0
    %v2631 = vadd.f32 %v2399, %v2630
    %v2632 = vpop.f32.mrb[0].mxu0
    %v2633 = vadd.f32 %v2403, %v2632
    %v2634 = vpop.f32.mrb[0].mxu0
    %v2635 = vadd.f32 %v2399, %v2634
    %v2636 = vpop.f32.mrb[0].mxu0
    %v2637 = vadd.f32 %v2403, %v2636
    %2638 = vmatprep.mubr.bf16.mxu0 0
    %2639 = vmatmul.mubr.bf16.gmra.mrb[0].mxu0 %v489
    %v2640 = vpop.f32.mrb[0].mxu0
    %v2641 = vadd.f32 %v2399, %v2640
    %v2642 = vpop.f32.mrb[0].mxu0
    %v2643 = vadd.f32 %v2403, %v2642
    %v2644 = vpop.f32.mrb[0].mxu0
    %v2645 = vadd.f32 %v2399, %v2644
    %v2646 = vpop.f32.mrb[0].mxu0
    %v2647 = vadd.f32 %v2403, %v2646
    %2648 = vmatprep.mubr.bf16.mxu0 0
    %2649 = vmatmul.mubr.bf16.gmra.mrb[0].mxu0 %v490
    %v2650 = vpop.f32.mrb[0].mxu0
    %v2651 = vadd.f32 %v2399, %v2650
    %v2652 = vpop.f32.mrb[0].mxu0
    %v2653 = vadd.f32 %v2403, %v2652
    %v2654 = vpop.f32.mrb[0].mxu0
    %v2655 = vadd.f32 %v2399, %v2654
    %v2656 = vpop.f32.mrb[0].mxu0
    %v2657 = vadd.f32 %v2403, %v2656
    %2658 = vmatprep.mubr.bf16.mxu0 0
    %2659 = vmatmul.mubr.bf16.gmra.mrb[0].mxu0 %v491
    %v2660 = vpop.f32.mrb[0].mxu0
    %v2661 = vadd.f32 %v2399, %v2660
    %v2662 = vpop.f32.mrb[0].mxu0
    %v2663 = vadd.f32 %v2403, %v2662
    %v2664 = vpop.f32.mrb[0].mxu0
    %v2665 = vadd.f32 %v2399, %v2664
    %v2666 = vpop.f32.mrb[0].mxu0
    %v2667 = vadd.f32 %v2403, %v2666
    %2668 = vmatprep.mubr.bf16.mxu0 0
    %2669 = vmatmul.mubr.bf16.gmra.mrb[0].mxu0 %v492
    %v2670 = vpop.f32.mrb[0].mxu0
    %v2671 = vadd.f32 %v2399, %v2670
    %v2672 = vpop.f32.mrb[0].mxu0
    %v2673 = vadd.f32 %v2403, %v2672
    %v2674 = vpop.f32.mrb[0].mxu0
    %v2675 = vadd.f32 %v2399, %v2674
    %v2676 = vpop.f32.mrb[0].mxu0
    %v2677 = vadd.f32 %v2403, %v2676
    %2678 = vmatprep.mubr.bf16.mxu0 0
    %2679 = vmatmul.mubr.bf16.gmra.mrb[0].mxu0 %v493
    %v2680 = vpop.f32.mrb[0].mxu0
    %v2681 = vadd.f32 %v2399, %v2680
    %v2682 = vpop.f32.mrb[0].mxu0
    %v2683 = vadd.f32 %v2403, %v2682
    %v2684 = vpop.f32.mrb[0].mxu0
    %v2685 = vadd.f32 %v2399, %v2684
    %v2686 = vpop.f32.mrb[0].mxu0
    %v2687 = vadd.f32 %v2403, %v2686
    %2688 = vmatprep.mubr.bf16.mxu0 0
    %2689 = vmatmul.mubr.bf16.gmra.mrb[0].mxu0 %v494
    %v2690 = vpop.f32.mrb[0].mxu0
    %v2691 = vadd.f32 %v2399, %v2690
    %v2692 = vpop.f32.mrb[0].mxu0
    %v2693 = vadd.f32 %v2403, %v2692
    %v2694 = vpop.f32.mrb[0].mxu0
    %v2695 = vadd.f32 %v2399, %v2694
    %v2696 = vpop.f32.mrb[0].mxu0
    %v2697 = vadd.f32 %v2403, %v2696
    %2698 = vmatprep.mubr.bf16.mxu0 0
    %2699 = vmatmul.mubr.bf16.gmra.mrb[0].mxu0 %v495
    %v2700 = vpop.f32.mrb[0].mxu0
    %v2701 = vadd.f32 %v2399, %v2700
    %v2702 = vpop.f32.mrb[0].mxu0
    %v2703 = vadd.f32 %v2403, %v2702
    %v2704 = vpop.f32.mrb[0].mxu0
    %v2705 = vadd.f32 %v2399, %v2704
    %v2706 = vpop.f32.mrb[0].mxu0
    %v2707 = vadd.f32 %v2403, %v2706
    %2708 = vmatprep.mubr.bf16.mxu0 0
    %2709 = vmatmul.mubr.bf16.gmra.mrb[0].mxu0 %v496
    %v2710 = vpop.f32.mrb[0].mxu0
    %v2711 = vadd.f32 %v2399, %v2710
    %v2712 = vpop.f32.mrb[0].mxu0
    %v2713 = vadd.f32 %v2403, %v2712
    %v2714 = vpop.f32.mrb[0].mxu0
    %v2715 = vadd.f32 %v2399, %v2714
    %v2716 = vpop.f32.mrb[0].mxu0
    %v2717 = vadd.f32 %v2403, %v2716
    %2718 = vmatprep.mubr.bf16.mxu0 0
    %2719 = vmatmul.mubr.bf16.gmra.mrb[0].mxu0 %v497
    %v2720 = vpop.f32.mrb[0].mxu0
    %v2721 = vadd.f32 %v2399, %v2720
    %v2722 = vpop.f32.mrb[0].mxu0
    %v2723 = vadd.f32 %v2403, %v2722
    %v2724 = vpop.f32.mrb[0].mxu0
    %v2725 = vadd.f32 %v2399, %v2724
    %v2726 = vpop.f32.mrb[0].mxu0
    %v2727 = vadd.f32 %v2403, %v2726
    %2728 = vmatprep.mubr.bf16.mxu0 0
    %2729 = vmatmul.mubr.bf16.gmra.mrb[0].mxu0 %v498
    %v2730 = vpop.f32.mrb[0].mxu0
    %v2731 = vadd.f32 %v2399, %v2730
    %v2732 = vpop.f32.mrb[0].mxu0
    %v2733 = vadd.f32 %v2403, %v2732
    %v2734 = vpop.f32.mrb[0].mxu0
    %v2735 = vadd.f32 %v2399, %v2734
    %v2736 = vpop.f32.mrb[0].mxu0
    %v2737 = vadd.f32 %v2403, %v2736
    %2738 = vmatprep.mubr.bf16.mxu0 0
    %2739 = vmatmul.mubr.bf16.gmra.mrb[0].mxu0 %v499
    %v2740 = vpop.f32.mrb[0].mxu0
    %v2741 = vadd.f32 %v2399, %v2740
    %v2742 = vpop.f32.mrb[0].mxu0
    %v2743 = vadd.f32 %v2403, %v2742
    %v2744 = vpop.f32.mrb[0].mxu0
    %v2745 = vadd.f32 %v2399, %v2744
    %v2746 = vpop.f32.mrb[0].mxu0
    %v2747 = vadd.f32 %v2403, %v2746
    %2748 = vmatprep.mubr.bf16.mxu0 0
    %2749 = vmatmul.mubr.bf16.gmra.mrb[0].mxu0 %v500
    %v2750 = vpop.f32.mrb[0].mxu0
    %v2751 = vadd.f32 %v2399, %v2750
    %v2752 = vpop.f32.mrb[0].mxu0
    %v2753 = vadd.f32 %v2403, %v2752
    %v2754 = vpop.f32.mrb[0].mxu0
    %v2755 = vadd.f32 %v2399, %v2754
    %v2756 = vpop.f32.mrb[0].mxu0
    %v2757 = vadd.f32 %v2403, %v2756
    %2758 = vmatprep.mubr.bf16.mxu0 0
    %2759 = vmatmul.mubr.bf16.gmra.mrb[0].mxu0 %v501
    %v2760 = vpop.f32.mrb[0].mxu0
    %v2761 = vadd.f32 %v2399, %v2760
    %v2762 = vpop.f32.mrb[0].mxu0
    %v2763 = vadd.f32 %v2403, %v2762
    %v2764 = vpop.f32.mrb[0].mxu0
    %v2765 = vadd.f32 %v2399, %v2764
    %v2766 = vpop.f32.mrb[0].mxu0
    %v2767 = vadd.f32 %v2403, %v2766
    %2768 = vmatprep.mubr.bf16.mxu0 0
    %2769 = vmatmul.mubr.bf16.gmra.mrb[0].mxu0 %v502
    %v2770 = vpop.f32.mrb[0].mxu0
    %v2771 = vadd.f32 %v2399, %v2770
    %v2772 = vpop.f32.mrb[0].mxu0
    %v2773 = vadd.f32 %v2403, %v2772
    %v2774 = vpop.f32.mrb[0].mxu0
    %v2775 = vadd.f32 %v2399, %v2774
    %v2776 = vpop.f32.mrb[0].mxu0
    %v2777 = vadd.f32 %v2403, %v2776
    %2778 = vmatprep.mubr.bf16.mxu0 0
    %2779 = vmatmul.mubr.bf16.gmra.mrb[0].mxu0 %v503
    %v2780 = vpop.f32.mrb[0].mxu0
    %v2781 = vadd.f32 %v2399, %v2780
    %v2782 = vpop.f32.mrb[0].mxu0
    %v2783 = vadd.f32 %v2403, %v2782
    %v2784 = vpop.f32.mrb[0].mxu0
    %v2785 = vadd.f32 %v2399, %v2784
    %v2786 = vpop.f32.mrb[0].mxu0
    %v2787 = vadd.f32 %v2403, %v2786
    %2788 = vmatprep.mubr.bf16.mxu0 0
    %2789 = vmatmul.mubr.bf16.gmra.mrb[0].mxu0 %v504
    %v2790 = vpop.f32.mrb[0].mxu0
    %v2791 = vadd.f32 %v2399, %v2790
    %v2792 = vpop.f32.mrb[0].mxu0
    %v2793 = vadd.f32 %v2403, %v2792
    %v2794 = vpop.f32.mrb[0].mxu0
    %v2795 = vadd.f32 %v2399, %v2794
    %v2796 = vpop.f32.mrb[0].mxu0
    %v2797 = vadd.f32 %v2403, %v2796
    %2798 = vmatprep.mubr.bf16.mxu0 0
    %2799 = vmatmul.mubr.bf16.gmra.mrb[0].mxu0 %v505
    %v2800 = vpop.f32.mrb[0].mxu0
    %v2801 = vadd.f32 %v2399, %v2800
    %v2802 = vpop.f32.mrb[0].mxu0
    %v2803 = vadd.f32 %v2403, %v2802
    %v2804 = vpop.f32.mrb[0].mxu0
    %v2805 = vadd.f32 %v2399, %v2804
    %v2806 = vpop.f32.mrb[0].mxu0
    %v2807 = vadd.f32 %v2403, %v2806
    %2808 = vmatprep.mubr.bf16.mxu0 0
    %2809 = vmatmul.mubr.bf16.gmra.mrb[0].mxu0 %v506
    %v2810 = vpop.f32.mrb[0].mxu0
    %v2811 = vadd.f32 %v2399, %v2810
    %v2812 = vpop.f32.mrb[0].mxu0
    %v2813 = vadd.f32 %v2403, %v2812
    %v2814 = vpop.f32.mrb[0].mxu0
    %v2815 = vadd.f32 %v2399, %v2814
    %v2816 = vpop.f32.mrb[0].mxu0
    %v2817 = vadd.f32 %v2403, %v2816
    %2818 = vmatprep.mubr.bf16.mxu0 0
    %2819 = vmatmul.mubr.bf16.gmra.mrb[0].mxu0 %v507
    %v2820 = vpop.f32.mrb[0].mxu0
    %v2821 = vadd.f32 %v2399, %v2820
    %v2822 = vpop.f32.mrb[0].mxu0
    %v2823 = vadd.f32 %v2403, %v2822
    %v2824 = vpop.f32.mrb[0].mxu0
    %v2825 = vadd.f32 %v2399, %v2824
    %v2826 = vpop.f32.mrb[0].mxu0
    %v2827 = vadd.f32 %v2403, %v2826
    %2828 = vmatprep.mubr.bf16.mxu0 0
    %2829 = vmatmul.mubr.bf16.gmra.mrb[0].mxu0 %v508
    %v2830 = vpop.f32.mrb[0].mxu0
    %v2831 = vadd.f32 %v2399, %v2830
    %v2832 = vpop.f32.mrb[0].mxu0
    %v2833 = vadd.f32 %v2403, %v2832
    %v2834 = vpop.f32.mrb[0].mxu0
    %v2835 = vadd.f32 %v2399, %v2834
    %v2836 = vpop.f32.mrb[0].mxu0
    %v2837 = vadd.f32 %v2403, %v2836
    %2838 = vdwg.mxu0
    %v2839 = vmax.f32 %v2521, 0.0
    %v2840 = vmax.f32 %v2523, 0.0
    %v2841 = vmax.f32 %v2525, 0.0
    %v2842 = vmax.f32 %v2527, 0.0
    %v2843 = vmax.f32 %v2531, 0.0
    %v2844 = vmax.f32 %v2533, 0.0
    %v2845 = vmax.f32 %v2535, 0.0
    %v2846 = vmax.f32 %v2537, 0.0
    %v2847 = vmax.f32 %v2541, 0.0
    %v2848 = vmax.f32 %v2543, 0.0
    %v2849 = vmax.f32 %v2545, 0.0
    %v2850 = vmax.f32 %v2547, 0.0
    %v2851 = vmax.f32 %v2551, 0.0
    %v2852 = vmax.f32 %v2553, 0.0
    %v2853 = vmax.f32 %v2555, 0.0
    %v2854 = vmax.f32 %v2557, 0.0
    %v2855 = vmax.f32 %v2561, 0.0
    %v2856 = vmax.f32 %v2563, 0.0
    %v2857 = vmax.f32 %v2565, 0.0
    %v2858 = vmax.f32 %v2567, 0.0
    %v2859 = vmax.f32 %v2571, 0.0
    %v2860 = vmax.f32 %v2573, 0.0
    %v2861 = vmax.f32 %v2575, 0.0
    %v2862 = vmax.f32 %v2577, 0.0
    %v2863 = vmax.f32 %v2581, 0.0
    %v2864 = vmax.f32 %v2583, 0.0
    %v2865 = vmax.f32 %v2585, 0.0
    %v2866 = vmax.f32 %v2587, 0.0
    %v2867 = vmax.f32 %v2591, 0.0
    %v2868 = vmax.f32 %v2593, 0.0
    %v2869 = vmax.f32 %v2595, 0.0
    %v2870 = vmax.f32 %v2597, 0.0
    %v2871 = vmax.f32 %v2601, 0.0
    %v2872 = vmax.f32 %v2603, 0.0
    %v2873 = vmax.f32 %v2605, 0.0
    %v2874 = vmax.f32 %v2607, 0.0
    %v2875 = vmax.f32 %v2611, 0.0
    %v2876 = vmax.f32 %v2613, 0.0
    %v2877 = vmax.f32 %v2615, 0.0
    %v2878 = vmax.f32 %v2617, 0.0
    %v2879 = vmax.f32 %v2621, 0.0
    %v2880 = vmax.f32 %v2623, 0.0
    %v2881 = vmax.f32 %v2625, 0.0
    %v2882 = vmax.f32 %v2627, 0.0
    %v2883 = vmax.f32 %v2631, 0.0
    %v2884 = vmax.f32 %v2633, 0.0
    %v2885 = vmax.f32 %v2635, 0.0
    %v2886 = vmax.f32 %v2637, 0.0
    %v2887 = vmax.f32 %v2641, 0.0
    %v2888 = vmax.f32 %v2643, 0.0
    %v2889 = vmax.f32 %v2645, 0.0
    %v2890 = vmax.f32 %v2647, 0.0
    %v2891 = vmax.f32 %v2651, 0.0
    %v2892 = vmax.f32 %v2653, 0.0
    %v2893 = vmax.f32 %v2655, 0.0
    %v2894 = vmax.f32 %v2657, 0.0
    %v2895 = vmax.f32 %v2661, 0.0
    %v2896 = vmax.f32 %v2663, 0.0
    %v2897 = vmax.f32 %v2665, 0.0
    %v2898 = vmax.f32 %v2667, 0.0
    %v2899 = vmax.f32 %v2671, 0.0
    %v2900 = vmax.f32 %v2673, 0.0
    %v2901 = vmax.f32 %v2675, 0.0
    %v2902 = vmax.f32 %v2677, 0.0
    %v2903 = vmax.f32 %v2681, 0.0
    %v2904 = vmax.f32 %v2683, 0.0
    %v2905 = vmax.f32 %v2685, 0.0
    %v2906 = vmax.f32 %v2687, 0.0
    %v2907 = vmax.f32 %v2691, 0.0
    %v2908 = vmax.f32 %v2693, 0.0
    %v2909 = vmax.f32 %v2695, 0.0
    %v2910 = vmax.f32 %v2697, 0.0
    %v2911 = vmax.f32 %v2701, 0.0
    %v2912 = vmax.f32 %v2703, 0.0
    %v2913 = vmax.f32 %v2705, 0.0
    %v2914 = vmax.f32 %v2707, 0.0
    %v2915 = vmax.f32 %v2711, 0.0
    %v2916 = vmax.f32 %v2713, 0.0
    %v2917 = vmax.f32 %v2715, 0.0
    %v2918 = vmax.f32 %v2717, 0.0
    %v2919 = vmax.f32 %v2721, 0.0
    %v2920 = vmax.f32 %v2723, 0.0
    %v2921 = vmax.f32 %v2725, 0.0
    %v2922 = vmax.f32 %v2727, 0.0
    %v2923 = vmax.f32 %v2731, 0.0
    %v2924 = vmax.f32 %v2733, 0.0
    %v2925 = vmax.f32 %v2735, 0.0
    %v2926 = vmax.f32 %v2737, 0.0
    %v2927 = vmax.f32 %v2741, 0.0
    %v2928 = vmax.f32 %v2743, 0.0
    %v2929 = vmax.f32 %v2745, 0.0
    %v2930 = vmax.f32 %v2747, 0.0
    %v2931 = vmax.f32 %v2751, 0.0
    %v2932 = vmax.f32 %v2753, 0.0
    %v2933 = vmax.f32 %v2755, 0.0
    %v2934 = vmax.f32 %v2757, 0.0
    %v2935 = vmax.f32 %v2761, 0.0
    %v2936 = vmax.f32 %v2763, 0.0
    %v2937 = vmax.f32 %v2765, 0.0
    %v2938 = vmax.f32 %v2767, 0.0
    %v2939 = vmax.f32 %v2771, 0.0
    %v2940 = vmax.f32 %v2773, 0.0
    %v2941 = vmax.f32 %v2775, 0.0
    %v2942 = vmax.f32 %v2777, 0.0
    %v2943 = vmax.f32 %v2781, 0.0
    %v2944 = vmax.f32 %v2783, 0.0
    %v2945 = vmax.f32 %v2785, 0.0
    %v2946 = vmax.f32 %v2787, 0.0
    %v2947 = vmax.f32 %v2791, 0.0
    %v2948 = vmax.f32 %v2793, 0.0
    %v2949 = vmax.f32 %v2795, 0.0
    %v2950 = vmax.f32 %v2797, 0.0
    %v2951 = vmax.f32 %v2801, 0.0
    %v2952 = vmax.f32 %v2803, 0.0
    %v2953 = vmax.f32 %v2805, 0.0
    %v2954 = vmax.f32 %v2807, 0.0
    %v2955 = vmax.f32 %v2811, 0.0
    %v2956 = vmax.f32 %v2813, 0.0
    %v2957 = vmax.f32 %v2815, 0.0
    %v2958 = vmax.f32 %v2817, 0.0
    %v2959 = vmax.f32 %v2821, 0.0
    %v2960 = vmax.f32 %v2823, 0.0
    %v2961 = vmax.f32 %v2825, 0.0
    %v2962 = vmax.f32 %v2827, 0.0
    %v2963 = vmax.f32 %v2831, 0.0
    %v2964 = vmax.f32 %v2833, 0.0
    %v2965 = vmax.f32 %v2835, 0.0
    %v2966 = vmax.f32 %v2837, 0.0
    %v2967 = vadd.f32 %v2839, %v2841
    %v2968 = vadd.f32 %v2967, %v2843
    %v2969 = vadd.f32 %v2968, %v2845
    %v2970 = vadd.f32 %v2969, %v2847
    %v2971 = vadd.f32 %v2970, %v2849
    %v2972 = vadd.f32 %v2971, %v2851
    %v2973 = vadd.f32 %v2972, %v2853
    %v2974 = vrot.slane %v2973, 4
    %v2975 = vadd.f32 %v2973, %v2974
    %v2976 = vrot.slane %v2975, 2
    %v2977 = vadd.f32 %v2975, %v2976
    %v2978 = vrot.slane %v2977, 1
    %v2979 = vadd.f32 %v2977, %v2978
    %v2980 = vadd.f32 %v2840, %v2842
    %v2981 = vadd.f32 %v2980, %v2844
    %v2982 = vadd.f32 %v2981, %v2846
    %v2983 = vadd.f32 %v2982, %v2848
    %v2984 = vadd.f32 %v2983, %v2850
    %v2985 = vadd.f32 %v2984, %v2852
    %v2986 = vadd.f32 %v2985, %v2854
    %v2987 = vrot.slane %v2986, 4
    %v2988 = vadd.f32 %v2986, %v2987
    %v2989 = vrot.slane %v2988, 2
    %v2990 = vadd.f32 %v2988, %v2989
    %v2991 = vrot.slane %v2990, 1
    %v2992 = vadd.f32 %v2990, %v2991
    %v2993 = vadd.f32 %v2855, %v2857
    %v2994 = vadd.f32 %v2993, %v2859
    %v2995 = vadd.f32 %v2994, %v2861
    %v2996 = vadd.f32 %v2995, %v2863
    %v2997 = vadd.f32 %v2996, %v2865
    %v2998 = vadd.f32 %v2997, %v2867
    %v2999 = vadd.f32 %v2998, %v2869
    %v3000 = vrot.slane %v2999, 4
    %v3001 = vadd.f32 %v2999, %v3000
    %v3002 = vrot.slane %v3001, 2
    %v3003 = vadd.f32 %v3001, %v3002
    %v3004 = vrot.slane %v3003, 1
    %v3005 = vadd.f32 %v3003, %v3004
    %v3006 = vadd.f32 %v2856, %v2858
    %v3007 = vadd.f32 %v3006, %v2860
    %v3008 = vadd.f32 %v3007, %v2862
    %v3009 = vadd.f32 %v3008, %v2864
    %v3010 = vadd.f32 %v3009, %v2866
    %v3011 = vadd.f32 %v3010, %v2868
    %v3012 = vadd.f32 %v3011, %v2870
    %v3013 = vrot.slane %v3012, 4
    %v3014 = vadd.f32 %v3012, %v3013
    %v3015 = vrot.slane %v3014, 2
    %v3016 = vadd.f32 %v3014, %v3015
    %v3017 = vrot.slane %v3016, 1
    %v3018 = vadd.f32 %v3016, %v3017
    %v3019 = vadd.f32 %v2871, %v2873
    %v3020 = vadd.f32 %v3019, %v2875
    %v3021 = vadd.f32 %v3020, %v2877
    %v3022 = vadd.f32 %v3021, %v2879
    %v3023 = vadd.f32 %v3022, %v2881
    %v3024 = vadd.f32 %v3023, %v2883
    %v3025 = vadd.f32 %v3024, %v2885
    %v3026 = vrot.slane %v3025, 4
    %v3027 = vadd.f32 %v3025, %v3026
    %v3028 = vrot.slane %v3027, 2
    %v3029 = vadd.f32 %v3027, %v3028
    %v3030 = vrot.slane %v3029, 1
    %v3031 = vadd.f32 %v3029, %v3030
    %v3032 = vadd.f32 %v2872, %v2874
    %v3033 = vadd.f32 %v3032, %v2876
    %v3034 = vadd.f32 %v3033, %v2878
    %v3035 = vadd.f32 %v3034, %v2880
    %v3036 = vadd.f32 %v3035, %v2882
    %v3037 = vadd.f32 %v3036, %v2884
    %v3038 = vadd.f32 %v3037, %v2886
    %v3039 = vrot.slane %v3038, 4
    %v3040 = vadd.f32 %v3038, %v3039
    %v3041 = vrot.slane %v3040, 2
    %v3042 = vadd.f32 %v3040, %v3041
    %v3043 = vrot.slane %v3042, 1
    %v3044 = vadd.f32 %v3042, %v3043
    %v3045 = vadd.f32 %v2887, %v2889
    %v3046 = vadd.f32 %v3045, %v2891
    %v3047 = vadd.f32 %v3046, %v2893
    %v3048 = vadd.f32 %v3047, %v2895
    %v3049 = vadd.f32 %v3048, %v2897
    %v3050 = vadd.f32 %v3049, %v2899
    %v3051 = vadd.f32 %v3050, %v2901
    %v3052 = vrot.slane %v3051, 4
    %v3053 = vadd.f32 %v3051, %v3052
    %v3054 = vrot.slane %v3053, 2
    %v3055 = vadd.f32 %v3053, %v3054
    %v3056 = vrot.slane %v3055, 1
    %v3057 = vadd.f32 %v3055, %v3056
    %v3058 = vadd.f32 %v2888, %v2890
    %v3059 = vadd.f32 %v3058, %v2892
    %v3060 = vadd.f32 %v3059, %v2894
    %v3061 = vadd.f32 %v3060, %v2896
    %v3062 = vadd.f32 %v3061, %v2898
    %v3063 = vadd.f32 %v3062, %v2900
    %v3064 = vadd.f32 %v3063, %v2902
    %v3065 = vrot.slane %v3064, 4
    %v3066 = vadd.f32 %v3064, %v3065
    %v3067 = vrot.slane %v3066, 2
    %v3068 = vadd.f32 %v3066, %v3067
    %v3069 = vrot.slane %v3068, 1
    %v3070 = vadd.f32 %v3068, %v3069
    %v3071 = vadd.f32 %v2903, %v2905
    %v3072 = vadd.f32 %v3071, %v2907
    %v3073 = vadd.f32 %v3072, %v2909
    %v3074 = vadd.f32 %v3073, %v2911
    %v3075 = vadd.f32 %v3074, %v2913
    %v3076 = vadd.f32 %v3075, %v2915
    %v3077 = vadd.f32 %v3076, %v2917
    %v3078 = vrot.slane %v3077, 4
    %v3079 = vadd.f32 %v3077, %v3078
    %v3080 = vrot.slane %v3079, 2
    %v3081 = vadd.f32 %v3079, %v3080
    %v3082 = vrot.slane %v3081, 1
    %v3083 = vadd.f32 %v3081, %v3082
    %v3084 = vadd.f32 %v2904, %v2906
    %v3085 = vadd.f32 %v3084, %v2908
    %v3086 = vadd.f32 %v3085, %v2910
    %v3087 = vadd.f32 %v3086, %v2912
    %v3088 = vadd.f32 %v3087, %v2914
    %v3089 = vadd.f32 %v3088, %v2916
    %v3090 = vadd.f32 %v3089, %v2918
    %v3091 = vrot.slane %v3090, 4
    %v3092 = vadd.f32 %v3090, %v3091
    %v3093 = vrot.slane %v3092, 2
    %v3094 = vadd.f32 %v3092, %v3093
    %v3095 = vrot.slane %v3094, 1
    %v3096 = vadd.f32 %v3094, %v3095
    %v3097 = vadd.f32 %v2919, %v2921
    %v3098 = vadd.f32 %v3097, %v2923
    %v3099 = vadd.f32 %v3098, %v2925
    %v3100 = vadd.f32 %v3099, %v2927
    %v3101 = vadd.f32 %v3100, %v2929
    %v3102 = vadd.f32 %v3101, %v2931
    %v3103 = vadd.f32 %v3102, %v2933
    %v3104 = vrot.slane %v3103, 4
    %v3105 = vadd.f32 %v3103, %v3104
    %v3106 = vrot.slane %v3105, 2
    %v3107 = vadd.f32 %v3105, %v3106
    %v3108 = vrot.slane %v3107, 1
    %v3109 = vadd.f32 %v3107, %v3108
    %v3110 = vadd.f32 %v2920, %v2922
    %v3111 = vadd.f32 %v3110, %v2924
    %v3112 = vadd.f32 %v3111, %v2926
    %v3113 = vadd.f32 %v3112, %v2928
    %v3114 = vadd.f32 %v3113, %v2930
    %v3115 = vadd.f32 %v3114, %v2932
    %v3116 = vadd.f32 %v3115, %v2934
    %v3117 = vrot.slane %v3116, 4
    %v3118 = vadd.f32 %v3116, %v3117
    %v3119 = vrot.slane %v3118, 2
    %v3120 = vadd.f32 %v3118, %v3119
    %v3121 = vrot.slane %v3120, 1
    %v3122 = vadd.f32 %v3120, %v3121
    %v3123 = vadd.f32 %v2935, %v2937
    %v3124 = vadd.f32 %v3123, %v2939
    %v3125 = vadd.f32 %v3124, %v2941
    %v3126 = vadd.f32 %v3125, %v2943
    %v3127 = vadd.f32 %v3126, %v2945
    %v3128 = vadd.f32 %v3127, %v2947
    %v3129 = vadd.f32 %v3128, %v2949
    %v3130 = vrot.slane %v3129, 4
    %v3131 = vadd.f32 %v3129, %v3130
    %v3132 = vrot.slane %v3131, 2
    %v3133 = vadd.f32 %v3131, %v3132
    %v3134 = vrot.slane %v3133, 1
    %v3135 = vadd.f32 %v3133, %v3134
    %v3136 = vadd.f32 %v2936, %v2938
    %v3137 = vadd.f32 %v3136, %v2940
    %v3138 = vadd.f32 %v3137, %v2942
    %v3139 = vadd.f32 %v3138, %v2944
    %v3140 = vadd.f32 %v3139, %v2946
    %v3141 = vadd.f32 %v3140, %v2948
    %v3142 = vadd.f32 %v3141, %v2950
    %v3143 = vrot.slane %v3142, 4
    %v3144 = vadd.f32 %v3142, %v3143
    %v3145 = vrot.slane %v3144, 2
    %v3146 = vadd.f32 %v3144, %v3145
    %v3147 = vrot.slane %v3146, 1
    %v3148 = vadd.f32 %v3146, %v3147
    %v3149 = vadd.f32 %v2951, %v2953
    %v3150 = vadd.f32 %v3149, %v2955
    %v3151 = vadd.f32 %v3150, %v2957
    %v3152 = vadd.f32 %v3151, %v2959
    %v3153 = vadd.f32 %v3152, %v2961
    %v3154 = vadd.f32 %v3153, %v2963
    %v3155 = vadd.f32 %v3154, %v2965
    %v3156 = vrot.slane %v3155, 4
    %v3157 = vadd.f32 %v3155, %v3156
    %v3158 = vrot.slane %v3157, 2
    %v3159 = vadd.f32 %v3157, %v3158
    %v3160 = vrot.slane %v3159, 1
    %v3161 = vadd.f32 %v3159, %v3160
    %v3162 = vadd.f32 %v2952, %v2954
    %v3163 = vadd.f32 %v3162, %v2956
    %v3164 = vadd.f32 %v3163, %v2958
    %v3165 = vadd.f32 %v3164, %v2960
    %v3166 = vadd.f32 %v3165, %v2962
    %v3167 = vadd.f32 %v3166, %v2964
    %v3168 = vadd.f32 %v3167, %v2966
    %v3169 = vrot.slane %v3168, 4
    %v3170 = vadd.f32 %v3168, %v3169
    %v3171 = vrot.slane %v3170, 2
    %v3172 = vadd.f32 %v3170, %v3171
    %v3173 = vrot.slane %v3172, 1
    %v3174 = vadd.f32 %v3172, %v3173
    %v3175 = vld [vmem:[%s3 + $0x200] sm:$0xff]
    %v3176 = vld [vmem:[%s3 + $0x208] sm:$0xff]
    %v3177 = vld [vmem:[%s3 + $0x210] sm:$0xff]
    %v3178 = vld [vmem:[%s3 + $0x218] sm:$0xff]
    %v3179 = vld [vmem:[%s3 + $0x220] sm:$0xff]
    %v3180 = vld [vmem:[%s3 + $0x228] sm:$0xff]
    %v3181 = vld [vmem:[%s3 + $0x230] sm:$0xff]
    %v3182 = vld [vmem:[%s3 + $0x238] sm:$0xff]
    %v3183 = vld [vmem:[%s3 + $0x240] sm:$0xff]
    %v3184 = vld [vmem:[%s3 + $0x248] sm:$0xff]
    %v3185 = vld [vmem:[%s3 + $0x250] sm:$0xff]
    %v3186 = vld [vmem:[%s3 + $0x258] sm:$0xff]
    %v3187 = vld [vmem:[%s3 + $0x260] sm:$0xff]
    %v3188 = vld [vmem:[%s3 + $0x268] sm:$0xff]
    %v3189 = vld [vmem:[%s3 + $0x270] sm:$0xff]
    %v3190 = vld [vmem:[%s3 + $0x278] sm:$0xff]
    %v3191 = vld [vmem:[%s3 + $0x280] sm:$0xff]
    %v3192 = vld [vmem:[%s3 + $0x288] sm:$0xff]
    %v3193 = vld [vmem:[%s3 + $0x290] sm:$0xff]
    %v3194 = vld [vmem:[%s3 + $0x298] sm:$0xff]
    %v3195 = vld [vmem:[%s3 + $0x2a0] sm:$0xff]
    %v3196 = vld [vmem:[%s3 + $0x2a8] sm:$0xff]
    %v3197 = vld [vmem:[%s3 + $0x2b0] sm:$0xff]
    %v3198 = vld [vmem:[%s3 + $0x2b8] sm:$0xff]
    %v3199 = vld [vmem:[%s3 + $0x2c0] sm:$0xff]
    %v3200 = vld [vmem:[%s3 + $0x2c8] sm:$0xff]
    %v3201 = vld [vmem:[%s3 + $0x2d0] sm:$0xff]
    %v3202 = vld [vmem:[%s3 + $0x2d8] sm:$0xff]
    %v3203 = vld [vmem:[%s3 + $0x2e0] sm:$0xff]
    %v3204 = vld [vmem:[%s3 + $0x2e8] sm:$0xff]
    %v3205 = vld [vmem:[%s3 + $0x2f0] sm:$0xff]
    %v3206 = vld [vmem:[%s3 + $0x2f8] sm:$0xff]
    %v3223 = vsel %vm2183, %v3005, %v2979
    %v3224 = vsel %vm2185, %v3031, %v3223
    %v3225 = vsel %vm2187, %v3057, %v3224
    %v3226 = vsel %vm2189, %v3083, %v3225
    %v3227 = vsel %vm2191, %v3109, %v3226
    %v3228 = vsel %vm2193, %v3135, %v3227
    %v3229 = vsel %vm2195, %v3161, %v3228
    %v3230 = vsel %vm2183, %v3018, %v2992
    %v3231 = vsel %vm2185, %v3044, %v3230
    %v3232 = vsel %vm2187, %v3070, %v3231
    %v3233 = vsel %vm2189, %v3096, %v3232
    %v3234 = vsel %vm2191, %v3122, %v3233
    %v3235 = vsel %vm2193, %v3148, %v3234
    %v3236 = vsel %vm2195, %v3174, %v3235
    %3239 = vmatprep.subr.mxu0 0.0
    %3240 = vmatpush1.msra.mxu0 %v3175
    %3241 = vmatprep.subr.mxu0 0.0
    %3242 = vmatpush1.msra.mxu0 %v3176
    %3243 = vmatprep.subr.mxu0 0.0
    %3244 = vmatpush1.msra.mxu0 %v3177
    %3245 = vmatprep.subr.mxu0 0.0
    %3246 = vmatpush1.msra.mxu0 %v3178
    %3247 = vmatprep.subr.mxu0 0.0
    %3248 = vmatpush1.msra.mxu0 %v3179
    %3249 = vmatprep.subr.mxu0 0.0
    %3250 = vmatpush1.msra.mxu0 %v3180
    %3251 = vmatprep.subr.mxu0 0.0
    %3252 = vmatpush1.msra.mxu0 %v3181
    %3253 = vmatprep.subr.mxu0 0.0
    %3254 = vmatpush1.msra.mxu0 %v3182
    %3255 = vmatprep.subr.mxu0 0.0
    %3256 = vmatpush1.msra.mxu0 %v3183
    %3257 = vmatprep.subr.mxu0 0.0
    %3258 = vmatpush1.msra.mxu0 %v3184
    %3259 = vmatprep.subr.mxu0 0.0
    %3260 = vmatpush1.msra.mxu0 %v3185
    %3261 = vmatprep.subr.mxu0 0.0
    %3262 = vmatpush1.msra.mxu0 %v3186
    %3263 = vmatprep.subr.mxu0 0.0
    %3264 = vmatpush1.msra.mxu0 %v3187
    %3265 = vmatprep.subr.mxu0 0.0
    %3266 = vmatpush1.msra.mxu0 %v3188
    %3267 = vmatprep.subr.mxu0 0.0
    %3268 = vmatpush1.msra.mxu0 %v3189
    %3269 = vmatprep.subr.mxu0 0.0
    %3270 = vmatpush1.msra.mxu0 %v3190
    %3271 = vmatprep.subr.mxu0 0.0
    %3272 = vmatpush1.msra.mxu0 %v3191
    %3273 = vmatprep.subr.mxu0 0.0
    %3274 = vmatpush1.msra.mxu0 %v3192
    %3275 = vmatprep.subr.mxu0 0.0
    %3276 = vmatpush1.msra.mxu0 %v3193
    %3277 = vmatprep.subr.mxu0 0.0
    %3278 = vmatpush1.msra.mxu0 %v3194
    %3279 = vmatprep.subr.mxu0 0.0
    %3280 = vmatpush1.msra.mxu0 %v3195
    %3281 = vmatprep.subr.mxu0 0.0
    %3282 = vmatpush1.msra.mxu0 %v3196
    %3283 = vmatprep.subr.mxu0 0.0
    %3284 = vmatpush1.msra.mxu0 %v3197
    %3285 = vmatprep.subr.mxu0 0.0
    %3286 = vmatpush1.msra.mxu0 %v3198
    %3287 = vmatprep.subr.mxu0 0.0
    %3288 = vmatpush1.msra.mxu0 %v3199
    %3289 = vmatprep.subr.mxu0 0.0
    %3290 = vmatpush1.msra.mxu0 %v3200
    %3291 = vmatprep.subr.mxu0 0.0
    %3292 = vmatpush1.msra.mxu0 %v3201
    %3293 = vmatprep.subr.mxu0 0.0
    %3294 = vmatpush1.msra.mxu0 %v3202
    %3295 = vmatprep.subr.mxu0 0.0
    %3296 = vmatpush1.msra.mxu0 %v3203
    %3297 = vmatprep.subr.mxu0 0.0
    %3298 = vmatpush1.msra.mxu0 %v3204
    %3299 = vmatprep.subr.mxu0 0.0
    %3300 = vmatpush1.msra.mxu0 %v3205
    %3301 = vmatprep.subr.mxu0 0.0
    %3302 = vmatpush1.msra.mxu0 %v3206
    %3303 = vmatprep.mubr.f32.mxu0 %v3236
    %3304 = vmatmul.mubr.f32.gmra.mrb[0].mxu0 %v3229
    %v3305 = vpop.f32.mrb[0].mxu0
    %v3306 = vadd.f32 0.0, %v3305
    %v3307 = vpop.f32.mrb[0].mxu0
    %3308 = vdwg.mxu0
    %v3309 = vadd.f32 %v2375, %v3306
    %v3310 = vld [vmem:[%s1 + $0x18] sm:$0xff]
    %v3311 = vld [vmem:[%s1 + $0x40] sm:$0xff]
    %v3312 = vld [vmem:[%s1 + $0x68] sm:$0xff]
    %v3313 = vld [vmem:[%s1 + $0x90] sm:$0xff]
    %v3314 = vld [vmem:[%s1 + $0xb8] sm:$0xff]
    %v3315 = vld [vmem:[%s1 + $0xe0] sm:$0xff]
    %v3316 = vld [vmem:[%s1 + $0x108] sm:$0xff]
    %v3317 = vld [vmem:[%s1 + $0x130] sm:$0xff]
    %v3318 = vld [vmem:[%s1 + $0x158] sm:$0xff]
    %v3319 = vld [vmem:[%s1 + $0x180] sm:$0xff]
    %v3320 = vld [vmem:[%s1 + $0x1a8] sm:$0xff]
    %v3321 = vld [vmem:[%s1 + $0x1d0] sm:$0xff]
    %v3322 = vld [vmem:[%s1 + $0x1f8] sm:$0xff]
    %v3323 = vld [vmem:[%s1 + $0x220] sm:$0xff]
    %v3324 = vld [vmem:[%s1 + $0x248] sm:$0xff]
    %v3325 = vld [vmem:[%s1 + $0x270] sm:$0xff]
    %v3326 = vld [vmem:[%s2 + $0x6] sm:$0x3]
    %v3328 = vlaneseq
    %v3329 = vshrl.u32 %v3328, 7
    %v3330 = vsub.s32 0, %v3329
    %v3331 = vrot.slane %v3326, %v3330
    %v3332 = vlaneseq
    %v3333 = vshrl.u32 %v3332, 7
    %v3334 = vsub.s32 1, %v3333
    %v3335 = vrot.slane %v3326, %v3334
    %v3354 = vunpack.c.l.b16 %v3310
    %v3355 = vunpack.c.h.b16 %v3310
    %v3356 = vunpack.c.l.b16 %v3311
    %v3357 = vunpack.c.h.b16 %v3311
    %v3358 = vunpack.c.l.b16 %v3312
    %v3359 = vunpack.c.h.b16 %v3312
    %v3360 = vunpack.c.l.b16 %v3313
    %v3361 = vunpack.c.h.b16 %v3313
    %v3362 = vunpack.c.l.b16 %v3314
    %v3363 = vunpack.c.h.b16 %v3314
    %v3364 = vunpack.c.l.b16 %v3315
    %v3365 = vunpack.c.h.b16 %v3315
    %v3366 = vunpack.c.l.b16 %v3316
    %v3367 = vunpack.c.h.b16 %v3316
    %v3368 = vunpack.c.l.b16 %v3317
    %v3369 = vunpack.c.h.b16 %v3317
    %v3370 = vunpack.c.l.b16 %v3318
    %v3371 = vunpack.c.h.b16 %v3318
    %v3372 = vunpack.c.l.b16 %v3319
    %v3373 = vunpack.c.h.b16 %v3319
    %v3374 = vunpack.c.l.b16 %v3320
    %v3375 = vunpack.c.h.b16 %v3320
    %v3376 = vunpack.c.l.b16 %v3321
    %v3377 = vunpack.c.h.b16 %v3321
    %v3378 = vunpack.c.l.b16 %v3322
    %v3379 = vunpack.c.h.b16 %v3322
    %v3380 = vunpack.c.l.b16 %v3323
    %v3381 = vunpack.c.h.b16 %v3323
    %v3382 = vunpack.c.l.b16 %v3324
    %v3383 = vunpack.c.h.b16 %v3324
    %v3384 = vunpack.c.l.b16 %v3325
    %v3385 = vunpack.c.h.b16 %v3325
    %v3386 = vpack.c.b16 %v3356, %v3354
    %v3387 = vpack.c.b16 %v3357, %v3355
    %v3388 = vpack.c.b16 %v3360, %v3358
    %v3389 = vpack.c.b16 %v3361, %v3359
    %v3390 = vpack.c.b16 %v3364, %v3362
    %v3391 = vpack.c.b16 %v3365, %v3363
    %v3392 = vpack.c.b16 %v3368, %v3366
    %v3393 = vpack.c.b16 %v3369, %v3367
    %v3394 = vpack.c.b16 %v3372, %v3370
    %v3395 = vpack.c.b16 %v3373, %v3371
    %v3396 = vpack.c.b16 %v3376, %v3374
    %v3397 = vpack.c.b16 %v3377, %v3375
    %v3398 = vpack.c.b16 %v3380, %v3378
    %v3399 = vpack.c.b16 %v3381, %v3379
    %v3400 = vpack.c.b16 %v3384, %v3382
    %v3401 = vpack.c.b16 %v3385, %v3383
    %3418 = vmatprep.subr.bf16.mxu0 %v3387
    %3419 = vmatpush1.bf16.msra.mxu0 %v3386
    %3420 = vmatprep.subr.bf16.mxu0 %v3389
    %3421 = vmatpush1.bf16.msra.mxu0 %v3388
    %3422 = vmatprep.subr.bf16.mxu0 %v3391
    %3423 = vmatpush1.bf16.msra.mxu0 %v3390
    %3424 = vmatprep.subr.bf16.mxu0 %v3393
    %3425 = vmatpush1.bf16.msra.mxu0 %v3392
    %3426 = vmatprep.subr.bf16.mxu0 %v3395
    %3427 = vmatpush1.bf16.msra.mxu0 %v3394
    %3428 = vmatprep.subr.bf16.mxu0 %v3397
    %3429 = vmatpush1.bf16.msra.mxu0 %v3396
    %3430 = vmatprep.subr.bf16.mxu0 %v3399
    %3431 = vmatpush1.bf16.msra.mxu0 %v3398
    %3432 = vmatprep.subr.bf16.mxu0 %v3401
    %3433 = vmatpush1.bf16.msra.mxu0 %v3400
    %3434 = vmatprep.subr.bf16.mxu0 0
    %3435 = vmatpush1.bf16.msra.mxu0 0
    %3436 = vmatprep.subr.bf16.mxu0 0
    %3437 = vmatpush1.bf16.msra.mxu0 0
    %3438 = vmatprep.subr.bf16.mxu0 0
    %3439 = vmatpush1.bf16.msra.mxu0 0
    %3440 = vmatprep.subr.bf16.mxu0 0
    %3441 = vmatpush1.bf16.msra.mxu0 0
    %3442 = vmatprep.subr.bf16.mxu0 0
    %3443 = vmatpush1.bf16.msra.mxu0 0
    %3444 = vmatprep.subr.bf16.mxu0 0
    %3445 = vmatpush1.bf16.msra.mxu0 0
    %3446 = vmatprep.subr.bf16.mxu0 0
    %3447 = vmatpush1.bf16.msra.mxu0 0
    %3448 = vmatprep.subr.bf16.mxu0 0
    %3449 = vmatpush1.bf16.msra.mxu0 0
    %3450 = vmatprep.mubr.bf16.mxu0 0
    %3451 = vmatmul.mubr.bf16.gmra.mrb[0].mxu0 %v477
    %v3452 = vpop.f32.mrb[0].mxu0
    %v3453 = vadd.f32 %v3331, %v3452
    %v3454 = vpop.f32.mrb[0].mxu0
    %v3455 = vadd.f32 %v3335, %v3454
    %v3456 = vpop.f32.mrb[0].mxu0
    %v3457 = vadd.f32 %v3331, %v3456
    %v3458 = vpop.f32.mrb[0].mxu0
    %v3459 = vadd.f32 %v3335, %v3458
    %3460 = vmatprep.mubr.bf16.mxu0 0
    %3461 = vmatmul.mubr.bf16.gmra.mrb[0].mxu0 %v478
    %v3462 = vpop.f32.mrb[0].mxu0
    %v3463 = vadd.f32 %v3331, %v3462
    %v3464 = vpop.f32.mrb[0].mxu0
    %v3465 = vadd.f32 %v3335, %v3464
    %v3466 = vpop.f32.mrb[0].mxu0
    %v3467 = vadd.f32 %v3331, %v3466
    %v3468 = vpop.f32.mrb[0].mxu0
    %v3469 = vadd.f32 %v3335, %v3468
    %3470 = vmatprep.mubr.bf16.mxu0 0
    %3471 = vmatmul.mubr.bf16.gmra.mrb[0].mxu0 %v479
    %v3472 = vpop.f32.mrb[0].mxu0
    %v3473 = vadd.f32 %v3331, %v3472
    %v3474 = vpop.f32.mrb[0].mxu0
    %v3475 = vadd.f32 %v3335, %v3474
    %v3476 = vpop.f32.mrb[0].mxu0
    %v3477 = vadd.f32 %v3331, %v3476
    %v3478 = vpop.f32.mrb[0].mxu0
    %v3479 = vadd.f32 %v3335, %v3478
    %3480 = vmatprep.mubr.bf16.mxu0 0
    %3481 = vmatmul.mubr.bf16.gmra.mrb[0].mxu0 %v480
    %v3482 = vpop.f32.mrb[0].mxu0
    %v3483 = vadd.f32 %v3331, %v3482
    %v3484 = vpop.f32.mrb[0].mxu0
    %v3485 = vadd.f32 %v3335, %v3484
    %v3486 = vpop.f32.mrb[0].mxu0
    %v3487 = vadd.f32 %v3331, %v3486
    %v3488 = vpop.f32.mrb[0].mxu0
    %v3489 = vadd.f32 %v3335, %v3488
    %3490 = vmatprep.mubr.bf16.mxu0 0
    %3491 = vmatmul.mubr.bf16.gmra.mrb[0].mxu0 %v481
    %v3492 = vpop.f32.mrb[0].mxu0
    %v3493 = vadd.f32 %v3331, %v3492
    %v3494 = vpop.f32.mrb[0].mxu0
    %v3495 = vadd.f32 %v3335, %v3494
    %v3496 = vpop.f32.mrb[0].mxu0
    %v3497 = vadd.f32 %v3331, %v3496
    %v3498 = vpop.f32.mrb[0].mxu0
    %v3499 = vadd.f32 %v3335, %v3498
    %3500 = vmatprep.mubr.bf16.mxu0 0
    %3501 = vmatmul.mubr.bf16.gmra.mrb[0].mxu0 %v482
    %v3502 = vpop.f32.mrb[0].mxu0
    %v3503 = vadd.f32 %v3331, %v3502
    %v3504 = vpop.f32.mrb[0].mxu0
    %v3505 = vadd.f32 %v3335, %v3504
    %v3506 = vpop.f32.mrb[0].mxu0
    %v3507 = vadd.f32 %v3331, %v3506
    %v3508 = vpop.f32.mrb[0].mxu0
    %v3509 = vadd.f32 %v3335, %v3508
    %3510 = vmatprep.mubr.bf16.mxu0 0
    %3511 = vmatmul.mubr.bf16.gmra.mrb[0].mxu0 %v483
    %v3512 = vpop.f32.mrb[0].mxu0
    %v3513 = vadd.f32 %v3331, %v3512
    %v3514 = vpop.f32.mrb[0].mxu0
    %v3515 = vadd.f32 %v3335, %v3514
    %v3516 = vpop.f32.mrb[0].mxu0
    %v3517 = vadd.f32 %v3331, %v3516
    %v3518 = vpop.f32.mrb[0].mxu0
    %v3519 = vadd.f32 %v3335, %v3518
    %3520 = vmatprep.mubr.bf16.mxu0 0
    %3521 = vmatmul.mubr.bf16.gmra.mrb[0].mxu0 %v484
    %v3522 = vpop.f32.mrb[0].mxu0
    %v3523 = vadd.f32 %v3331, %v3522
    %v3524 = vpop.f32.mrb[0].mxu0
    %v3525 = vadd.f32 %v3335, %v3524
    %v3526 = vpop.f32.mrb[0].mxu0
    %v3527 = vadd.f32 %v3331, %v3526
    %v3528 = vpop.f32.mrb[0].mxu0
    %v3529 = vadd.f32 %v3335, %v3528
    %3530 = vmatprep.mubr.bf16.mxu0 0
    %3531 = vmatmul.mubr.bf16.gmra.mrb[0].mxu0 %v485
    %v3532 = vpop.f32.mrb[0].mxu0
    %v3533 = vadd.f32 %v3331, %v3532
    %v3534 = vpop.f32.mrb[0].mxu0
    %v3535 = vadd.f32 %v3335, %v3534
    %v3536 = vpop.f32.mrb[0].mxu0
    %v3537 = vadd.f32 %v3331, %v3536
    %v3538 = vpop.f32.mrb[0].mxu0
    %v3539 = vadd.f32 %v3335, %v3538
    %3540 = vmatprep.mubr.bf16.mxu0 0
    %3541 = vmatmul.mubr.bf16.gmra.mrb[0].mxu0 %v486
    %v3542 = vpop.f32.mrb[0].mxu0
    %v3543 = vadd.f32 %v3331, %v3542
    %v3544 = vpop.f32.mrb[0].mxu0
    %v3545 = vadd.f32 %v3335, %v3544
    %v3546 = vpop.f32.mrb[0].mxu0
    %v3547 = vadd.f32 %v3331, %v3546
    %v3548 = vpop.f32.mrb[0].mxu0
    %v3549 = vadd.f32 %v3335, %v3548
    %3550 = vmatprep.mubr.bf16.mxu0 0
    %3551 = vmatmul.mubr.bf16.gmra.mrb[0].mxu0 %v487
    %v3552 = vpop.f32.mrb[0].mxu0
    %v3553 = vadd.f32 %v3331, %v3552
    %v3554 = vpop.f32.mrb[0].mxu0
    %v3555 = vadd.f32 %v3335, %v3554
    %v3556 = vpop.f32.mrb[0].mxu0
    %v3557 = vadd.f32 %v3331, %v3556
    %v3558 = vpop.f32.mrb[0].mxu0
    %v3559 = vadd.f32 %v3335, %v3558
    %3560 = vmatprep.mubr.bf16.mxu0 0
    %3561 = vmatmul.mubr.bf16.gmra.mrb[0].mxu0 %v488
    %v3562 = vpop.f32.mrb[0].mxu0
    %v3563 = vadd.f32 %v3331, %v3562
    %v3564 = vpop.f32.mrb[0].mxu0
    %v3565 = vadd.f32 %v3335, %v3564
    %v3566 = vpop.f32.mrb[0].mxu0
    %v3567 = vadd.f32 %v3331, %v3566
    %v3568 = vpop.f32.mrb[0].mxu0
    %v3569 = vadd.f32 %v3335, %v3568
    %3570 = vmatprep.mubr.bf16.mxu0 0
    %3571 = vmatmul.mubr.bf16.gmra.mrb[0].mxu0 %v489
    %v3572 = vpop.f32.mrb[0].mxu0
    %v3573 = vadd.f32 %v3331, %v3572
    %v3574 = vpop.f32.mrb[0].mxu0
    %v3575 = vadd.f32 %v3335, %v3574
    %v3576 = vpop.f32.mrb[0].mxu0
    %v3577 = vadd.f32 %v3331, %v3576
    %v3578 = vpop.f32.mrb[0].mxu0
    %v3579 = vadd.f32 %v3335, %v3578
    %3580 = vmatprep.mubr.bf16.mxu0 0
    %3581 = vmatmul.mubr.bf16.gmra.mrb[0].mxu0 %v490
    %v3582 = vpop.f32.mrb[0].mxu0
    %v3583 = vadd.f32 %v3331, %v3582
    %v3584 = vpop.f32.mrb[0].mxu0
    %v3585 = vadd.f32 %v3335, %v3584
    %v3586 = vpop.f32.mrb[0].mxu0
    %v3587 = vadd.f32 %v3331, %v3586
    %v3588 = vpop.f32.mrb[0].mxu0
    %v3589 = vadd.f32 %v3335, %v3588
    %3590 = vmatprep.mubr.bf16.mxu0 0
    %3591 = vmatmul.mubr.bf16.gmra.mrb[0].mxu0 %v491
    %v3592 = vpop.f32.mrb[0].mxu0
    %v3593 = vadd.f32 %v3331, %v3592
    %v3594 = vpop.f32.mrb[0].mxu0
    %v3595 = vadd.f32 %v3335, %v3594
    %v3596 = vpop.f32.mrb[0].mxu0
    %v3597 = vadd.f32 %v3331, %v3596
    %v3598 = vpop.f32.mrb[0].mxu0
    %v3599 = vadd.f32 %v3335, %v3598
    %3600 = vmatprep.mubr.bf16.mxu0 0
    %3601 = vmatmul.mubr.bf16.gmra.mrb[0].mxu0 %v492
    %v3602 = vpop.f32.mrb[0].mxu0
    %v3603 = vadd.f32 %v3331, %v3602
    %v3604 = vpop.f32.mrb[0].mxu0
    %v3605 = vadd.f32 %v3335, %v3604
    %v3606 = vpop.f32.mrb[0].mxu0
    %v3607 = vadd.f32 %v3331, %v3606
    %v3608 = vpop.f32.mrb[0].mxu0
    %v3609 = vadd.f32 %v3335, %v3608
    %3610 = vmatprep.mubr.bf16.mxu0 0
    %3611 = vmatmul.mubr.bf16.gmra.mrb[0].mxu0 %v493
    %v3612 = vpop.f32.mrb[0].mxu0
    %v3613 = vadd.f32 %v3331, %v3612
    %v3614 = vpop.f32.mrb[0].mxu0
    %v3615 = vadd.f32 %v3335, %v3614
    %v3616 = vpop.f32.mrb[0].mxu0
    %v3617 = vadd.f32 %v3331, %v3616
    %v3618 = vpop.f32.mrb[0].mxu0
    %v3619 = vadd.f32 %v3335, %v3618
    %3620 = vmatprep.mubr.bf16.mxu0 0
    %3621 = vmatmul.mubr.bf16.gmra.mrb[0].mxu0 %v494
    %v3622 = vpop.f32.mrb[0].mxu0
    %v3623 = vadd.f32 %v3331, %v3622
    %v3624 = vpop.f32.mrb[0].mxu0
    %v3625 = vadd.f32 %v3335, %v3624
    %v3626 = vpop.f32.mrb[0].mxu0
    %v3627 = vadd.f32 %v3331, %v3626
    %v3628 = vpop.f32.mrb[0].mxu0
    %v3629 = vadd.f32 %v3335, %v3628
    %3630 = vmatprep.mubr.bf16.mxu0 0
    %3631 = vmatmul.mubr.bf16.gmra.mrb[0].mxu0 %v495
    %v3632 = vpop.f32.mrb[0].mxu0
    %v3633 = vadd.f32 %v3331, %v3632
    %v3634 = vpop.f32.mrb[0].mxu0
    %v3635 = vadd.f32 %v3335, %v3634
    %v3636 = vpop.f32.mrb[0].mxu0
    %v3637 = vadd.f32 %v3331, %v3636
    %v3638 = vpop.f32.mrb[0].mxu0
    %v3639 = vadd.f32 %v3335, %v3638
    %3640 = vmatprep.mubr.bf16.mxu0 0
    %3641 = vmatmul.mubr.bf16.gmra.mrb[0].mxu0 %v496
    %v3642 = vpop.f32.mrb[0].mxu0
    %v3643 = vadd.f32 %v3331, %v3642
    %v3644 = vpop.f32.mrb[0].mxu0
    %v3645 = vadd.f32 %v3335, %v3644
    %v3646 = vpop.f32.mrb[0].mxu0
    %v3647 = vadd.f32 %v3331, %v3646
    %v3648 = vpop.f32.mrb[0].mxu0
    %v3649 = vadd.f32 %v3335, %v3648
    %3650 = vmatprep.mubr.bf16.mxu0 0
    %3651 = vmatmul.mubr.bf16.gmra.mrb[0].mxu0 %v497
    %v3652 = vpop.f32.mrb[0].mxu0
    %v3653 = vadd.f32 %v3331, %v3652
    %v3654 = vpop.f32.mrb[0].mxu0
    %v3655 = vadd.f32 %v3335, %v3654
    %v3656 = vpop.f32.mrb[0].mxu0
    %v3657 = vadd.f32 %v3331, %v3656
    %v3658 = vpop.f32.mrb[0].mxu0
    %v3659 = vadd.f32 %v3335, %v3658
    %3660 = vmatprep.mubr.bf16.mxu0 0
    %3661 = vmatmul.mubr.bf16.gmra.mrb[0].mxu0 %v498
    %v3662 = vpop.f32.mrb[0].mxu0
    %v3663 = vadd.f32 %v3331, %v3662
    %v3664 = vpop.f32.mrb[0].mxu0
    %v3665 = vadd.f32 %v3335, %v3664
    %v3666 = vpop.f32.mrb[0].mxu0
    %v3667 = vadd.f32 %v3331, %v3666
    %v3668 = vpop.f32.mrb[0].mxu0
    %v3669 = vadd.f32 %v3335, %v3668
    %3670 = vmatprep.mubr.bf16.mxu0 0
    %3671 = vmatmul.mubr.bf16.gmra.mrb[0].mxu0 %v499
    %v3672 = vpop.f32.mrb[0].mxu0
    %v3673 = vadd.f32 %v3331, %v3672
    %v3674 = vpop.f32.mrb[0].mxu0
    %v3675 = vadd.f32 %v3335, %v3674
    %v3676 = vpop.f32.mrb[0].mxu0
    %v3677 = vadd.f32 %v3331, %v3676
    %v3678 = vpop.f32.mrb[0].mxu0
    %v3679 = vadd.f32 %v3335, %v3678
    %3680 = vmatprep.mubr.bf16.mxu0 0
    %3681 = vmatmul.mubr.bf16.gmra.mrb[0].mxu0 %v500
    %v3682 = vpop.f32.mrb[0].mxu0
    %v3683 = vadd.f32 %v3331, %v3682
    %v3684 = vpop.f32.mrb[0].mxu0
    %v3685 = vadd.f32 %v3335, %v3684
    %v3686 = vpop.f32.mrb[0].mxu0
    %v3687 = vadd.f32 %v3331, %v3686
    %v3688 = vpop.f32.mrb[0].mxu0
    %v3689 = vadd.f32 %v3335, %v3688
    %3690 = vmatprep.mubr.bf16.mxu0 0
    %3691 = vmatmul.mubr.bf16.gmra.mrb[0].mxu0 %v501
    %v3692 = vpop.f32.mrb[0].mxu0
    %v3693 = vadd.f32 %v3331, %v3692
    %v3694 = vpop.f32.mrb[0].mxu0
    %v3695 = vadd.f32 %v3335, %v3694
    %v3696 = vpop.f32.mrb[0].mxu0
    %v3697 = vadd.f32 %v3331, %v3696
    %v3698 = vpop.f32.mrb[0].mxu0
    %v3699 = vadd.f32 %v3335, %v3698
    %3700 = vmatprep.mubr.bf16.mxu0 0
    %3701 = vmatmul.mubr.bf16.gmra.mrb[0].mxu0 %v502
    %v3702 = vpop.f32.mrb[0].mxu0
    %v3703 = vadd.f32 %v3331, %v3702
    %v3704 = vpop.f32.mrb[0].mxu0
    %v3705 = vadd.f32 %v3335, %v3704
    %v3706 = vpop.f32.mrb[0].mxu0
    %v3707 = vadd.f32 %v3331, %v3706
    %v3708 = vpop.f32.mrb[0].mxu0
    %v3709 = vadd.f32 %v3335, %v3708
    %3710 = vmatprep.mubr.bf16.mxu0 0
    %3711 = vmatmul.mubr.bf16.gmra.mrb[0].mxu0 %v503
    %v3712 = vpop.f32.mrb[0].mxu0
    %v3713 = vadd.f32 %v3331, %v3712
    %v3714 = vpop.f32.mrb[0].mxu0
    %v3715 = vadd.f32 %v3335, %v3714
    %v3716 = vpop.f32.mrb[0].mxu0
    %v3717 = vadd.f32 %v3331, %v3716
    %v3718 = vpop.f32.mrb[0].mxu0
    %v3719 = vadd.f32 %v3335, %v3718
    %3720 = vmatprep.mubr.bf16.mxu0 0
    %3721 = vmatmul.mubr.bf16.gmra.mrb[0].mxu0 %v504
    %v3722 = vpop.f32.mrb[0].mxu0
    %v3723 = vadd.f32 %v3331, %v3722
    %v3724 = vpop.f32.mrb[0].mxu0
    %v3725 = vadd.f32 %v3335, %v3724
    %v3726 = vpop.f32.mrb[0].mxu0
    %v3727 = vadd.f32 %v3331, %v3726
    %v3728 = vpop.f32.mrb[0].mxu0
    %v3729 = vadd.f32 %v3335, %v3728
    %3730 = vmatprep.mubr.bf16.mxu0 0
    %3731 = vmatmul.mubr.bf16.gmra.mrb[0].mxu0 %v505
    %v3732 = vpop.f32.mrb[0].mxu0
    %v3733 = vadd.f32 %v3331, %v3732
    %v3734 = vpop.f32.mrb[0].mxu0
    %v3735 = vadd.f32 %v3335, %v3734
    %v3736 = vpop.f32.mrb[0].mxu0
    %v3737 = vadd.f32 %v3331, %v3736
    %v3738 = vpop.f32.mrb[0].mxu0
    %v3739 = vadd.f32 %v3335, %v3738
    %3740 = vmatprep.mubr.bf16.mxu0 0
    %3741 = vmatmul.mubr.bf16.gmra.mrb[0].mxu0 %v506
    %v3742 = vpop.f32.mrb[0].mxu0
    %v3743 = vadd.f32 %v3331, %v3742
    %v3744 = vpop.f32.mrb[0].mxu0
    %v3745 = vadd.f32 %v3335, %v3744
    %v3746 = vpop.f32.mrb[0].mxu0
    %v3747 = vadd.f32 %v3331, %v3746
    %v3748 = vpop.f32.mrb[0].mxu0
    %v3749 = vadd.f32 %v3335, %v3748
    %3750 = vmatprep.mubr.bf16.mxu0 0
    %3751 = vmatmul.mubr.bf16.gmra.mrb[0].mxu0 %v507
    %v3752 = vpop.f32.mrb[0].mxu0
    %v3753 = vadd.f32 %v3331, %v3752
    %v3754 = vpop.f32.mrb[0].mxu0
    %v3755 = vadd.f32 %v3335, %v3754
    %v3756 = vpop.f32.mrb[0].mxu0
    %v3757 = vadd.f32 %v3331, %v3756
    %v3758 = vpop.f32.mrb[0].mxu0
    %v3759 = vadd.f32 %v3335, %v3758
    %3760 = vmatprep.mubr.bf16.mxu0 0
    %3761 = vmatmul.mubr.bf16.gmra.mrb[0].mxu0 %v508
    %v3762 = vpop.f32.mrb[0].mxu0
    %v3763 = vadd.f32 %v3331, %v3762
    %v3764 = vpop.f32.mrb[0].mxu0
    %v3765 = vadd.f32 %v3335, %v3764
    %v3766 = vpop.f32.mrb[0].mxu0
    %v3767 = vadd.f32 %v3331, %v3766
    %v3768 = vpop.f32.mrb[0].mxu0
    %v3769 = vadd.f32 %v3335, %v3768
    %3770 = vdwg.mxu0
    %v3771 = vmax.f32 %v3453, 0.0
    %v3772 = vmax.f32 %v3455, 0.0
    %v3773 = vmax.f32 %v3457, 0.0
    %v3774 = vmax.f32 %v3459, 0.0
    %v3775 = vmax.f32 %v3463, 0.0
    %v3776 = vmax.f32 %v3465, 0.0
    %v3777 = vmax.f32 %v3467, 0.0
    %v3778 = vmax.f32 %v3469, 0.0
    %v3779 = vmax.f32 %v3473, 0.0
    %v3780 = vmax.f32 %v3475, 0.0
    %v3781 = vmax.f32 %v3477, 0.0
    %v3782 = vmax.f32 %v3479, 0.0
    %v3783 = vmax.f32 %v3483, 0.0
    %v3784 = vmax.f32 %v3485, 0.0
    %v3785 = vmax.f32 %v3487, 0.0
    %v3786 = vmax.f32 %v3489, 0.0
    %v3787 = vmax.f32 %v3493, 0.0
    %v3788 = vmax.f32 %v3495, 0.0
    %v3789 = vmax.f32 %v3497, 0.0
    %v3790 = vmax.f32 %v3499, 0.0
    %v3791 = vmax.f32 %v3503, 0.0
    %v3792 = vmax.f32 %v3505, 0.0
    %v3793 = vmax.f32 %v3507, 0.0
    %v3794 = vmax.f32 %v3509, 0.0
    %v3795 = vmax.f32 %v3513, 0.0
    %v3796 = vmax.f32 %v3515, 0.0
    %v3797 = vmax.f32 %v3517, 0.0
    %v3798 = vmax.f32 %v3519, 0.0
    %v3799 = vmax.f32 %v3523, 0.0
    %v3800 = vmax.f32 %v3525, 0.0
    %v3801 = vmax.f32 %v3527, 0.0
    %v3802 = vmax.f32 %v3529, 0.0
    %v3803 = vmax.f32 %v3533, 0.0
    %v3804 = vmax.f32 %v3535, 0.0
    %v3805 = vmax.f32 %v3537, 0.0
    %v3806 = vmax.f32 %v3539, 0.0
    %v3807 = vmax.f32 %v3543, 0.0
    %v3808 = vmax.f32 %v3545, 0.0
    %v3809 = vmax.f32 %v3547, 0.0
    %v3810 = vmax.f32 %v3549, 0.0
    %v3811 = vmax.f32 %v3553, 0.0
    %v3812 = vmax.f32 %v3555, 0.0
    %v3813 = vmax.f32 %v3557, 0.0
    %v3814 = vmax.f32 %v3559, 0.0
    %v3815 = vmax.f32 %v3563, 0.0
    %v3816 = vmax.f32 %v3565, 0.0
    %v3817 = vmax.f32 %v3567, 0.0
    %v3818 = vmax.f32 %v3569, 0.0
    %v3819 = vmax.f32 %v3573, 0.0
    %v3820 = vmax.f32 %v3575, 0.0
    %v3821 = vmax.f32 %v3577, 0.0
    %v3822 = vmax.f32 %v3579, 0.0
    %v3823 = vmax.f32 %v3583, 0.0
    %v3824 = vmax.f32 %v3585, 0.0
    %v3825 = vmax.f32 %v3587, 0.0
    %v3826 = vmax.f32 %v3589, 0.0
    %v3827 = vmax.f32 %v3593, 0.0
    %v3828 = vmax.f32 %v3595, 0.0
    %v3829 = vmax.f32 %v3597, 0.0
    %v3830 = vmax.f32 %v3599, 0.0
    %v3831 = vmax.f32 %v3603, 0.0
    %v3832 = vmax.f32 %v3605, 0.0
    %v3833 = vmax.f32 %v3607, 0.0
    %v3834 = vmax.f32 %v3609, 0.0
    %v3835 = vmax.f32 %v3613, 0.0
    %v3836 = vmax.f32 %v3615, 0.0
    %v3837 = vmax.f32 %v3617, 0.0
    %v3838 = vmax.f32 %v3619, 0.0
    %v3839 = vmax.f32 %v3623, 0.0
    %v3840 = vmax.f32 %v3625, 0.0
    %v3841 = vmax.f32 %v3627, 0.0
    %v3842 = vmax.f32 %v3629, 0.0
    %v3843 = vmax.f32 %v3633, 0.0
    %v3844 = vmax.f32 %v3635, 0.0
    %v3845 = vmax.f32 %v3637, 0.0
    %v3846 = vmax.f32 %v3639, 0.0
    %v3847 = vmax.f32 %v3643, 0.0
    %v3848 = vmax.f32 %v3645, 0.0
    %v3849 = vmax.f32 %v3647, 0.0
    %v3850 = vmax.f32 %v3649, 0.0
    %v3851 = vmax.f32 %v3653, 0.0
    %v3852 = vmax.f32 %v3655, 0.0
    %v3853 = vmax.f32 %v3657, 0.0
    %v3854 = vmax.f32 %v3659, 0.0
    %v3855 = vmax.f32 %v3663, 0.0
    %v3856 = vmax.f32 %v3665, 0.0
    %v3857 = vmax.f32 %v3667, 0.0
    %v3858 = vmax.f32 %v3669, 0.0
    %v3859 = vmax.f32 %v3673, 0.0
    %v3860 = vmax.f32 %v3675, 0.0
    %v3861 = vmax.f32 %v3677, 0.0
    %v3862 = vmax.f32 %v3679, 0.0
    %v3863 = vmax.f32 %v3683, 0.0
    %v3864 = vmax.f32 %v3685, 0.0
    %v3865 = vmax.f32 %v3687, 0.0
    %v3866 = vmax.f32 %v3689, 0.0
    %v3867 = vmax.f32 %v3693, 0.0
    %v3868 = vmax.f32 %v3695, 0.0
    %v3869 = vmax.f32 %v3697, 0.0
    %v3870 = vmax.f32 %v3699, 0.0
    %v3871 = vmax.f32 %v3703, 0.0
    %v3872 = vmax.f32 %v3705, 0.0
    %v3873 = vmax.f32 %v3707, 0.0
    %v3874 = vmax.f32 %v3709, 0.0
    %v3875 = vmax.f32 %v3713, 0.0
    %v3876 = vmax.f32 %v3715, 0.0
    %v3877 = vmax.f32 %v3717, 0.0
    %v3878 = vmax.f32 %v3719, 0.0
    %v3879 = vmax.f32 %v3723, 0.0
    %v3880 = vmax.f32 %v3725, 0.0
    %v3881 = vmax.f32 %v3727, 0.0
    %v3882 = vmax.f32 %v3729, 0.0
    %v3883 = vmax.f32 %v3733, 0.0
    %v3884 = vmax.f32 %v3735, 0.0
    %v3885 = vmax.f32 %v3737, 0.0
    %v3886 = vmax.f32 %v3739, 0.0
    %v3887 = vmax.f32 %v3743, 0.0
    %v3888 = vmax.f32 %v3745, 0.0
    %v3889 = vmax.f32 %v3747, 0.0
    %v3890 = vmax.f32 %v3749, 0.0
    %v3891 = vmax.f32 %v3753, 0.0
    %v3892 = vmax.f32 %v3755, 0.0
    %v3893 = vmax.f32 %v3757, 0.0
    %v3894 = vmax.f32 %v3759, 0.0
    %v3895 = vmax.f32 %v3763, 0.0
    %v3896 = vmax.f32 %v3765, 0.0
    %v3897 = vmax.f32 %v3767, 0.0
    %v3898 = vmax.f32 %v3769, 0.0
    %v3899 = vadd.f32 %v3771, %v3773
    %v3900 = vadd.f32 %v3899, %v3775
    %v3901 = vadd.f32 %v3900, %v3777
    %v3902 = vadd.f32 %v3901, %v3779
    %v3903 = vadd.f32 %v3902, %v3781
    %v3904 = vadd.f32 %v3903, %v3783
    %v3905 = vadd.f32 %v3904, %v3785
    %v3906 = vrot.slane %v3905, 4
    %v3907 = vadd.f32 %v3905, %v3906
    %v3908 = vrot.slane %v3907, 2
    %v3909 = vadd.f32 %v3907, %v3908
    %v3910 = vrot.slane %v3909, 1
    %v3911 = vadd.f32 %v3909, %v3910
    %v3912 = vadd.f32 %v3772, %v3774
    %v3913 = vadd.f32 %v3912, %v3776
    %v3914 = vadd.f32 %v3913, %v3778
    %v3915 = vadd.f32 %v3914, %v3780
    %v3916 = vadd.f32 %v3915, %v3782
    %v3917 = vadd.f32 %v3916, %v3784
    %v3918 = vadd.f32 %v3917, %v3786
    %v3919 = vrot.slane %v3918, 4
    %v3920 = vadd.f32 %v3918, %v3919
    %v3921 = vrot.slane %v3920, 2
    %v3922 = vadd.f32 %v3920, %v3921
    %v3923 = vrot.slane %v3922, 1
    %v3924 = vadd.f32 %v3922, %v3923
    %v3925 = vadd.f32 %v3787, %v3789
    %v3926 = vadd.f32 %v3925, %v3791
    %v3927 = vadd.f32 %v3926, %v3793
    %v3928 = vadd.f32 %v3927, %v3795
    %v3929 = vadd.f32 %v3928, %v3797
    %v3930 = vadd.f32 %v3929, %v3799
    %v3931 = vadd.f32 %v3930, %v3801
    %v3932 = vrot.slane %v3931, 4
    %v3933 = vadd.f32 %v3931, %v3932
    %v3934 = vrot.slane %v3933, 2
    %v3935 = vadd.f32 %v3933, %v3934
    %v3936 = vrot.slane %v3935, 1
    %v3937 = vadd.f32 %v3935, %v3936
    %v3938 = vadd.f32 %v3788, %v3790
    %v3939 = vadd.f32 %v3938, %v3792
    %v3940 = vadd.f32 %v3939, %v3794
    %v3941 = vadd.f32 %v3940, %v3796
    %v3942 = vadd.f32 %v3941, %v3798
    %v3943 = vadd.f32 %v3942, %v3800
    %v3944 = vadd.f32 %v3943, %v3802
    %v3945 = vrot.slane %v3944, 4
    %v3946 = vadd.f32 %v3944, %v3945
    %v3947 = vrot.slane %v3946, 2
    %v3948 = vadd.f32 %v3946, %v3947
    %v3949 = vrot.slane %v3948, 1
    %v3950 = vadd.f32 %v3948, %v3949
    %v3951 = vadd.f32 %v3803, %v3805
    %v3952 = vadd.f32 %v3951, %v3807
    %v3953 = vadd.f32 %v3952, %v3809
    %v3954 = vadd.f32 %v3953, %v3811
    %v3955 = vadd.f32 %v3954, %v3813
    %v3956 = vadd.f32 %v3955, %v3815
    %v3957 = vadd.f32 %v3956, %v3817
    %v3958 = vrot.slane %v3957, 4
    %v3959 = vadd.f32 %v3957, %v3958
    %v3960 = vrot.slane %v3959, 2
    %v3961 = vadd.f32 %v3959, %v3960
    %v3962 = vrot.slane %v3961, 1
    %v3963 = vadd.f32 %v3961, %v3962
    %v3964 = vadd.f32 %v3804, %v3806
    %v3965 = vadd.f32 %v3964, %v3808
    %v3966 = vadd.f32 %v3965, %v3810
    %v3967 = vadd.f32 %v3966, %v3812
    %v3968 = vadd.f32 %v3967, %v3814
    %v3969 = vadd.f32 %v3968, %v3816
    %v3970 = vadd.f32 %v3969, %v3818
    %v3971 = vrot.slane %v3970, 4
    %v3972 = vadd.f32 %v3970, %v3971
    %v3973 = vrot.slane %v3972, 2
    %v3974 = vadd.f32 %v3972, %v3973
    %v3975 = vrot.slane %v3974, 1
    %v3976 = vadd.f32 %v3974, %v3975
    %v3977 = vadd.f32 %v3819, %v3821
    %v3978 = vadd.f32 %v3977, %v3823
    %v3979 = vadd.f32 %v3978, %v3825
    %v3980 = vadd.f32 %v3979, %v3827
    %v3981 = vadd.f32 %v3980, %v3829
    %v3982 = vadd.f32 %v3981, %v3831
    %v3983 = vadd.f32 %v3982, %v3833
    %v3984 = vrot.slane %v3983, 4
    %v3985 = vadd.f32 %v3983, %v3984
    %v3986 = vrot.slane %v3985, 2
    %v3987 = vadd.f32 %v3985, %v3986
    %v3988 = vrot.slane %v3987, 1
    %v3989 = vadd.f32 %v3987, %v3988
    %v3990 = vadd.f32 %v3820, %v3822
    %v3991 = vadd.f32 %v3990, %v3824
    %v3992 = vadd.f32 %v3991, %v3826
    %v3993 = vadd.f32 %v3992, %v3828
    %v3994 = vadd.f32 %v3993, %v3830
    %v3995 = vadd.f32 %v3994, %v3832
    %v3996 = vadd.f32 %v3995, %v3834
    %v3997 = vrot.slane %v3996, 4
    %v3998 = vadd.f32 %v3996, %v3997
    %v3999 = vrot.slane %v3998, 2
    %v4000 = vadd.f32 %v3998, %v3999
    %v4001 = vrot.slane %v4000, 1
    %v4002 = vadd.f32 %v4000, %v4001
    %v4003 = vadd.f32 %v3835, %v3837
    %v4004 = vadd.f32 %v4003, %v3839
    %v4005 = vadd.f32 %v4004, %v3841
    %v4006 = vadd.f32 %v4005, %v3843
    %v4007 = vadd.f32 %v4006, %v3845
    %v4008 = vadd.f32 %v4007, %v3847
    %v4009 = vadd.f32 %v4008, %v3849
    %v4010 = vrot.slane %v4009, 4
    %v4011 = vadd.f32 %v4009, %v4010
    %v4012 = vrot.slane %v4011, 2
    %v4013 = vadd.f32 %v4011, %v4012
    %v4014 = vrot.slane %v4013, 1
    %v4015 = vadd.f32 %v4013, %v4014
    %v4016 = vadd.f32 %v3836, %v3838
    %v4017 = vadd.f32 %v4016, %v3840
    %v4018 = vadd.f32 %v4017, %v3842
    %v4019 = vadd.f32 %v4018, %v3844
    %v4020 = vadd.f32 %v4019, %v3846
    %v4021 = vadd.f32 %v4020, %v3848
    %v4022 = vadd.f32 %v4021, %v3850
    %v4023 = vrot.slane %v4022, 4
    %v4024 = vadd.f32 %v4022, %v4023
    %v4025 = vrot.slane %v4024, 2
    %v4026 = vadd.f32 %v4024, %v4025
    %v4027 = vrot.slane %v4026, 1
    %v4028 = vadd.f32 %v4026, %v4027
    %v4029 = vadd.f32 %v3851, %v3853
    %v4030 = vadd.f32 %v4029, %v3855
    %v4031 = vadd.f32 %v4030, %v3857
    %v4032 = vadd.f32 %v4031, %v3859
    %v4033 = vadd.f32 %v4032, %v3861
    %v4034 = vadd.f32 %v4033, %v3863
    %v4035 = vadd.f32 %v4034, %v3865
    %v4036 = vrot.slane %v4035, 4
    %v4037 = vadd.f32 %v4035, %v4036
    %v4038 = vrot.slane %v4037, 2
    %v4039 = vadd.f32 %v4037, %v4038
    %v4040 = vrot.slane %v4039, 1
    %v4041 = vadd.f32 %v4039, %v4040
    %v4042 = vadd.f32 %v3852, %v3854
    %v4043 = vadd.f32 %v4042, %v3856
    %v4044 = vadd.f32 %v4043, %v3858
    %v4045 = vadd.f32 %v4044, %v3860
    %v4046 = vadd.f32 %v4045, %v3862
    %v4047 = vadd.f32 %v4046, %v3864
    %v4048 = vadd.f32 %v4047, %v3866
    %v4049 = vrot.slane %v4048, 4
    %v4050 = vadd.f32 %v4048, %v4049
    %v4051 = vrot.slane %v4050, 2
    %v4052 = vadd.f32 %v4050, %v4051
    %v4053 = vrot.slane %v4052, 1
    %v4054 = vadd.f32 %v4052, %v4053
    %v4055 = vadd.f32 %v3867, %v3869
    %v4056 = vadd.f32 %v4055, %v3871
    %v4057 = vadd.f32 %v4056, %v3873
    %v4058 = vadd.f32 %v4057, %v3875
    %v4059 = vadd.f32 %v4058, %v3877
    %v4060 = vadd.f32 %v4059, %v3879
    %v4061 = vadd.f32 %v4060, %v3881
    %v4062 = vrot.slane %v4061, 4
    %v4063 = vadd.f32 %v4061, %v4062
    %v4064 = vrot.slane %v4063, 2
    %v4065 = vadd.f32 %v4063, %v4064
    %v4066 = vrot.slane %v4065, 1
    %v4067 = vadd.f32 %v4065, %v4066
    %v4068 = vadd.f32 %v3868, %v3870
    %v4069 = vadd.f32 %v4068, %v3872
    %v4070 = vadd.f32 %v4069, %v3874
    %v4071 = vadd.f32 %v4070, %v3876
    %v4072 = vadd.f32 %v4071, %v3878
    %v4073 = vadd.f32 %v4072, %v3880
    %v4074 = vadd.f32 %v4073, %v3882
    %v4075 = vrot.slane %v4074, 4
    %v4076 = vadd.f32 %v4074, %v4075
    %v4077 = vrot.slane %v4076, 2
    %v4078 = vadd.f32 %v4076, %v4077
    %v4079 = vrot.slane %v4078, 1
    %v4080 = vadd.f32 %v4078, %v4079
    %v4081 = vadd.f32 %v3883, %v3885
    %v4082 = vadd.f32 %v4081, %v3887
    %v4083 = vadd.f32 %v4082, %v3889
    %v4084 = vadd.f32 %v4083, %v3891
    %v4085 = vadd.f32 %v4084, %v3893
    %v4086 = vadd.f32 %v4085, %v3895
    %v4087 = vadd.f32 %v4086, %v3897
    %v4088 = vrot.slane %v4087, 4
    %v4089 = vadd.f32 %v4087, %v4088
    %v4090 = vrot.slane %v4089, 2
    %v4091 = vadd.f32 %v4089, %v4090
    %v4092 = vrot.slane %v4091, 1
    %v4093 = vadd.f32 %v4091, %v4092
    %v4094 = vadd.f32 %v3884, %v3886
    %v4095 = vadd.f32 %v4094, %v3888
    %v4096 = vadd.f32 %v4095, %v3890
    %v4097 = vadd.f32 %v4096, %v3892
    %v4098 = vadd.f32 %v4097, %v3894
    %v4099 = vadd.f32 %v4098, %v3896
    %v4100 = vadd.f32 %v4099, %v3898
    %v4101 = vrot.slane %v4100, 4
    %v4102 = vadd.f32 %v4100, %v4101
    %v4103 = vrot.slane %v4102, 2
    %v4104 = vadd.f32 %v4102, %v4103
    %v4105 = vrot.slane %v4104, 1
    %v4106 = vadd.f32 %v4104, %v4105
    %v4107 = vld [vmem:[%s3 + $0x300] sm:$0xff]
    %v4108 = vld [vmem:[%s3 + $0x308] sm:$0xff]
    %v4109 = vld [vmem:[%s3 + $0x310] sm:$0xff]
    %v4110 = vld [vmem:[%s3 + $0x318] sm:$0xff]
    %v4111 = vld [vmem:[%s3 + $0x320] sm:$0xff]
    %v4112 = vld [vmem:[%s3 + $0x328] sm:$0xff]
    %v4113 = vld [vmem:[%s3 + $0x330] sm:$0xff]
    %v4114 = vld [vmem:[%s3 + $0x338] sm:$0xff]
    %v4115 = vld [vmem:[%s3 + $0x340] sm:$0xff]
    %v4116 = vld [vmem:[%s3 + $0x348] sm:$0xff]
    %v4117 = vld [vmem:[%s3 + $0x350] sm:$0xff]
    %v4118 = vld [vmem:[%s3 + $0x358] sm:$0xff]
    %v4119 = vld [vmem:[%s3 + $0x360] sm:$0xff]
    %v4120 = vld [vmem:[%s3 + $0x368] sm:$0xff]
    %v4121 = vld [vmem:[%s3 + $0x370] sm:$0xff]
    %v4122 = vld [vmem:[%s3 + $0x378] sm:$0xff]
    %v4123 = vld [vmem:[%s3 + $0x380] sm:$0xff]
    %v4124 = vld [vmem:[%s3 + $0x388] sm:$0xff]
    %v4125 = vld [vmem:[%s3 + $0x390] sm:$0xff]
    %v4126 = vld [vmem:[%s3 + $0x398] sm:$0xff]
    %v4127 = vld [vmem:[%s3 + $0x3a0] sm:$0xff]
    %v4128 = vld [vmem:[%s3 + $0x3a8] sm:$0xff]
    %v4129 = vld [vmem:[%s3 + $0x3b0] sm:$0xff]
    %v4130 = vld [vmem:[%s3 + $0x3b8] sm:$0xff]
    %v4131 = vld [vmem:[%s3 + $0x3c0] sm:$0xff]
    %v4132 = vld [vmem:[%s3 + $0x3c8] sm:$0xff]
    %v4133 = vld [vmem:[%s3 + $0x3d0] sm:$0xff]
    %v4134 = vld [vmem:[%s3 + $0x3d8] sm:$0xff]
    %v4135 = vld [vmem:[%s3 + $0x3e0] sm:$0xff]
    %v4136 = vld [vmem:[%s3 + $0x3e8] sm:$0xff]
    %v4137 = vld [vmem:[%s3 + $0x3f0] sm:$0xff]
    %v4138 = vld [vmem:[%s3 + $0x3f8] sm:$0xff]
    %v4155 = vsel %vm2183, %v3937, %v3911
    %v4156 = vsel %vm2185, %v3963, %v4155
    %v4157 = vsel %vm2187, %v3989, %v4156
    %v4158 = vsel %vm2189, %v4015, %v4157
    %v4159 = vsel %vm2191, %v4041, %v4158
    %v4160 = vsel %vm2193, %v4067, %v4159
    %v4161 = vsel %vm2195, %v4093, %v4160
    %v4162 = vsel %vm2183, %v3950, %v3924
    %v4163 = vsel %vm2185, %v3976, %v4162
    %v4164 = vsel %vm2187, %v4002, %v4163
    %v4165 = vsel %vm2189, %v4028, %v4164
    %v4166 = vsel %vm2191, %v4054, %v4165
    %v4167 = vsel %vm2193, %v4080, %v4166
    %v4168 = vsel %vm2195, %v4106, %v4167
    %4171 = vmatprep.subr.mxu0 0.0
    %4172 = vmatpush1.msra.mxu0 %v4107
    %4173 = vmatprep.subr.mxu0 0.0
    %4174 = vmatpush1.msra.mxu0 %v4108
    %4175 = vmatprep.subr.mxu0 0.0
    %4176 = vmatpush1.msra.mxu0 %v4109
    %4177 = vmatprep.subr.mxu0 0.0
    %4178 = vmatpush1.msra.mxu0 %v4110
    %4179 = vmatprep.subr.mxu0 0.0
    %4180 = vmatpush1.msra.mxu0 %v4111
    %4181 = vmatprep.subr.mxu0 0.0
    %4182 = vmatpush1.msra.mxu0 %v4112
    %4183 = vmatprep.subr.mxu0 0.0
    %4184 = vmatpush1.msra.mxu0 %v4113
    %4185 = vmatprep.subr.mxu0 0.0
    %4186 = vmatpush1.msra.mxu0 %v4114
    %4187 = vmatprep.subr.mxu0 0.0
    %4188 = vmatpush1.msra.mxu0 %v4115
    %4189 = vmatprep.subr.mxu0 0.0
    %4190 = vmatpush1.msra.mxu0 %v4116
    %4191 = vmatprep.subr.mxu0 0.0
    %4192 = vmatpush1.msra.mxu0 %v4117
    %4193 = vmatprep.subr.mxu0 0.0
    %4194 = vmatpush1.msra.mxu0 %v4118
    %4195 = vmatprep.subr.mxu0 0.0
    %4196 = vmatpush1.msra.mxu0 %v4119
    %4197 = vmatprep.subr.mxu0 0.0
    %4198 = vmatpush1.msra.mxu0 %v4120
    %4199 = vmatprep.subr.mxu0 0.0
    %4200 = vmatpush1.msra.mxu0 %v4121
    %4201 = vmatprep.subr.mxu0 0.0
    %4202 = vmatpush1.msra.mxu0 %v4122
    %4203 = vmatprep.subr.mxu0 0.0
    %4204 = vmatpush1.msra.mxu0 %v4123
    %4205 = vmatprep.subr.mxu0 0.0
    %4206 = vmatpush1.msra.mxu0 %v4124
    %4207 = vmatprep.subr.mxu0 0.0
    %4208 = vmatpush1.msra.mxu0 %v4125
    %4209 = vmatprep.subr.mxu0 0.0
    %4210 = vmatpush1.msra.mxu0 %v4126
    %4211 = vmatprep.subr.mxu0 0.0
    %4212 = vmatpush1.msra.mxu0 %v4127
    %4213 = vmatprep.subr.mxu0 0.0
    %4214 = vmatpush1.msra.mxu0 %v4128
    %4215 = vmatprep.subr.mxu0 0.0
    %4216 = vmatpush1.msra.mxu0 %v4129
    %4217 = vmatprep.subr.mxu0 0.0
    %4218 = vmatpush1.msra.mxu0 %v4130
    %4219 = vmatprep.subr.mxu0 0.0
    %4220 = vmatpush1.msra.mxu0 %v4131
    %4221 = vmatprep.subr.mxu0 0.0
    %4222 = vmatpush1.msra.mxu0 %v4132
    %4223 = vmatprep.subr.mxu0 0.0
    %4224 = vmatpush1.msra.mxu0 %v4133
    %4225 = vmatprep.subr.mxu0 0.0
    %4226 = vmatpush1.msra.mxu0 %v4134
    %4227 = vmatprep.subr.mxu0 0.0
    %4228 = vmatpush1.msra.mxu0 %v4135
    %4229 = vmatprep.subr.mxu0 0.0
    %4230 = vmatpush1.msra.mxu0 %v4136
    %4231 = vmatprep.subr.mxu0 0.0
    %4232 = vmatpush1.msra.mxu0 %v4137
    %4233 = vmatprep.subr.mxu0 0.0
    %4234 = vmatpush1.msra.mxu0 %v4138
    %4235 = vmatprep.mubr.f32.mxu0 %v4168
    %4236 = vmatmul.mubr.f32.gmra.mrb[0].mxu0 %v4161
    %v4237 = vpop.f32.mrb[0].mxu0
    %v4238 = vadd.f32 0.0, %v4237
    %v4239 = vpop.f32.mrb[0].mxu0
    %4240 = vdwg.mxu0
    %v4241 = vadd.f32 %v3309, %v4238
    %v4242 = vld [vmem:[%s1 + $0x20] sm:$0xff]
    %v4243 = vld [vmem:[%s1 + $0x48] sm:$0xff]
    %v4244 = vld [vmem:[%s1 + $0x70] sm:$0xff]
    %v4245 = vld [vmem:[%s1 + $0x98] sm:$0xff]
    %v4246 = vld [vmem:[%s1 + $0xc0] sm:$0xff]
    %v4247 = vld [vmem:[%s1 + $0xe8] sm:$0xff]
    %v4248 = vld [vmem:[%s1 + $0x110] sm:$0xff]
    %v4249 = vld [vmem:[%s1 + $0x138] sm:$0xff]
    %v4250 = vld [vmem:[%s1 + $0x160] sm:$0xff]
    %v4251 = vld [vmem:[%s1 + $0x188] sm:$0xff]
    %v4252 = vld [vmem:[%s1 + $0x1b0] sm:$0xff]
    %v4253 = vld [vmem:[%s1 + $0x1d8] sm:$0xff]
    %v4254 = vld [vmem:[%s1 + $0x200] sm:$0xff]
    %v4255 = vld [vmem:[%s1 + $0x228] sm:$0xff]
    %v4256 = vld [vmem:[%s1 + $0x250] sm:$0xff]
    %v4257 = vld [vmem:[%s1 + $0x278] sm:$0xff]
    %v4258 = vld [vmem:[%s2 + $0x8] sm:$0x3]
    %v4260 = vlaneseq
    %v4261 = vshrl.u32 %v4260, 7
    %v4262 = vsub.s32 0, %v4261
    %v4263 = vrot.slane %v4258, %v4262
    %v4264 = vlaneseq
    %v4265 = vshrl.u32 %v4264, 7
    %v4266 = vsub.s32 1, %v4265
    %v4267 = vrot.slane %v4258, %v4266
    %v4286 = vunpack.c.l.b16 %v4242
    %v4287 = vunpack.c.h.b16 %v4242
    %v4288 = vunpack.c.l.b16 %v4243
    %v4289 = vunpack.c.h.b16 %v4243
    %v4290 = vunpack.c.l.b16 %v4244
    %v4291 = vunpack.c.h.b16 %v4244
    %v4292 = vunpack.c.l.b16 %v4245
    %v4293 = vunpack.c.h.b16 %v4245
    %v4294 = vunpack.c.l.b16 %v4246
    %v4295 = vunpack.c.h.b16 %v4246
    %v4296 = vunpack.c.l.b16 %v4247
    %v4297 = vunpack.c.h.b16 %v4247
    %v4298 = vunpack.c.l.b16 %v4248
    %v4299 = vunpack.c.h.b16 %v4248
    %v4300 = vunpack.c.l.b16 %v4249
    %v4301 = vunpack.c.h.b16 %v4249
    %v4302 = vunpack.c.l.b16 %v4250
    %v4303 = vunpack.c.h.b16 %v4250
    %v4304 = vunpack.c.l.b16 %v4251
    %v4305 = vunpack.c.h.b16 %v4251
    %v4306 = vunpack.c.l.b16 %v4252
    %v4307 = vunpack.c.h.b16 %v4252
    %v4308 = vunpack.c.l.b16 %v4253
    %v4309 = vunpack.c.h.b16 %v4253
    %v4310 = vunpack.c.l.b16 %v4254
    %v4311 = vunpack.c.h.b16 %v4254
    %v4312 = vunpack.c.l.b16 %v4255
    %v4313 = vunpack.c.h.b16 %v4255
    %v4314 = vunpack.c.l.b16 %v4256
    %v4315 = vunpack.c.h.b16 %v4256
    %v4316 = vunpack.c.l.b16 %v4257
    %v4317 = vunpack.c.h.b16 %v4257
    %v4318 = vpack.c.b16 %v4288, %v4286
    %v4319 = vpack.c.b16 %v4289, %v4287
    %v4320 = vpack.c.b16 %v4292, %v4290
    %v4321 = vpack.c.b16 %v4293, %v4291
    %v4322 = vpack.c.b16 %v4296, %v4294
    %v4323 = vpack.c.b16 %v4297, %v4295
    %v4324 = vpack.c.b16 %v4300, %v4298
    %v4325 = vpack.c.b16 %v4301, %v4299
    %v4326 = vpack.c.b16 %v4304, %v4302
    %v4327 = vpack.c.b16 %v4305, %v4303
    %v4328 = vpack.c.b16 %v4308, %v4306
    %v4329 = vpack.c.b16 %v4309, %v4307
    %v4330 = vpack.c.b16 %v4312, %v4310
    %v4331 = vpack.c.b16 %v4313, %v4311
    %v4332 = vpack.c.b16 %v4316, %v4314
    %v4333 = vpack.c.b16 %v4317, %v4315
    %4350 = vmatprep.subr.bf16.mxu0 %v4319
    %4351 = vmatpush1.bf16.msra.mxu0 %v4318
    %4352 = vmatprep.subr.bf16.mxu0 %v4321
    %4353 = vmatpush1.bf16.msra.mxu0 %v4320
    %4354 = vmatprep.subr.bf16.mxu0 %v4323
    %4355 = vmatpush1.bf16.msra.mxu0 %v4322
    %4356 = vmatprep.subr.bf16.mxu0 %v4325
    %4357 = vmatpush1.bf16.msra.mxu0 %v4324
    %4358 = vmatprep.subr.bf16.mxu0 %v4327
    %4359 = vmatpush1.bf16.msra.mxu0 %v4326
    %4360 = vmatprep.subr.bf16.mxu0 %v4329
    %4361 = vmatpush1.bf16.msra.mxu0 %v4328
    %4362 = vmatprep.subr.bf16.mxu0 %v4331
    %4363 = vmatpush1.bf16.msra.mxu0 %v4330
    %4364 = vmatprep.subr.bf16.mxu0 %v4333
    %4365 = vmatpush1.bf16.msra.mxu0 %v4332
    %4366 = vmatprep.subr.bf16.mxu0 0
    %4367 = vmatpush1.bf16.msra.mxu0 0
    %4368 = vmatprep.subr.bf16.mxu0 0
    %4369 = vmatpush1.bf16.msra.mxu0 0
    %4370 = vmatprep.subr.bf16.mxu0 0
    %4371 = vmatpush1.bf16.msra.mxu0 0
    %4372 = vmatprep.subr.bf16.mxu0 0
    %4373 = vmatpush1.bf16.msra.mxu0 0
    %4374 = vmatprep.subr.bf16.mxu0 0
    %4375 = vmatpush1.bf16.msra.mxu0 0
    %4376 = vmatprep.subr.bf16.mxu0 0
    %4377 = vmatpush1.bf16.msra.mxu0 0
    %4378 = vmatprep.subr.bf16.mxu0 0
    %4379 = vmatpush1.bf16.msra.mxu0 0
    %4380 = vmatprep.subr.bf16.mxu0 0
    %4381 = vmatpush1.bf16.msra.mxu0 0
    %4382 = vmatprep.mubr.bf16.mxu0 0
    %4383 = vmatmul.mubr.bf16.gmra.mrb[0].mxu0 %v477
    %v4384 = vpop.f32.mrb[0].mxu0
    %v4385 = vadd.f32 %v4263, %v4384
    %v4386 = vpop.f32.mrb[0].mxu0
    %v4387 = vadd.f32 %v4267, %v4386
    %v4388 = vpop.f32.mrb[0].mxu0
    %v4389 = vadd.f32 %v4263, %v4388
    %v4390 = vpop.f32.mrb[0].mxu0
    %v4391 = vadd.f32 %v4267, %v4390
    %4392 = vmatprep.mubr.bf16.mxu0 0
    %4393 = vmatmul.mubr.bf16.gmra.mrb[0].mxu0 %v478
    %v4394 = vpop.f32.mrb[0].mxu0
    %v4395 = vadd.f32 %v4263, %v4394
    %v4396 = vpop.f32.mrb[0].mxu0
    %v4397 = vadd.f32 %v4267, %v4396
    %v4398 = vpop.f32.mrb[0].mxu0
    %v4399 = vadd.f32 %v4263, %v4398
    %v4400 = vpop.f32.mrb[0].mxu0
    %v4401 = vadd.f32 %v4267, %v4400
    %4402 = vmatprep.mubr.bf16.mxu0 0
    %4403 = vmatmul.mubr.bf16.gmra.mrb[0].mxu0 %v479
    %v4404 = vpop.f32.mrb[0].mxu0
    %v4405 = vadd.f32 %v4263, %v4404
    %v4406 = vpop.f32.mrb[0].mxu0
    %v4407 = vadd.f32 %v4267, %v4406
    %v4408 = vpop.f32.mrb[0].mxu0
    %v4409 = vadd.f32 %v4263, %v4408
    %v4410 = vpop.f32.mrb[0].mxu0
    %v4411 = vadd.f32 %v4267, %v4410
    %4412 = vmatprep.mubr.bf16.mxu0 0
    %4413 = vmatmul.mubr.bf16.gmra.mrb[0].mxu0 %v480
    %v4414 = vpop.f32.mrb[0].mxu0
    %v4415 = vadd.f32 %v4263, %v4414
    %v4416 = vpop.f32.mrb[0].mxu0
    %v4417 = vadd.f32 %v4267, %v4416
    %v4418 = vpop.f32.mrb[0].mxu0
    %v4419 = vadd.f32 %v4263, %v4418
    %v4420 = vpop.f32.mrb[0].mxu0
    %v4421 = vadd.f32 %v4267, %v4420
    %4422 = vmatprep.mubr.bf16.mxu0 0
    %4423 = vmatmul.mubr.bf16.gmra.mrb[0].mxu0 %v481
    %v4424 = vpop.f32.mrb[0].mxu0
    %v4425 = vadd.f32 %v4263, %v4424
    %v4426 = vpop.f32.mrb[0].mxu0
    %v4427 = vadd.f32 %v4267, %v4426
    %v4428 = vpop.f32.mrb[0].mxu0
    %v4429 = vadd.f32 %v4263, %v4428
    %v4430 = vpop.f32.mrb[0].mxu0
    %v4431 = vadd.f32 %v4267, %v4430
    %4432 = vmatprep.mubr.bf16.mxu0 0
    %4433 = vmatmul.mubr.bf16.gmra.mrb[0].mxu0 %v482
    %v4434 = vpop.f32.mrb[0].mxu0
    %v4435 = vadd.f32 %v4263, %v4434
    %v4436 = vpop.f32.mrb[0].mxu0
    %v4437 = vadd.f32 %v4267, %v4436
    %v4438 = vpop.f32.mrb[0].mxu0
    %v4439 = vadd.f32 %v4263, %v4438
    %v4440 = vpop.f32.mrb[0].mxu0
    %v4441 = vadd.f32 %v4267, %v4440
    %4442 = vmatprep.mubr.bf16.mxu0 0
    %4443 = vmatmul.mubr.bf16.gmra.mrb[0].mxu0 %v483
    %v4444 = vpop.f32.mrb[0].mxu0
    %v4445 = vadd.f32 %v4263, %v4444
    %v4446 = vpop.f32.mrb[0].mxu0
    %v4447 = vadd.f32 %v4267, %v4446
    %v4448 = vpop.f32.mrb[0].mxu0
    %v4449 = vadd.f32 %v4263, %v4448
    %v4450 = vpop.f32.mrb[0].mxu0
    %v4451 = vadd.f32 %v4267, %v4450
    %4452 = vmatprep.mubr.bf16.mxu0 0
    %4453 = vmatmul.mubr.bf16.gmra.mrb[0].mxu0 %v484
    %v4454 = vpop.f32.mrb[0].mxu0
    %v4455 = vadd.f32 %v4263, %v4454
    %v4456 = vpop.f32.mrb[0].mxu0
    %v4457 = vadd.f32 %v4267, %v4456
    %v4458 = vpop.f32.mrb[0].mxu0
    %v4459 = vadd.f32 %v4263, %v4458
    %v4460 = vpop.f32.mrb[0].mxu0
    %v4461 = vadd.f32 %v4267, %v4460
    %4462 = vmatprep.mubr.bf16.mxu0 0
    %4463 = vmatmul.mubr.bf16.gmra.mrb[0].mxu0 %v485
    %v4464 = vpop.f32.mrb[0].mxu0
    %v4465 = vadd.f32 %v4263, %v4464
    %v4466 = vpop.f32.mrb[0].mxu0
    %v4467 = vadd.f32 %v4267, %v4466
    %v4468 = vpop.f32.mrb[0].mxu0
    %v4469 = vadd.f32 %v4263, %v4468
    %v4470 = vpop.f32.mrb[0].mxu0
    %v4471 = vadd.f32 %v4267, %v4470
    %4472 = vmatprep.mubr.bf16.mxu0 0
    %4473 = vmatmul.mubr.bf16.gmra.mrb[0].mxu0 %v486
    %v4474 = vpop.f32.mrb[0].mxu0
    %v4475 = vadd.f32 %v4263, %v4474
    %v4476 = vpop.f32.mrb[0].mxu0
    %v4477 = vadd.f32 %v4267, %v4476
    %v4478 = vpop.f32.mrb[0].mxu0
    %v4479 = vadd.f32 %v4263, %v4478
    %v4480 = vpop.f32.mrb[0].mxu0
    %v4481 = vadd.f32 %v4267, %v4480
    %4482 = vmatprep.mubr.bf16.mxu0 0
    %4483 = vmatmul.mubr.bf16.gmra.mrb[0].mxu0 %v487
    %v4484 = vpop.f32.mrb[0].mxu0
    %v4485 = vadd.f32 %v4263, %v4484
    %v4486 = vpop.f32.mrb[0].mxu0
    %v4487 = vadd.f32 %v4267, %v4486
    %v4488 = vpop.f32.mrb[0].mxu0
    %v4489 = vadd.f32 %v4263, %v4488
    %v4490 = vpop.f32.mrb[0].mxu0
    %v4491 = vadd.f32 %v4267, %v4490
    %4492 = vmatprep.mubr.bf16.mxu0 0
    %4493 = vmatmul.mubr.bf16.gmra.mrb[0].mxu0 %v488
    %v4494 = vpop.f32.mrb[0].mxu0
    %v4495 = vadd.f32 %v4263, %v4494
    %v4496 = vpop.f32.mrb[0].mxu0
    %v4497 = vadd.f32 %v4267, %v4496
    %v4498 = vpop.f32.mrb[0].mxu0
    %v4499 = vadd.f32 %v4263, %v4498
    %v4500 = vpop.f32.mrb[0].mxu0
    %v4501 = vadd.f32 %v4267, %v4500
    %4502 = vmatprep.mubr.bf16.mxu0 0
    %4503 = vmatmul.mubr.bf16.gmra.mrb[0].mxu0 %v489
    %v4504 = vpop.f32.mrb[0].mxu0
    %v4505 = vadd.f32 %v4263, %v4504
    %v4506 = vpop.f32.mrb[0].mxu0
    %v4507 = vadd.f32 %v4267, %v4506
    %v4508 = vpop.f32.mrb[0].mxu0
    %v4509 = vadd.f32 %v4263, %v4508
    %v4510 = vpop.f32.mrb[0].mxu0
    %v4511 = vadd.f32 %v4267, %v4510
    %4512 = vmatprep.mubr.bf16.mxu0 0
    %4513 = vmatmul.mubr.bf16.gmra.mrb[0].mxu0 %v490
    %v4514 = vpop.f32.mrb[0].mxu0
    %v4515 = vadd.f32 %v4263, %v4514
    %v4516 = vpop.f32.mrb[0].mxu0
    %v4517 = vadd.f32 %v4267, %v4516
    %v4518 = vpop.f32.mrb[0].mxu0
    %v4519 = vadd.f32 %v4263, %v4518
    %v4520 = vpop.f32.mrb[0].mxu0
    %v4521 = vadd.f32 %v4267, %v4520
    %4522 = vmatprep.mubr.bf16.mxu0 0
    %4523 = vmatmul.mubr.bf16.gmra.mrb[0].mxu0 %v491
    %v4524 = vpop.f32.mrb[0].mxu0
    %v4525 = vadd.f32 %v4263, %v4524
    %v4526 = vpop.f32.mrb[0].mxu0
    %v4527 = vadd.f32 %v4267, %v4526
    %v4528 = vpop.f32.mrb[0].mxu0
    %v4529 = vadd.f32 %v4263, %v4528
    %v4530 = vpop.f32.mrb[0].mxu0
    %v4531 = vadd.f32 %v4267, %v4530
    %4532 = vmatprep.mubr.bf16.mxu0 0
    %4533 = vmatmul.mubr.bf16.gmra.mrb[0].mxu0 %v492
    %v4534 = vpop.f32.mrb[0].mxu0
    %v4535 = vadd.f32 %v4263, %v4534
    %v4536 = vpop.f32.mrb[0].mxu0
    %v4537 = vadd.f32 %v4267, %v4536
    %v4538 = vpop.f32.mrb[0].mxu0
    %v4539 = vadd.f32 %v4263, %v4538
    %v4540 = vpop.f32.mrb[0].mxu0
    %v4541 = vadd.f32 %v4267, %v4540
    %4542 = vmatprep.mubr.bf16.mxu0 0
    %4543 = vmatmul.mubr.bf16.gmra.mrb[0].mxu0 %v493
    %v4544 = vpop.f32.mrb[0].mxu0
    %v4545 = vadd.f32 %v4263, %v4544
    %v4546 = vpop.f32.mrb[0].mxu0
    %v4547 = vadd.f32 %v4267, %v4546
    %v4548 = vpop.f32.mrb[0].mxu0
    %v4549 = vadd.f32 %v4263, %v4548
    %v4550 = vpop.f32.mrb[0].mxu0
    %v4551 = vadd.f32 %v4267, %v4550
    %4552 = vmatprep.mubr.bf16.mxu0 0
    %4553 = vmatmul.mubr.bf16.gmra.mrb[0].mxu0 %v494
    %v4554 = vpop.f32.mrb[0].mxu0
    %v4555 = vadd.f32 %v4263, %v4554
    %v4556 = vpop.f32.mrb[0].mxu0
    %v4557 = vadd.f32 %v4267, %v4556
    %v4558 = vpop.f32.mrb[0].mxu0
    %v4559 = vadd.f32 %v4263, %v4558
    %v4560 = vpop.f32.mrb[0].mxu0
    %v4561 = vadd.f32 %v4267, %v4560
    %4562 = vmatprep.mubr.bf16.mxu0 0
    %4563 = vmatmul.mubr.bf16.gmra.mrb[0].mxu0 %v495
    %v4564 = vpop.f32.mrb[0].mxu0
    %v4565 = vadd.f32 %v4263, %v4564
    %v4566 = vpop.f32.mrb[0].mxu0
    %v4567 = vadd.f32 %v4267, %v4566
    %v4568 = vpop.f32.mrb[0].mxu0
    %v4569 = vadd.f32 %v4263, %v4568
    %v4570 = vpop.f32.mrb[0].mxu0
    %v4571 = vadd.f32 %v4267, %v4570
    %4572 = vmatprep.mubr.bf16.mxu0 0
    %4573 = vmatmul.mubr.bf16.gmra.mrb[0].mxu0 %v496
    %v4574 = vpop.f32.mrb[0].mxu0
    %v4575 = vadd.f32 %v4263, %v4574
    %v4576 = vpop.f32.mrb[0].mxu0
    %v4577 = vadd.f32 %v4267, %v4576
    %v4578 = vpop.f32.mrb[0].mxu0
    %v4579 = vadd.f32 %v4263, %v4578
    %v4580 = vpop.f32.mrb[0].mxu0
    %v4581 = vadd.f32 %v4267, %v4580
    %4582 = vmatprep.mubr.bf16.mxu0 0
    %4583 = vmatmul.mubr.bf16.gmra.mrb[0].mxu0 %v497
    %v4584 = vpop.f32.mrb[0].mxu0
    %v4585 = vadd.f32 %v4263, %v4584
    %v4586 = vpop.f32.mrb[0].mxu0
    %v4587 = vadd.f32 %v4267, %v4586
    %v4588 = vpop.f32.mrb[0].mxu0
    %v4589 = vadd.f32 %v4263, %v4588
    %v4590 = vpop.f32.mrb[0].mxu0
    %v4591 = vadd.f32 %v4267, %v4590
    %4592 = vmatprep.mubr.bf16.mxu0 0
    %4593 = vmatmul.mubr.bf16.gmra.mrb[0].mxu0 %v498
    %v4594 = vpop.f32.mrb[0].mxu0
    %v4595 = vadd.f32 %v4263, %v4594
    %v4596 = vpop.f32.mrb[0].mxu0
    %v4597 = vadd.f32 %v4267, %v4596
    %v4598 = vpop.f32.mrb[0].mxu0
    %v4599 = vadd.f32 %v4263, %v4598
    %v4600 = vpop.f32.mrb[0].mxu0
    %v4601 = vadd.f32 %v4267, %v4600
    %4602 = vmatprep.mubr.bf16.mxu0 0
    %4603 = vmatmul.mubr.bf16.gmra.mrb[0].mxu0 %v499
    %v4604 = vpop.f32.mrb[0].mxu0
    %v4605 = vadd.f32 %v4263, %v4604
    %v4606 = vpop.f32.mrb[0].mxu0
    %v4607 = vadd.f32 %v4267, %v4606
    %v4608 = vpop.f32.mrb[0].mxu0
    %v4609 = vadd.f32 %v4263, %v4608
    %v4610 = vpop.f32.mrb[0].mxu0
    %v4611 = vadd.f32 %v4267, %v4610
    %4612 = vmatprep.mubr.bf16.mxu0 0
    %4613 = vmatmul.mubr.bf16.gmra.mrb[0].mxu0 %v500
    %v4614 = vpop.f32.mrb[0].mxu0
    %v4615 = vadd.f32 %v4263, %v4614
    %v4616 = vpop.f32.mrb[0].mxu0
    %v4617 = vadd.f32 %v4267, %v4616
    %v4618 = vpop.f32.mrb[0].mxu0
    %v4619 = vadd.f32 %v4263, %v4618
    %v4620 = vpop.f32.mrb[0].mxu0
    %v4621 = vadd.f32 %v4267, %v4620
    %4622 = vmatprep.mubr.bf16.mxu0 0
    %4623 = vmatmul.mubr.bf16.gmra.mrb[0].mxu0 %v501
    %v4624 = vpop.f32.mrb[0].mxu0
    %v4625 = vadd.f32 %v4263, %v4624
    %v4626 = vpop.f32.mrb[0].mxu0
    %v4627 = vadd.f32 %v4267, %v4626
    %v4628 = vpop.f32.mrb[0].mxu0
    %v4629 = vadd.f32 %v4263, %v4628
    %v4630 = vpop.f32.mrb[0].mxu0
    %v4631 = vadd.f32 %v4267, %v4630
    %4632 = vmatprep.mubr.bf16.mxu0 0
    %4633 = vmatmul.mubr.bf16.gmra.mrb[0].mxu0 %v502
    %v4634 = vpop.f32.mrb[0].mxu0
    %v4635 = vadd.f32 %v4263, %v4634
    %v4636 = vpop.f32.mrb[0].mxu0
    %v4637 = vadd.f32 %v4267, %v4636
    %v4638 = vpop.f32.mrb[0].mxu0
    %v4639 = vadd.f32 %v4263, %v4638
    %v4640 = vpop.f32.mrb[0].mxu0
    %v4641 = vadd.f32 %v4267, %v4640
    %4642 = vmatprep.mubr.bf16.mxu0 0
    %4643 = vmatmul.mubr.bf16.gmra.mrb[0].mxu0 %v503
    %v4644 = vpop.f32.mrb[0].mxu0
    %v4645 = vadd.f32 %v4263, %v4644
    %v4646 = vpop.f32.mrb[0].mxu0
    %v4647 = vadd.f32 %v4267, %v4646
    %v4648 = vpop.f32.mrb[0].mxu0
    %v4649 = vadd.f32 %v4263, %v4648
    %v4650 = vpop.f32.mrb[0].mxu0
    %v4651 = vadd.f32 %v4267, %v4650
    %4652 = vmatprep.mubr.bf16.mxu0 0
    %4653 = vmatmul.mubr.bf16.gmra.mrb[0].mxu0 %v504
    %v4654 = vpop.f32.mrb[0].mxu0
    %v4655 = vadd.f32 %v4263, %v4654
    %v4656 = vpop.f32.mrb[0].mxu0
    %v4657 = vadd.f32 %v4267, %v4656
    %v4658 = vpop.f32.mrb[0].mxu0
    %v4659 = vadd.f32 %v4263, %v4658
    %v4660 = vpop.f32.mrb[0].mxu0
    %v4661 = vadd.f32 %v4267, %v4660
    %4662 = vmatprep.mubr.bf16.mxu0 0
    %4663 = vmatmul.mubr.bf16.gmra.mrb[0].mxu0 %v505
    %v4664 = vpop.f32.mrb[0].mxu0
    %v4665 = vadd.f32 %v4263, %v4664
    %v4666 = vpop.f32.mrb[0].mxu0
    %v4667 = vadd.f32 %v4267, %v4666
    %v4668 = vpop.f32.mrb[0].mxu0
    %v4669 = vadd.f32 %v4263, %v4668
    %v4670 = vpop.f32.mrb[0].mxu0
    %v4671 = vadd.f32 %v4267, %v4670
    %4672 = vmatprep.mubr.bf16.mxu0 0
    %4673 = vmatmul.mubr.bf16.gmra.mrb[0].mxu0 %v506
    %v4674 = vpop.f32.mrb[0].mxu0
    %v4675 = vadd.f32 %v4263, %v4674
    %v4676 = vpop.f32.mrb[0].mxu0
    %v4677 = vadd.f32 %v4267, %v4676
    %v4678 = vpop.f32.mrb[0].mxu0
    %v4679 = vadd.f32 %v4263, %v4678
    %v4680 = vpop.f32.mrb[0].mxu0
    %v4681 = vadd.f32 %v4267, %v4680
    %4682 = vmatprep.mubr.bf16.mxu0 0
    %4683 = vmatmul.mubr.bf16.gmra.mrb[0].mxu0 %v507
    %v4684 = vpop.f32.mrb[0].mxu0
    %v4685 = vadd.f32 %v4263, %v4684
    %v4686 = vpop.f32.mrb[0].mxu0
    %v4687 = vadd.f32 %v4267, %v4686
    %v4688 = vpop.f32.mrb[0].mxu0
    %v4689 = vadd.f32 %v4263, %v4688
    %v4690 = vpop.f32.mrb[0].mxu0
    %v4691 = vadd.f32 %v4267, %v4690
    %4692 = vmatprep.mubr.bf16.mxu0 0
    %4693 = vmatmul.mubr.bf16.gmra.mrb[0].mxu0 %v508
    %v4694 = vpop.f32.mrb[0].mxu0
    %v4695 = vadd.f32 %v4263, %v4694
    %v4696 = vpop.f32.mrb[0].mxu0
    %v4697 = vadd.f32 %v4267, %v4696
    %v4698 = vpop.f32.mrb[0].mxu0
    %v4699 = vadd.f32 %v4263, %v4698
    %v4700 = vpop.f32.mrb[0].mxu0
    %v4701 = vadd.f32 %v4267, %v4700
    %4702 = vdwg.mxu0
    %v4703 = vmax.f32 %v4385, 0.0
    %v4704 = vmax.f32 %v4387, 0.0
    %v4705 = vmax.f32 %v4389, 0.0
    %v4706 = vmax.f32 %v4391, 0.0
    %v4707 = vmax.f32 %v4395, 0.0
    %v4708 = vmax.f32 %v4397, 0.0
    %v4709 = vmax.f32 %v4399, 0.0
    %v4710 = vmax.f32 %v4401, 0.0
    %v4711 = vmax.f32 %v4405, 0.0
    %v4712 = vmax.f32 %v4407, 0.0
    %v4713 = vmax.f32 %v4409, 0.0
    %v4714 = vmax.f32 %v4411, 0.0
    %v4715 = vmax.f32 %v4415, 0.0
    %v4716 = vmax.f32 %v4417, 0.0
    %v4717 = vmax.f32 %v4419, 0.0
    %v4718 = vmax.f32 %v4421, 0.0
    %v4719 = vmax.f32 %v4425, 0.0
    %v4720 = vmax.f32 %v4427, 0.0
    %v4721 = vmax.f32 %v4429, 0.0
    %v4722 = vmax.f32 %v4431, 0.0
    %v4723 = vmax.f32 %v4435, 0.0
    %v4724 = vmax.f32 %v4437, 0.0
    %v4725 = vmax.f32 %v4439, 0.0
    %v4726 = vmax.f32 %v4441, 0.0
    %v4727 = vmax.f32 %v4445, 0.0
    %v4728 = vmax.f32 %v4447, 0.0
    %v4729 = vmax.f32 %v4449, 0.0
    %v4730 = vmax.f32 %v4451, 0.0
    %v4731 = vmax.f32 %v4455, 0.0
    %v4732 = vmax.f32 %v4457, 0.0
    %v4733 = vmax.f32 %v4459, 0.0
    %v4734 = vmax.f32 %v4461, 0.0
    %v4735 = vmax.f32 %v4465, 0.0
    %v4736 = vmax.f32 %v4467, 0.0
    %v4737 = vmax.f32 %v4469, 0.0
    %v4738 = vmax.f32 %v4471, 0.0
    %v4739 = vmax.f32 %v4475, 0.0
    %v4740 = vmax.f32 %v4477, 0.0
    %v4741 = vmax.f32 %v4479, 0.0
    %v4742 = vmax.f32 %v4481, 0.0
    %v4743 = vmax.f32 %v4485, 0.0
    %v4744 = vmax.f32 %v4487, 0.0
    %v4745 = vmax.f32 %v4489, 0.0
    %v4746 = vmax.f32 %v4491, 0.0
    %v4747 = vmax.f32 %v4495, 0.0
    %v4748 = vmax.f32 %v4497, 0.0
    %v4749 = vmax.f32 %v4499, 0.0
    %v4750 = vmax.f32 %v4501, 0.0
    %v4751 = vmax.f32 %v4505, 0.0
    %v4752 = vmax.f32 %v4507, 0.0
    %v4753 = vmax.f32 %v4509, 0.0
    %v4754 = vmax.f32 %v4511, 0.0
    %v4755 = vmax.f32 %v4515, 0.0
    %v4756 = vmax.f32 %v4517, 0.0
    %v4757 = vmax.f32 %v4519, 0.0
    %v4758 = vmax.f32 %v4521, 0.0
    %v4759 = vmax.f32 %v4525, 0.0
    %v4760 = vmax.f32 %v4527, 0.0
    %v4761 = vmax.f32 %v4529, 0.0
    %v4762 = vmax.f32 %v4531, 0.0
    %v4763 = vmax.f32 %v4535, 0.0
    %v4764 = vmax.f32 %v4537, 0.0
    %v4765 = vmax.f32 %v4539, 0.0
    %v4766 = vmax.f32 %v4541, 0.0
    %v4767 = vmax.f32 %v4545, 0.0
    %v4768 = vmax.f32 %v4547, 0.0
    %v4769 = vmax.f32 %v4549, 0.0
    %v4770 = vmax.f32 %v4551, 0.0
    %v4771 = vmax.f32 %v4555, 0.0
    %v4772 = vmax.f32 %v4557, 0.0
    %v4773 = vmax.f32 %v4559, 0.0
    %v4774 = vmax.f32 %v4561, 0.0
    %v4775 = vmax.f32 %v4565, 0.0
    %v4776 = vmax.f32 %v4567, 0.0
    %v4777 = vmax.f32 %v4569, 0.0
    %v4778 = vmax.f32 %v4571, 0.0
    %v4779 = vmax.f32 %v4575, 0.0
    %v4780 = vmax.f32 %v4577, 0.0
    %v4781 = vmax.f32 %v4579, 0.0
    %v4782 = vmax.f32 %v4581, 0.0
    %v4783 = vmax.f32 %v4585, 0.0
    %v4784 = vmax.f32 %v4587, 0.0
    %v4785 = vmax.f32 %v4589, 0.0
    %v4786 = vmax.f32 %v4591, 0.0
    %v4787 = vmax.f32 %v4595, 0.0
    %v4788 = vmax.f32 %v4597, 0.0
    %v4789 = vmax.f32 %v4599, 0.0
    %v4790 = vmax.f32 %v4601, 0.0
    %v4791 = vmax.f32 %v4605, 0.0
    %v4792 = vmax.f32 %v4607, 0.0
    %v4793 = vmax.f32 %v4609, 0.0
    %v4794 = vmax.f32 %v4611, 0.0
    %v4795 = vmax.f32 %v4615, 0.0
    %v4796 = vmax.f32 %v4617, 0.0
    %v4797 = vmax.f32 %v4619, 0.0
    %v4798 = vmax.f32 %v4621, 0.0
    %v4799 = vmax.f32 %v4625, 0.0
    %v4800 = vmax.f32 %v4627, 0.0
    %v4801 = vmax.f32 %v4629, 0.0
    %v4802 = vmax.f32 %v4631, 0.0
    %v4803 = vmax.f32 %v4635, 0.0
    %v4804 = vmax.f32 %v4637, 0.0
    %v4805 = vmax.f32 %v4639, 0.0
    %v4806 = vmax.f32 %v4641, 0.0
    %v4807 = vmax.f32 %v4645, 0.0
    %v4808 = vmax.f32 %v4647, 0.0
    %v4809 = vmax.f32 %v4649, 0.0
    %v4810 = vmax.f32 %v4651, 0.0
    %v4811 = vmax.f32 %v4655, 0.0
    %v4812 = vmax.f32 %v4657, 0.0
    %v4813 = vmax.f32 %v4659, 0.0
    %v4814 = vmax.f32 %v4661, 0.0
    %v4815 = vmax.f32 %v4665, 0.0
    %v4816 = vmax.f32 %v4667, 0.0
    %v4817 = vmax.f32 %v4669, 0.0
    %v4818 = vmax.f32 %v4671, 0.0
    %v4819 = vmax.f32 %v4675, 0.0
    %v4820 = vmax.f32 %v4677, 0.0
    %v4821 = vmax.f32 %v4679, 0.0
    %v4822 = vmax.f32 %v4681, 0.0
    %v4823 = vmax.f32 %v4685, 0.0
    %v4824 = vmax.f32 %v4687, 0.0
    %v4825 = vmax.f32 %v4689, 0.0
    %v4826 = vmax.f32 %v4691, 0.0
    %v4827 = vmax.f32 %v4695, 0.0
    %v4828 = vmax.f32 %v4697, 0.0
    %v4829 = vmax.f32 %v4699, 0.0
    %v4830 = vmax.f32 %v4701, 0.0
    %v4831 = vadd.f32 %v4703, %v4705
    %v4832 = vadd.f32 %v4831, %v4707
    %v4833 = vadd.f32 %v4832, %v4709
    %v4834 = vadd.f32 %v4833, %v4711
    %v4835 = vadd.f32 %v4834, %v4713
    %v4836 = vadd.f32 %v4835, %v4715
    %v4837 = vadd.f32 %v4836, %v4717
    %v4838 = vrot.slane %v4837, 4
    %v4839 = vadd.f32 %v4837, %v4838
    %v4840 = vrot.slane %v4839, 2
    %v4841 = vadd.f32 %v4839, %v4840
    %v4842 = vrot.slane %v4841, 1
    %v4843 = vadd.f32 %v4841, %v4842
    %v4844 = vadd.f32 %v4704, %v4706
    %v4845 = vadd.f32 %v4844, %v4708
    %v4846 = vadd.f32 %v4845, %v4710
    %v4847 = vadd.f32 %v4846, %v4712
    %v4848 = vadd.f32 %v4847, %v4714
    %v4849 = vadd.f32 %v4848, %v4716
    %v4850 = vadd.f32 %v4849, %v4718
    %v4851 = vrot.slane %v4850, 4
    %v4852 = vadd.f32 %v4850, %v4851
    %v4853 = vrot.slane %v4852, 2
    %v4854 = vadd.f32 %v4852, %v4853
    %v4855 = vrot.slane %v4854, 1
    %v4856 = vadd.f32 %v4854, %v4855
    %v4857 = vadd.f32 %v4719, %v4721
    %v4858 = vadd.f32 %v4857, %v4723
    %v4859 = vadd.f32 %v4858, %v4725
    %v4860 = vadd.f32 %v4859, %v4727
    %v4861 = vadd.f32 %v4860, %v4729
    %v4862 = vadd.f32 %v4861, %v4731
    %v4863 = vadd.f32 %v4862, %v4733
    %v4864 = vrot.slane %v4863, 4
    %v4865 = vadd.f32 %v4863, %v4864
    %v4866 = vrot.slane %v4865, 2
    %v4867 = vadd.f32 %v4865, %v4866
    %v4868 = vrot.slane %v4867, 1
    %v4869 = vadd.f32 %v4867, %v4868
    %v4870 = vadd.f32 %v4720, %v4722
    %v4871 = vadd.f32 %v4870, %v4724
    %v4872 = vadd.f32 %v4871, %v4726
    %v4873 = vadd.f32 %v4872, %v4728
    %v4874 = vadd.f32 %v4873, %v4730
    %v4875 = vadd.f32 %v4874, %v4732
    %v4876 = vadd.f32 %v4875, %v4734
    %v4877 = vrot.slane %v4876, 4
    %v4878 = vadd.f32 %v4876, %v4877
    %v4879 = vrot.slane %v4878, 2
    %v4880 = vadd.f32 %v4878, %v4879
    %v4881 = vrot.slane %v4880, 1
    %v4882 = vadd.f32 %v4880, %v4881
    %v4883 = vadd.f32 %v4735, %v4737
    %v4884 = vadd.f32 %v4883, %v4739
    %v4885 = vadd.f32 %v4884, %v4741
    %v4886 = vadd.f32 %v4885, %v4743
    %v4887 = vadd.f32 %v4886, %v4745
    %v4888 = vadd.f32 %v4887, %v4747
    %v4889 = vadd.f32 %v4888, %v4749
    %v4890 = vrot.slane %v4889, 4
    %v4891 = vadd.f32 %v4889, %v4890
    %v4892 = vrot.slane %v4891, 2
    %v4893 = vadd.f32 %v4891, %v4892
    %v4894 = vrot.slane %v4893, 1
    %v4895 = vadd.f32 %v4893, %v4894
    %v4896 = vadd.f32 %v4736, %v4738
    %v4897 = vadd.f32 %v4896, %v4740
    %v4898 = vadd.f32 %v4897, %v4742
    %v4899 = vadd.f32 %v4898, %v4744
    %v4900 = vadd.f32 %v4899, %v4746
    %v4901 = vadd.f32 %v4900, %v4748
    %v4902 = vadd.f32 %v4901, %v4750
    %v4903 = vrot.slane %v4902, 4
    %v4904 = vadd.f32 %v4902, %v4903
    %v4905 = vrot.slane %v4904, 2
    %v4906 = vadd.f32 %v4904, %v4905
    %v4907 = vrot.slane %v4906, 1
    %v4908 = vadd.f32 %v4906, %v4907
    %v4909 = vadd.f32 %v4751, %v4753
    %v4910 = vadd.f32 %v4909, %v4755
    %v4911 = vadd.f32 %v4910, %v4757
    %v4912 = vadd.f32 %v4911, %v4759
    %v4913 = vadd.f32 %v4912, %v4761
    %v4914 = vadd.f32 %v4913, %v4763
    %v4915 = vadd.f32 %v4914, %v4765
    %v4916 = vrot.slane %v4915, 4
    %v4917 = vadd.f32 %v4915, %v4916
    %v4918 = vrot.slane %v4917, 2
    %v4919 = vadd.f32 %v4917, %v4918
    %v4920 = vrot.slane %v4919, 1
    %v4921 = vadd.f32 %v4919, %v4920
    %v4922 = vadd.f32 %v4752, %v4754
    %v4923 = vadd.f32 %v4922, %v4756
    %v4924 = vadd.f32 %v4923, %v4758
    %v4925 = vadd.f32 %v4924, %v4760
    %v4926 = vadd.f32 %v4925, %v4762
    %v4927 = vadd.f32 %v4926, %v4764
    %v4928 = vadd.f32 %v4927, %v4766
    %v4929 = vrot.slane %v4928, 4
    %v4930 = vadd.f32 %v4928, %v4929
    %v4931 = vrot.slane %v4930, 2
    %v4932 = vadd.f32 %v4930, %v4931
    %v4933 = vrot.slane %v4932, 1
    %v4934 = vadd.f32 %v4932, %v4933
    %v4935 = vadd.f32 %v4767, %v4769
    %v4936 = vadd.f32 %v4935, %v4771
    %v4937 = vadd.f32 %v4936, %v4773
    %v4938 = vadd.f32 %v4937, %v4775
    %v4939 = vadd.f32 %v4938, %v4777
    %v4940 = vadd.f32 %v4939, %v4779
    %v4941 = vadd.f32 %v4940, %v4781
    %v4942 = vrot.slane %v4941, 4
    %v4943 = vadd.f32 %v4941, %v4942
    %v4944 = vrot.slane %v4943, 2
    %v4945 = vadd.f32 %v4943, %v4944
    %v4946 = vrot.slane %v4945, 1
    %v4947 = vadd.f32 %v4945, %v4946
    %v4948 = vadd.f32 %v4768, %v4770
    %v4949 = vadd.f32 %v4948, %v4772
    %v4950 = vadd.f32 %v4949, %v4774
    %v4951 = vadd.f32 %v4950, %v4776
    %v4952 = vadd.f32 %v4951, %v4778
    %v4953 = vadd.f32 %v4952, %v4780
    %v4954 = vadd.f32 %v4953, %v4782
    %v4955 = vrot.slane %v4954, 4
    %v4956 = vadd.f32 %v4954, %v4955
    %v4957 = vrot.slane %v4956, 2
    %v4958 = vadd.f32 %v4956, %v4957
    %v4959 = vrot.slane %v4958, 1
    %v4960 = vadd.f32 %v4958, %v4959
    %v4961 = vadd.f32 %v4783, %v4785
    %v4962 = vadd.f32 %v4961, %v4787
    %v4963 = vadd.f32 %v4962, %v4789
    %v4964 = vadd.f32 %v4963, %v4791
    %v4965 = vadd.f32 %v4964, %v4793
    %v4966 = vadd.f32 %v4965, %v4795
    %v4967 = vadd.f32 %v4966, %v4797
    %v4968 = vrot.slane %v4967, 4
    %v4969 = vadd.f32 %v4967, %v4968
    %v4970 = vrot.slane %v4969, 2
    %v4971 = vadd.f32 %v4969, %v4970
    %v4972 = vrot.slane %v4971, 1
    %v4973 = vadd.f32 %v4971, %v4972
    %v4974 = vadd.f32 %v4784, %v4786
    %v4975 = vadd.f32 %v4974, %v4788
    %v4976 = vadd.f32 %v4975, %v4790
    %v4977 = vadd.f32 %v4976, %v4792
    %v4978 = vadd.f32 %v4977, %v4794
    %v4979 = vadd.f32 %v4978, %v4796
    %v4980 = vadd.f32 %v4979, %v4798
    %v4981 = vrot.slane %v4980, 4
    %v4982 = vadd.f32 %v4980, %v4981
    %v4983 = vrot.slane %v4982, 2
    %v4984 = vadd.f32 %v4982, %v4983
    %v4985 = vrot.slane %v4984, 1
    %v4986 = vadd.f32 %v4984, %v4985
    %v4987 = vadd.f32 %v4799, %v4801
    %v4988 = vadd.f32 %v4987, %v4803
    %v4989 = vadd.f32 %v4988, %v4805
    %v4990 = vadd.f32 %v4989, %v4807
    %v4991 = vadd.f32 %v4990, %v4809
    %v4992 = vadd.f32 %v4991, %v4811
    %v4993 = vadd.f32 %v4992, %v4813
    %v4994 = vrot.slane %v4993, 4
    %v4995 = vadd.f32 %v4993, %v4994
    %v4996 = vrot.slane %v4995, 2
    %v4997 = vadd.f32 %v4995, %v4996
    %v4998 = vrot.slane %v4997, 1
    %v4999 = vadd.f32 %v4997, %v4998
    %v5000 = vadd.f32 %v4800, %v4802
    %v5001 = vadd.f32 %v5000, %v4804
    %v5002 = vadd.f32 %v5001, %v4806
    %v5003 = vadd.f32 %v5002, %v4808
    %v5004 = vadd.f32 %v5003, %v4810
    %v5005 = vadd.f32 %v5004, %v4812
    %v5006 = vadd.f32 %v5005, %v4814
    %v5007 = vrot.slane %v5006, 4
    %v5008 = vadd.f32 %v5006, %v5007
    %v5009 = vrot.slane %v5008, 2
    %v5010 = vadd.f32 %v5008, %v5009
    %v5011 = vrot.slane %v5010, 1
    %v5012 = vadd.f32 %v5010, %v5011
    %v5013 = vadd.f32 %v4815, %v4817
    %v5014 = vadd.f32 %v5013, %v4819
    %v5015 = vadd.f32 %v5014, %v4821
    %v5016 = vadd.f32 %v5015, %v4823
    %v5017 = vadd.f32 %v5016, %v4825
    %v5018 = vadd.f32 %v5017, %v4827
    %v5019 = vadd.f32 %v5018, %v4829
    %v5020 = vrot.slane %v5019, 4
    %v5021 = vadd.f32 %v5019, %v5020
    %v5022 = vrot.slane %v5021, 2
    %v5023 = vadd.f32 %v5021, %v5022
    %v5024 = vrot.slane %v5023, 1
    %v5025 = vadd.f32 %v5023, %v5024
    %v5026 = vadd.f32 %v4816, %v4818
    %v5027 = vadd.f32 %v5026, %v4820
    %v5028 = vadd.f32 %v5027, %v4822
    %v5029 = vadd.f32 %v5028, %v4824
    %v5030 = vadd.f32 %v5029, %v4826
    %v5031 = vadd.f32 %v5030, %v4828
    %v5032 = vadd.f32 %v5031, %v4830
    %v5033 = vrot.slane %v5032, 4
    %v5034 = vadd.f32 %v5032, %v5033
    %v5035 = vrot.slane %v5034, 2
    %v5036 = vadd.f32 %v5034, %v5035
    %v5037 = vrot.slane %v5036, 1
    %v5038 = vadd.f32 %v5036, %v5037
    %v5039 = vld [vmem:[%s3 + $0x400] sm:$0xff]
    %v5040 = vld [vmem:[%s3 + $0x408] sm:$0xff]
    %v5041 = vld [vmem:[%s3 + $0x410] sm:$0xff]
    %v5042 = vld [vmem:[%s3 + $0x418] sm:$0xff]
    %v5043 = vld [vmem:[%s3 + $0x420] sm:$0xff]
    %v5044 = vld [vmem:[%s3 + $0x428] sm:$0xff]
    %v5045 = vld [vmem:[%s3 + $0x430] sm:$0xff]
    %v5046 = vld [vmem:[%s3 + $0x438] sm:$0xff]
    %v5047 = vld [vmem:[%s3 + $0x440] sm:$0xff]
    %v5048 = vld [vmem:[%s3 + $0x448] sm:$0xff]
    %v5049 = vld [vmem:[%s3 + $0x450] sm:$0xff]
    %v5050 = vld [vmem:[%s3 + $0x458] sm:$0xff]
    %v5051 = vld [vmem:[%s3 + $0x460] sm:$0xff]
    %v5052 = vld [vmem:[%s3 + $0x468] sm:$0xff]
    %v5053 = vld [vmem:[%s3 + $0x470] sm:$0xff]
    %v5054 = vld [vmem:[%s3 + $0x478] sm:$0xff]
    %v5055 = vld [vmem:[%s3 + $0x480] sm:$0xff]
    %v5056 = vld [vmem:[%s3 + $0x488] sm:$0xff]
    %v5057 = vld [vmem:[%s3 + $0x490] sm:$0xff]
    %v5058 = vld [vmem:[%s3 + $0x498] sm:$0xff]
    %v5059 = vld [vmem:[%s3 + $0x4a0] sm:$0xff]
    %v5060 = vld [vmem:[%s3 + $0x4a8] sm:$0xff]
    %v5061 = vld [vmem:[%s3 + $0x4b0] sm:$0xff]
    %v5062 = vld [vmem:[%s3 + $0x4b8] sm:$0xff]
    %v5063 = vld [vmem:[%s3 + $0x4c0] sm:$0xff]
    %v5064 = vld [vmem:[%s3 + $0x4c8] sm:$0xff]
    %v5065 = vld [vmem:[%s3 + $0x4d0] sm:$0xff]
    %v5066 = vld [vmem:[%s3 + $0x4d8] sm:$0xff]
    %v5067 = vld [vmem:[%s3 + $0x4e0] sm:$0xff]
    %v5068 = vld [vmem:[%s3 + $0x4e8] sm:$0xff]
    %v5069 = vld [vmem:[%s3 + $0x4f0] sm:$0xff]
    %v5070 = vld [vmem:[%s3 + $0x4f8] sm:$0xff]
    %v5087 = vsel %vm2183, %v4869, %v4843
    %v5088 = vsel %vm2185, %v4895, %v5087
    %v5089 = vsel %vm2187, %v4921, %v5088
    %v5090 = vsel %vm2189, %v4947, %v5089
    %v5091 = vsel %vm2191, %v4973, %v5090
    %v5092 = vsel %vm2193, %v4999, %v5091
    %v5093 = vsel %vm2195, %v5025, %v5092
    %v5094 = vsel %vm2183, %v4882, %v4856
    %v5095 = vsel %vm2185, %v4908, %v5094
    %v5096 = vsel %vm2187, %v4934, %v5095
    %v5097 = vsel %vm2189, %v4960, %v5096
    %v5098 = vsel %vm2191, %v4986, %v5097
    %v5099 = vsel %vm2193, %v5012, %v5098
    %v5100 = vsel %vm2195, %v5038, %v5099
    %5103 = vmatprep.subr.mxu0 0.0
    %5104 = vmatpush1.msra.mxu0 %v5039
    %5105 = vmatprep.subr.mxu0 0.0
    %5106 = vmatpush1.msra.mxu0 %v5040
    %5107 = vmatprep.subr.mxu0 0.0
    %5108 = vmatpush1.msra.mxu0 %v5041
    %5109 = vmatprep.subr.mxu0 0.0
    %5110 = vmatpush1.msra.mxu0 %v5042
    %5111 = vmatprep.subr.mxu0 0.0
    %5112 = vmatpush1.msra.mxu0 %v5043
    %5113 = vmatprep.subr.mxu0 0.0
    %5114 = vmatpush1.msra.mxu0 %v5044
    %5115 = vmatprep.subr.mxu0 0.0
    %5116 = vmatpush1.msra.mxu0 %v5045
    %5117 = vmatprep.subr.mxu0 0.0
    %5118 = vmatpush1.msra.mxu0 %v5046
    %5119 = vmatprep.subr.mxu0 0.0
    %5120 = vmatpush1.msra.mxu0 %v5047
    %5121 = vmatprep.subr.mxu0 0.0
    %5122 = vmatpush1.msra.mxu0 %v5048
    %5123 = vmatprep.subr.mxu0 0.0
    %5124 = vmatpush1.msra.mxu0 %v5049
    %5125 = vmatprep.subr.mxu0 0.0
    %5126 = vmatpush1.msra.mxu0 %v5050
    %5127 = vmatprep.subr.mxu0 0.0
    %5128 = vmatpush1.msra.mxu0 %v5051
    %5129 = vmatprep.subr.mxu0 0.0
    %5130 = vmatpush1.msra.mxu0 %v5052
    %5131 = vmatprep.subr.mxu0 0.0
    %5132 = vmatpush1.msra.mxu0 %v5053
    %5133 = vmatprep.subr.mxu0 0.0
    %5134 = vmatpush1.msra.mxu0 %v5054
    %5135 = vmatprep.subr.mxu0 0.0
    %5136 = vmatpush1.msra.mxu0 %v5055
    %5137 = vmatprep.subr.mxu0 0.0
    %5138 = vmatpush1.msra.mxu0 %v5056
    %5139 = vmatprep.subr.mxu0 0.0
    %5140 = vmatpush1.msra.mxu0 %v5057
    %5141 = vmatprep.subr.mxu0 0.0
    %5142 = vmatpush1.msra.mxu0 %v5058
    %5143 = vmatprep.subr.mxu0 0.0
    %5144 = vmatpush1.msra.mxu0 %v5059
    %5145 = vmatprep.subr.mxu0 0.0
    %5146 = vmatpush1.msra.mxu0 %v5060
    %5147 = vmatprep.subr.mxu0 0.0
    %5148 = vmatpush1.msra.mxu0 %v5061
    %5149 = vmatprep.subr.mxu0 0.0
    %5150 = vmatpush1.msra.mxu0 %v5062
    %5151 = vmatprep.subr.mxu0 0.0
    %5152 = vmatpush1.msra.mxu0 %v5063
    %5153 = vmatprep.subr.mxu0 0.0
    %5154 = vmatpush1.msra.mxu0 %v5064
    %5155 = vmatprep.subr.mxu0 0.0
    %5156 = vmatpush1.msra.mxu0 %v5065
    %5157 = vmatprep.subr.mxu0 0.0
    %5158 = vmatpush1.msra.mxu0 %v5066
    %5159 = vmatprep.subr.mxu0 0.0
    %5160 = vmatpush1.msra.mxu0 %v5067
    %5161 = vmatprep.subr.mxu0 0.0
    %5162 = vmatpush1.msra.mxu0 %v5068
    %5163 = vmatprep.subr.mxu0 0.0
    %5164 = vmatpush1.msra.mxu0 %v5069
    %5165 = vmatprep.subr.mxu0 0.0
    %5166 = vmatpush1.msra.mxu0 %v5070
    %5167 = vmatprep.mubr.f32.mxu0 %v5100
    %5168 = vmatmul.mubr.f32.gmra.mrb[0].mxu0 %v5093
    %v5169 = vpop.f32.mrb[0].mxu0
    %v5170 = vadd.f32 0.0, %v5169
    %v5171 = vpop.f32.mrb[0].mxu0
    %5172 = vdwg.mxu0
    %v5173 = vadd.f32 %v4241, %v5170
    %v5174 = vld [vmem:[%s4] sm:$0x1]
    %v5176 = vlaneseq
    %v5177 = vshrl.u32 %v5176, 7
    %v5178 = vsub.s32 0, %v5177
    %v5179 = vrot.slane %v5174, %v5178
    %v5181 = vadd.f32 %v5173, %v5179
    %5182 = vst [vmem:[#allocation3] sm:$0xff] %v5181
    // Predicated region
    $region22: #{classification_head.1} parent=1 // pred_check
      _
    $region23: #{classification_head.1} parent=1 // pred_check_branch
      %5184 = sbr.rel (0) target = $region25
    $region24: #{classification_head.1} parent=1 // pred_region
      %s5186 = ssub.s32 128, 128
      %5187 = vsyncadd [#allocation4], %s5186
      %s5189 = sshll.u32 [#allocation3], 4
      %s5190 = int_to_ptr.vmem [resolvable:$true] %s5189
      %5192 = dma.vmem_to_hbm [thread:$0]  %s5190, 128, %s5, [#allocation4]
    $region25: #{classification_head.1} parent=1 // pred_fallthru
      _
    // Predicated region
    $region26: #{classification_head.1} parent=1 // pred_check
      _
    $region27: #{classification_head.1} parent=1 // pred_check_branch
      %5194 = sbr.rel (0) target = $region29
    $region28: #{classification_head.1} parent=1 // pred_region
      %5195 = dma.done [#allocation4], 128
    $region29: #{classification_head.1} parent=1 // pred_fallthru
      _
    %5196 = vsyncpa [#allocation4], 1

</llo_original>
